<compile_context>
chip_gen: v7x
topology: tpu7x:2x2x1
jax: 0.10.0
libtpu: 0.0.40
codegen_flags: <defaults>
</compile_context>

<pallas_src>
import jax
import jax.numpy as jnp
from jax.experimental import pallas as pl
from jax.experimental.pallas import tpu as pltpu


# --------------------------------------------------------------------------- #
# Kernels
# --------------------------------------------------------------------------- #
def _loss_kernel_fused(g_tbl_ref, h_tbl_ref, idx_ref, x_ref, out_ref):
    """One grid step: (tile_b, D) batch tile, gather fused via one-hot matmul.

    g_tbl_ref / h_tbl_ref : (N, D)       resident VMEM tables
    idx_ref               : (tile_b, 1)  int32 row indices
    x_ref                 : (tile_b, D)
    out_ref               : (1, 1, D)    per-block partial sum (lane dense)
    """
    x = x_ref[...]
    if x.dtype != jnp.float32:
        x = x.astype(jnp.float32)

    tile_b = x.shape[0]
    n = g_tbl_ref.shape[0]

    idx = idx_ref[...]                                              # (tile_b, 1) i32
    row_ids = jax.lax.broadcasted_iota(jnp.int32, (tile_b, n), 1)   # (tile_b, N)
    onehot = (idx == row_ids).astype(jnp.float32)                   # (tile_b, N)

    g_tbl = g_tbl_ref[...]
    h_tbl = h_tbl_ref[...]
    if g_tbl.dtype != jnp.float32:
        g_tbl = g_tbl.astype(jnp.float32)
    if h_tbl.dtype != jnp.float32:
        h_tbl = h_tbl.astype(jnp.float32)

    # Exact f32 row gather on the MXU (one nonzero term per output element).
    g = jnp.dot(onehot, g_tbl, precision=jax.lax.Precision.HIGHEST,
                preferred_element_type=jnp.float32)                 # (tile_b, D)
    h = jnp.dot(onehot, h_tbl, precision=jax.lax.Precision.HIGHEST,
                preferred_element_type=jnp.float32)                 # (tile_b, D)

    val = x * (g + 0.5 * (h * x))                                   # VPU only
    psum = jnp.sum(val, axis=0, keepdims=True)                      # (1, D)
    out_ref[...] = psum[None]                                       # (1, 1, D)


def _loss_kernel_pregathered(g_ref, h_ref, x_ref, out_ref):
    """Fallback path when the tables are too large to keep resident in VMEM."""
    x = x_ref[...]
    if x.dtype != jnp.float32:
        x = x.astype(jnp.float32)
    g = g_ref[...]
    if g.dtype != jnp.float32:
        g = g.astype(jnp.float32)
    h = h_ref[...]
    if h.dtype != jnp.float32:
        h = h.astype(jnp.float32)

    val = x * (g + 0.5 * (h * x))
    out_ref[...] = jnp.sum(val, axis=0, keepdims=True)[None]


# --------------------------------------------------------------------------- #
# Wrapper
# --------------------------------------------------------------------------- #
def _round_up(v, m):
    return ((v + m - 1) // m) * m


def _choose_tile_b(B, D, max_tile_b):
    """Largest batch tile (multiple of 8) keeping the double-buffered x stream
    under a conservative ~8 MiB budget (safe on v5e/v6e/v7x default VMEM)."""
    budget_bytes = 8 * 1024 * 1024
    by_budget = budget_bytes // (2 * D * 4)          # 2 pipeline buffers, f32
    tile_b = int(min(max_tile_b, max(8, by_budget)))
    tile_b = max(8, (tile_b // 8) * 8)
    if B <= tile_b:
        return _round_up(B, 8)                       # single block
    return tile_b


def loss_model_local_forward(G_k, H_k, x, index, *, max_tile_b=4096,
                             force_pregather=False):
    """Pallas implementation of loss_model_local.forward(x, index)."""
    B, D = x.shape
    N = G_k.shape[0]
    total_elems = B * D

    index = index.astype(jnp.int32)

    tile_b = _choose_tile_b(B, D, max_tile_b)
    num_blocks = -(-B // tile_b)
    B_pad = num_blocks * tile_b
    if B_pad != B:
        # Padded rows: x = 0, index = 0  ->  contribute exactly 0 to the sum.
        x = jnp.pad(x, ((0, B_pad - B), (0, 0)))
        index = jnp.pad(index, ((0, B_pad - B),))

    out_shape = jax.ShapeDtypeStruct((num_blocks, 1, D), jnp.float32)
    out_spec = pl.BlockSpec((1, 1, D), lambda i: (i, 0, 0))
    compiler_params = pltpu.CompilerParams(
        dimension_semantics=("parallel",),           # megacore-safe on v7x
        vmem_limit_bytes=32 * 1024 * 1024,
    )

    # Keep both tables resident in VMEM only if they comfortably fit.
    table_bytes = 2 * 2 * N * D * 4                  # 2 tables x 2 buffers, f32
    fuse_gather = (not force_pregather) and table_bytes <= 4 * 1024 * 1024

    if fuse_gather:
        partials = pl.pallas_call(
            _loss_kernel_fused,
            out_shape=out_shape,
            grid_spec=pltpu.PrefetchScalarGridSpec(
                num_scalar_prefetch=0,
                grid=(num_blocks,),
                in_specs=[
                    pl.BlockSpec((N, D), lambda i: (0, 0)),        # G table (resident)
                    pl.BlockSpec((N, D), lambda i: (0, 0)),        # H table (resident)
                    pl.BlockSpec((tile_b, 1), lambda i: (i, 0)),   # index
                    pl.BlockSpec((tile_b, D), lambda i: (i, 0)),   # x
                ],
                out_specs=out_spec,
            ),
            compiler_params=compiler_params,
        )(G_k, H_k, index.reshape(B_pad, 1), x)
    else:
        # TODO(synk): for huge tables, a pl.Element row-gather index_map would
        # avoid materializing g/h in HBM; plain-JAX gather fallback for now.
        g = jnp.take(G_k, index, axis=0)
        h = jnp.take(H_k, index, axis=0)
        partials = pl.pallas_call(
            _loss_kernel_pregathered,
            out_shape=out_shape,
            grid_spec=pltpu.PrefetchScalarGridSpec(
                num_scalar_prefetch=0,
                grid=(num_blocks,),
                in_specs=[
                    pl.BlockSpec((tile_b, D), lambda i: (i, 0)),   # g
                    pl.BlockSpec((tile_b, D), lambda i: (i, 0)),   # h
                    pl.BlockSpec((tile_b, D), lambda i: (i, 0)),   # x
                ],
                out_specs=out_spec,
            ),
            compiler_params=compiler_params,
        )(g, h, x)

    # Tiny final reduction + mean in plain JAX (keeps the grid fully parallel).
    return jnp.sum(partials) / jnp.float32(total_elems)


def _reference(G_k, H_k, x, index):
    return jnp.mean(G_k[index] * x + 0.5 * H_k[index] * x ** 2)


# --------------------------------------------------------------------------- #
# Demo / self-test
# --------------------------------------------------------------------------- #
if __name__ == "__main__":
    key = jax.random.PRNGKey(0)
    k_g, k_h, k_x, k_idx = jax.random.split(key, 4)

    N, B, D = 64, 200, 128   # N table rows, B-row batch, D features

    G_k = jax.random.normal(k_g, (N, D), dtype=jnp.float32)
    H_k = jax.random.uniform(k_h, (N, D), dtype=jnp.float32) + 0.1
    x = jax.random.normal(k_x, (B, D), dtype=jnp.float32)
    index = jax.random.randint(k_idx, (B,), 0, N, dtype=jnp.int32)

    ref = _reference(G_k, H_k, x, index)

    # 1) default path: fused gather, single large tile
    out_default = jax.block_until_ready(loss_model_local_forward(G_k, H_k, x, index))
    # 2) multi-block + batch-padding path (exercises grid > 1 and zero padding)
    out_tiled = jax.block_until_ready(
        loss_model_local_forward(G_k, H_k, x, index, max_tile_b=64))
    # 3) fallback path for tables that would not fit in VMEM
    out_fallback = jax.block_until_ready(
        loss_model_local_forward(G_k, H_k, x, index, force_pregather=True))

    for out in (out_default, out_tiled, out_fallback):
        assert jnp.allclose(out, ref, rtol=1e-5, atol=1e-5), (out, ref)

    print("KERNEL_OK")
</pallas_src>

<mosaic_0001>
module attributes {stable_mosaic.version = 11 : i64} {
  func.func @_loss_kernel_fused(%arg0: i32, %arg1: memref<64x128xf32, #tpu.memory_space<vmem>>, %arg2: memref<64x128xf32, #tpu.memory_space<vmem>>, %arg3: memref<200x1xi32, #tpu.memory_space<vmem>>, %arg4: memref<200x128xf32, #tpu.memory_space<vmem>>, %arg5: memref<1x1x128xf32, #tpu.memory_space<vmem>>) attributes {dimension_semantics = [#tpu.dimension_semantics<parallel>], iteration_bounds = array<i64: 1>, scalar_prefetch = 0 : i64, scratch_operands = 0 : i64, tpu.core_type = #tpu.core_type<tc>, window_params = [{pipeline_mode = #tpu.pipeline_mode<synchronous>, transform_indices = @transform_0, window_bounds = array<i64: 64, 128>}, {pipeline_mode = #tpu.pipeline_mode<synchronous>, transform_indices = @transform_1, window_bounds = array<i64: 64, 128>}, {transform_indices = @transform_2, window_bounds = array<i64: 200, 1>}, {transform_indices = @transform_3, window_bounds = array<i64: 200, 128>}, {transform_indices = @transform_4, window_bounds = array<i64: 1, 1, 128>}]} {
    %c0 = arith.constant 0 : index
    %c0_0 = arith.constant 0 : index
    %0 = vector.load %arg4[%c0, %c0_0] : memref<200x128xf32, #tpu.memory_space<vmem>>, vector<200x128xf32>
    %c0_1 = arith.constant 0 : index
    %c0_2 = arith.constant 0 : index
    %1 = vector.load %arg3[%c0_1, %c0_2] : memref<200x1xi32, #tpu.memory_space<vmem>>, vector<200x1xi32>
    %2 = tpu.iota {dimensions = array<i32: 1>} : vector<200x64xi32>
    %3 = vector.broadcast %1 : vector<200x1xi32> to vector<200x64xi32>
    %4 = arith.cmpi eq, %3, %2 : vector<200x64xi32>
    %5 = arith.extui %4 : vector<200x64xi1> to vector<200x64xi32>
    %6 = arith.sitofp %5 : vector<200x64xi32> to vector<200x64xf32>
    %c0_3 = arith.constant 0 : index
    %c0_4 = arith.constant 0 : index
    %7 = vector.load %arg1[%c0_3, %c0_4] : memref<64x128xf32, #tpu.memory_space<vmem>>, vector<64x128xf32>
    %c0_5 = arith.constant 0 : index
    %c0_6 = arith.constant 0 : index
    %8 = vector.load %arg2[%c0_5, %c0_6] : memref<64x128xf32, #tpu.memory_space<vmem>>, vector<64x128xf32>
    %cst = arith.constant dense<0.000000e+00> : vector<200x128xf32>
    %9 = tpu.matmul %6, %7, %cst {dimension_numbers = #tpu.dot_dimension_numbers<[1], [0], [0], [1], [0, 0, 1, 1], [], []>, precision = #tpu.contract_precision<fp32>} : vector<200x64xf32>, vector<64x128xf32>, vector<200x128xf32> -> vector<200x128xf32>
    %cst_7 = arith.constant dense<0.000000e+00> : vector<200x128xf32>
    %10 = tpu.matmul %6, %8, %cst_7 {dimension_numbers = #tpu.dot_dimension_numbers<[1], [0], [0], [1], [0, 0, 1, 1], [], []>, precision = #tpu.contract_precision<fp32>} : vector<200x64xf32>, vector<64x128xf32>, vector<200x128xf32> -> vector<200x128xf32>
    %11 = arith.mulf %10, %0 : vector<200x128xf32>
    %cst_8 = arith.constant 5.000000e-01 : f32
    %12 = vector.broadcast %cst_8 : f32 to vector<200x128xf32>
    %13 = arith.mulf %12, %11 : vector<200x128xf32>
    %14 = arith.addf %9, %13 : vector<200x128xf32>
    %15 = arith.mulf %0, %14 : vector<200x128xf32>
    %cst_9 = arith.constant dense<0.000000e+00> : vector<128xf32>
    %16 = vector.multi_reduction <add>, %15, %cst_9 [0] : vector<200x128xf32> to vector<128xf32>
    %17 = vector.shape_cast %16 : vector<128xf32> to vector<1x128xf32>
    %18 = vector.shape_cast %17 : vector<1x128xf32> to vector<1x1x128xf32>
    %c0_10 = arith.constant 0 : index
    %c0_11 = arith.constant 0 : index
    %c0_12 = arith.constant 0 : index
    %19 = vector.load %arg5[%c0_10, %c0_11, %c0_12] : memref<1x1x128xf32, #tpu.memory_space<vmem>>, vector<1x1x128xf32>
    tpu.vector_store %arg5[%c0_10, %c0_11, %c0_12], %18 {strides = array<i32>} : memref<1x1x128xf32, #tpu.memory_space<vmem>>, vector<1x1x128xf32>,
    return
  }
  func.func @transform_0(%arg0: i32) -> (i32, i32) {
    %c0_i32 = arith.constant 0 : i32
    %c0_i32_0 = arith.constant 0 : i32
    %c0_i32_1 = arith.constant 0 : i32
    return %c0_i32, %c0_i32_0 : i32, i32
  }
  func.func @transform_1(%arg0: i32) -> (i32, i32) {
    %c0_i32 = arith.constant 0 : i32
    %c0_i32_0 = arith.constant 0 : i32
    %c0_i32_1 = arith.constant 0 : i32
    return %c0_i32, %c0_i32_0 : i32, i32
  }
  func.func @transform_2(%arg0: i32) -> (i32, i32) {
    %c0_i32 = arith.constant 0 : i32
    %c0_i32_0 = arith.constant 0 : i32
    return %arg0, %c0_i32 : i32, i32
  }
  func.func @transform_3(%arg0: i32) -> (i32, i32) {
    %c0_i32 = arith.constant 0 : i32
    %c0_i32_0 = arith.constant 0 : i32
    return %arg0, %c0_i32 : i32, i32
  }
  func.func @transform_4(%arg0: i32) -> (i32, i32, i32) {
    %c0_i32 = arith.constant 0 : i32
    %c0_i32_0 = arith.constant 0 : i32
    %c0_i32_1 = arith.constant 0 : i32
    return %arg0, %c0_i32, %c0_i32_0 : i32, i32, i32
  }
}

</mosaic_0001>

<llo_original>
// kernel: tpu_custom_call.1
$region0: #{tpu_custom_call.1}
  #allocation0 [shape = 'u32[]', space=smem, size = 0x4, offset = 0x4, fixed_abs, tag = 'smem constant byte address 0x4 - core index']
  #allocation1 [shape = 'u32[144,128]{1,0:T(1,128)}', space=vmem, size = 0x12000, scoped, tag = 'internal scratch']
  %s0 = inlined_call_operand.hbm [shape: f32[64,128], index: 0, kind: input, shape index: {}]
  %s1 = inlined_call_operand.hbm [shape: f32[64,128], index: 1, kind: input, shape index: {}]
  %s2 = inlined_call_operand.vmem [shape: s32[200,1], index: 2, kind: input, shape index: {}]
  %s3 = inlined_call_operand.vmem [shape: f32[200,128], index: 3, kind: input, shape index: {}]
  %s4 = inlined_call_operand.hbm [shape: f32[1,1,128], index: 4, kind: output, shape index: {}]
  %s5 = sld [smem:[#allocation0]]
  $region34: #{tpu_custom_call.1} parent=0
    _
  %s7 = ssub.s32 1, %s5
  %s8 = scalar_select 0, %s7, %s5
  $region1: #{tpu_custom_call.1} parent=0
    #allocation2 [shape = 'u8[32768]{0}', space=vmem, size = 0x8000, scoped, tag = 'input window, operand 0, single buffered']
    #allocation3 [shape = 's32[1]{0}', space=sflag, size = 0x4, scoped, tag = 'scoped memory for tpu_custom_call.1']
    #allocation4 [shape = 's32[1]{0}', space=sflag, size = 0x4, scoped, tag = 'scoped memory for tpu_custom_call.1']
    #allocation5 [shape = 'u8[32768]{0}', space=vmem, size = 0x8000, scoped, tag = 'input window, operand 1, single buffered']
    #allocation6 [shape = 's32[1]{0}', space=sflag, size = 0x4, scoped, tag = 'scoped memory for tpu_custom_call.1']
    #allocation7 [shape = 'u8[512]{0}', space=vmem, size = 0x400, scoped, tag = 'output window, operand 0, single buffered']
    %9 = vsyncpa [#allocation3], 0
    %10 = vsyncpa [#allocation6], 0
    %11 = vsyncpa [#allocation4], 0
    // Predicated region
    $region2: #{tpu_custom_call.1} parent=1 // pred_check
      _
    $region3: #{tpu_custom_call.1} parent=1 // pred_check_branch
      %13 = sbr.rel (0) target = $region5
    $region4: #{tpu_custom_call.1} parent=1 // pred_region
      %s15 = ssub.s32 1024, 1024
      %16 = vsyncadd [#allocation3], %s15
      %s17 = sshll.u32 [#allocation2], 4
      %s18 = int_to_ptr.vmem [resolvable:$true] %s17
      %23 = dma.hbm_to_vmem [thread:$0]  %s0, 1024, %s18, [#allocation3], 128, 128, 8
    $region5: #{tpu_custom_call.1} parent=1 // pred_fallthru
      _
    // Predicated region
    $region6: #{tpu_custom_call.1} parent=1 // pred_check
      _
    $region7: #{tpu_custom_call.1} parent=1 // pred_check_branch
      %25 = sbr.rel (0) target = $region9
    $region8: #{tpu_custom_call.1} parent=1 // pred_region
      %s27 = ssub.s32 1024, 1024
      %28 = vsyncadd [#allocation6], %s27
      %s29 = sshll.u32 [#allocation5], 4
      %s30 = int_to_ptr.vmem [resolvable:$true] %s29
      %35 = dma.hbm_to_vmem [thread:$0]  %s1, 1024, %s30, [#allocation6], 128, 128, 8
    $region9: #{tpu_custom_call.1} parent=1 // pred_fallthru
      _
    // Predicated region
    $region10: #{tpu_custom_call.1} parent=1 // pred_check
      _
    $region11: #{tpu_custom_call.1} parent=1 // pred_check_branch
      %37 = sbr.rel (0) target = $region13
    $region12: #{tpu_custom_call.1} parent=1 // pred_region
      _
    $region13: #{tpu_custom_call.1} parent=1 // pred_fallthru
      _
    // Predicated region
    $region14: #{tpu_custom_call.1} parent=1 // pred_check
      _
    $region15: #{tpu_custom_call.1} parent=1 // pred_check_branch
      %39 = sbr.rel (0) target = $region17
    $region16: #{tpu_custom_call.1} parent=1 // pred_region
      _
    $region17: #{tpu_custom_call.1} parent=1 // pred_fallthru
      _
    // Predicated region
    $region18: #{tpu_custom_call.1} parent=1 // pred_check
      _
    $region19: #{tpu_custom_call.1} parent=1 // pred_check_branch
      %41 = sbr.rel (0) target = $region21
    $region20: #{tpu_custom_call.1} parent=1 // pred_region
      %42 = dma.done [#allocation3], 1024
    $region21: #{tpu_custom_call.1} parent=1 // pred_fallthru
      _
    // Predicated region
    $region22: #{tpu_custom_call.1} parent=1 // pred_check
      _
    $region23: #{tpu_custom_call.1} parent=1 // pred_check_branch
      %44 = sbr.rel (0) target = $region25
    $region24: #{tpu_custom_call.1} parent=1 // pred_region
      %45 = dma.done [#allocation6], 1024
    $region25: #{tpu_custom_call.1} parent=1 // pred_fallthru
      _
    %v46 = vld [vmem:[%s3] sm:$0xff]
    %v47 = vld [vmem:[%s3 + $0x8] sm:$0xff]
    %v48 = vld [vmem:[%s3 + $0x10] sm:$0xff]
    %v49 = vld [vmem:[%s3 + $0x18] sm:$0xff]
    %v50 = vld [vmem:[%s3 + $0x20] sm:$0xff]
    %v51 = vld [vmem:[%s3 + $0x28] sm:$0xff]
    %v52 = vld [vmem:[%s3 + $0x30] sm:$0xff]
    %v53 = vld [vmem:[%s3 + $0x38] sm:$0xff]
    %v54 = vld [vmem:[%s3 + $0x40] sm:$0xff]
    %v55 = vld [vmem:[%s3 + $0x48] sm:$0xff]
    %v56 = vld [vmem:[%s3 + $0x50] sm:$0xff]
    %v57 = vld [vmem:[%s3 + $0x58] sm:$0xff]
    %v58 = vld [vmem:[%s3 + $0x60] sm:$0xff]
    %v59 = vld [vmem:[%s3 + $0x68] sm:$0xff]
    %v60 = vld [vmem:[%s3 + $0x70] sm:$0xff]
    %v61 = vld [vmem:[%s3 + $0x78] sm:$0xff]
    %v62 = vld [vmem:[%s3 + $0x80] sm:$0xff]
    %v63 = vld [vmem:[%s3 + $0x88] sm:$0xff]
    %v64 = vld [vmem:[%s3 + $0x90] sm:$0xff]
    %v65 = vld [vmem:[%s3 + $0x98] sm:$0xff]
    %v66 = vld [vmem:[%s3 + $0xa0] sm:$0xff]
    %v67 = vld [vmem:[%s3 + $0xa8] sm:$0xff]
    %v68 = vld [vmem:[%s3 + $0xb0] sm:$0xff]
    %v69 = vld [vmem:[%s3 + $0xb8] sm:$0xff]
    %v70 = vld [vmem:[%s3 + $0xc0] sm:$0xff]
    %v71 = vld [vmem:[%s2] sm:$0xff]
    %v72 = vld [vmem:[%s2 + $0x8] sm:$0xff]
    %v73 = vld [vmem:[%s2 + $0x10] sm:$0xff]
    %v74 = vld [vmem:[%s2 + $0x18] sm:$0xff]
    %v75 = vld [vmem:[%s2 + $0x20] sm:$0xff]
    %v76 = vld [vmem:[%s2 + $0x28] sm:$0xff]
    %v77 = vld [vmem:[%s2 + $0x30] sm:$0xff]
    %v78 = vld [vmem:[%s2 + $0x38] sm:$0xff]
    %v79 = vld [vmem:[%s2 + $0x40] sm:$0xff]
    %v80 = vld [vmem:[%s2 + $0x48] sm:$0xff]
    %v81 = vld [vmem:[%s2 + $0x50] sm:$0xff]
    %v82 = vld [vmem:[%s2 + $0x58] sm:$0xff]
    %v83 = vld [vmem:[%s2 + $0x60] sm:$0xff]
    %v84 = vld [vmem:[%s2 + $0x68] sm:$0xff]
    %v85 = vld [vmem:[%s2 + $0x70] sm:$0xff]
    %v86 = vld [vmem:[%s2 + $0x78] sm:$0xff]
    %v87 = vld [vmem:[%s2 + $0x80] sm:$0xff]
    %v88 = vld [vmem:[%s2 + $0x88] sm:$0xff]
    %v89 = vld [vmem:[%s2 + $0x90] sm:$0xff]
    %v90 = vld [vmem:[%s2 + $0x98] sm:$0xff]
    %v91 = vld [vmem:[%s2 + $0xa0] sm:$0xff]
    %v92 = vld [vmem:[%s2 + $0xa8] sm:$0xff]
    %v93 = vld [vmem:[%s2 + $0xb0] sm:$0xff]
    %v94 = vld [vmem:[%s2 + $0xb8] sm:$0xff]
    %v95 = vld [vmem:[%s2 + $0xc0] sm:$0xff]
    %v96 = vlaneseq
    %v97 = vand.u32 %v96, 127
    %98 = vset.pattern.permute.xlu0 0
    %99 = vperm.xlu0 %98, %v71
    %v100 = vpop.permute.xlu0 %99
    %101 = vset.pattern.permute.xlu0 0
    %102 = vperm.xlu0 %101, %v72
    %v103 = vpop.permute.xlu0 %102
    %104 = vset.pattern.permute.xlu0 0
    %105 = vperm.xlu0 %104, %v73
    %v106 = vpop.permute.xlu0 %105
    %107 = vset.pattern.permute.xlu0 0
    %108 = vperm.xlu0 %107, %v74
    %v109 = vpop.permute.xlu0 %108
    %110 = vset.pattern.permute.xlu0 0
    %111 = vperm.xlu0 %110, %v75
    %v112 = vpop.permute.xlu0 %111
    %113 = vset.pattern.permute.xlu0 0
    %114 = vperm.xlu0 %113, %v76
    %v115 = vpop.permute.xlu0 %114
    %116 = vset.pattern.permute.xlu0 0
    %117 = vperm.xlu0 %116, %v77
    %v118 = vpop.permute.xlu0 %117
    %119 = vset.pattern.permute.xlu0 0
    %120 = vperm.xlu0 %119, %v78
    %v121 = vpop.permute.xlu0 %120
    %122 = vset.pattern.permute.xlu0 0
    %123 = vperm.xlu0 %122, %v79
    %v124 = vpop.permute.xlu0 %123
    %125 = vset.pattern.permute.xlu0 0
    %126 = vperm.xlu0 %125, %v80
    %v127 = vpop.permute.xlu0 %126
    %128 = vset.pattern.permute.xlu0 0
    %129 = vperm.xlu0 %128, %v81
    %v130 = vpop.permute.xlu0 %129
    %131 = vset.pattern.permute.xlu0 0
    %132 = vperm.xlu0 %131, %v82
    %v133 = vpop.permute.xlu0 %132
    %134 = vset.pattern.permute.xlu0 0
    %135 = vperm.xlu0 %134, %v83
    %v136 = vpop.permute.xlu0 %135
    %137 = vset.pattern.permute.xlu0 0
    %138 = vperm.xlu0 %137, %v84
    %v139 = vpop.permute.xlu0 %138
    %140 = vset.pattern.permute.xlu0 0
    %141 = vperm.xlu0 %140, %v85
    %v142 = vpop.permute.xlu0 %141
    %143 = vset.pattern.permute.xlu0 0
    %144 = vperm.xlu0 %143, %v86
    %v145 = vpop.permute.xlu0 %144
    %146 = vset.pattern.permute.xlu0 0
    %147 = vperm.xlu0 %146, %v87
    %v148 = vpop.permute.xlu0 %147
    %149 = vset.pattern.permute.xlu0 0
    %150 = vperm.xlu0 %149, %v88
    %v151 = vpop.permute.xlu0 %150
    %152 = vset.pattern.permute.xlu0 0
    %153 = vperm.xlu0 %152, %v89
    %v154 = vpop.permute.xlu0 %153
    %155 = vset.pattern.permute.xlu0 0
    %156 = vperm.xlu0 %155, %v90
    %v157 = vpop.permute.xlu0 %156
    %158 = vset.pattern.permute.xlu0 0
    %159 = vperm.xlu0 %158, %v91
    %v160 = vpop.permute.xlu0 %159
    %161 = vset.pattern.permute.xlu0 0
    %162 = vperm.xlu0 %161, %v92
    %v163 = vpop.permute.xlu0 %162
    %164 = vset.pattern.permute.xlu0 0
    %165 = vperm.xlu0 %164, %v93
    %v166 = vpop.permute.xlu0 %165
    %167 = vset.pattern.permute.xlu0 0
    %168 = vperm.xlu0 %167, %v94
    %v169 = vpop.permute.xlu0 %168
    %170 = vset.pattern.permute.xlu0 0
    %171 = vperm.xlu0 %170, %v95
    %v172 = vpop.permute.xlu0 %171
    %vm173 = vcmp.eq.s32.totalorder %v100, %v97
    %vm174 = vcmp.eq.s32.totalorder %v103, %v97
    %vm175 = vcmp.eq.s32.totalorder %v106, %v97
    %vm176 = vcmp.eq.s32.totalorder %v109, %v97
    %vm177 = vcmp.eq.s32.totalorder %v112, %v97
    %vm178 = vcmp.eq.s32.totalorder %v115, %v97
    %vm179 = vcmp.eq.s32.totalorder %v118, %v97
    %vm180 = vcmp.eq.s32.totalorder %v121, %v97
    %vm181 = vcmp.eq.s32.totalorder %v124, %v97
    %vm182 = vcmp.eq.s32.totalorder %v127, %v97
    %vm183 = vcmp.eq.s32.totalorder %v130, %v97
    %vm184 = vcmp.eq.s32.totalorder %v133, %v97
    %vm185 = vcmp.eq.s32.totalorder %v136, %v97
    %vm186 = vcmp.eq.s32.totalorder %v139, %v97
    %vm187 = vcmp.eq.s32.totalorder %v142, %v97
    %vm188 = vcmp.eq.s32.totalorder %v145, %v97
    %vm189 = vcmp.eq.s32.totalorder %v148, %v97
    %vm190 = vcmp.eq.s32.totalorder %v151, %v97
    %vm191 = vcmp.eq.s32.totalorder %v154, %v97
    %vm192 = vcmp.eq.s32.totalorder %v157, %v97
    %vm193 = vcmp.eq.s32.totalorder %v160, %v97
    %vm194 = vcmp.eq.s32.totalorder %v163, %v97
    %vm195 = vcmp.eq.s32.totalorder %v166, %v97
    %vm196 = vcmp.eq.s32.totalorder %v169, %v97
    %vm197 = vcmp.eq.s32.totalorder %v172, %v97
    %v198 = vsel %vm173, 1, 0
    %v199 = vsel %vm174, 1, 0
    %v200 = vsel %vm175, 1, 0
    %v201 = vsel %vm176, 1, 0
    %v202 = vsel %vm177, 1, 0
    %v203 = vsel %vm178, 1, 0
    %v204 = vsel %vm179, 1, 0
    %v205 = vsel %vm180, 1, 0
    %v206 = vsel %vm181, 1, 0
    %v207 = vsel %vm182, 1, 0
    %v208 = vsel %vm183, 1, 0
    %v209 = vsel %vm184, 1, 0
    %v210 = vsel %vm185, 1, 0
    %v211 = vsel %vm186, 1, 0
    %v212 = vsel %vm187, 1, 0
    %v213 = vsel %vm188, 1, 0
    %v214 = vsel %vm189, 1, 0
    %v215 = vsel %vm190, 1, 0
    %v216 = vsel %vm191, 1, 0
    %v217 = vsel %vm192, 1, 0
    %v218 = vsel %vm193, 1, 0
    %v219 = vsel %vm194, 1, 0
    %v220 = vsel %vm195, 1, 0
    %v221 = vsel %vm196, 1, 0
    %v222 = vsel %vm197, 1, 0
    %v223 = vcvt.s32.f32 %v198
    %v224 = vcvt.s32.f32 %v199
    %v225 = vcvt.s32.f32 %v200
    %v226 = vcvt.s32.f32 %v201
    %v227 = vcvt.s32.f32 %v202
    %v228 = vcvt.s32.f32 %v203
    %v229 = vcvt.s32.f32 %v204
    %v230 = vcvt.s32.f32 %v205
    %v231 = vcvt.s32.f32 %v206
    %v232 = vcvt.s32.f32 %v207
    %v233 = vcvt.s32.f32 %v208
    %v234 = vcvt.s32.f32 %v209
    %v235 = vcvt.s32.f32 %v210
    %v236 = vcvt.s32.f32 %v211
    %v237 = vcvt.s32.f32 %v212
    %v238 = vcvt.s32.f32 %v213
    %v239 = vcvt.s32.f32 %v214
    %v240 = vcvt.s32.f32 %v215
    %v241 = vcvt.s32.f32 %v216
    %v242 = vcvt.s32.f32 %v217
    %v243 = vcvt.s32.f32 %v218
    %v244 = vcvt.s32.f32 %v219
    %v245 = vcvt.s32.f32 %v220
    %v246 = vcvt.s32.f32 %v221
    %v247 = vcvt.s32.f32 %v222
    %v248 = vld [vmem:[#allocation2] sm:$0xff]
    %v249 = vld [vmem:[#allocation2 + $0x8] sm:$0xff]
    %v250 = vld [vmem:[#allocation2 + $0x10] sm:$0xff]
    %v251 = vld [vmem:[#allocation2 + $0x18] sm:$0xff]
    %v252 = vld [vmem:[#allocation2 + $0x20] sm:$0xff]
    %v253 = vld [vmem:[#allocation2 + $0x28] sm:$0xff]
    %v254 = vld [vmem:[#allocation2 + $0x30] sm:$0xff]
    %v255 = vld [vmem:[#allocation2 + $0x38] sm:$0xff]
    %v256 = vld [vmem:[#allocation5] sm:$0xff]
    %v257 = vld [vmem:[#allocation5 + $0x8] sm:$0xff]
    %v258 = vld [vmem:[#allocation5 + $0x10] sm:$0xff]
    %v259 = vld [vmem:[#allocation5 + $0x18] sm:$0xff]
    %v260 = vld [vmem:[#allocation5 + $0x20] sm:$0xff]
    %v261 = vld [vmem:[#allocation5 + $0x28] sm:$0xff]
    %v262 = vld [vmem:[#allocation5 + $0x30] sm:$0xff]
    %v263 = vld [vmem:[#allocation5 + $0x38] sm:$0xff]
    %vm264 = vcmask 523264
    %v266 = vsel %vm264, %v223, 0
    %v269 = vsel %vm264, %v224, 0
    %v272 = vsel %vm264, %v225, 0
    %v275 = vsel %vm264, %v226, 0
    %v278 = vsel %vm264, %v227, 0
    %v281 = vsel %vm264, %v228, 0
    %v284 = vsel %vm264, %v229, 0
    %v287 = vsel %vm264, %v230, 0
    %v290 = vsel %vm264, %v231, 0
    %v293 = vsel %vm264, %v232, 0
    %v296 = vsel %vm264, %v233, 0
    %v299 = vsel %vm264, %v234, 0
    %v302 = vsel %vm264, %v235, 0
    %v305 = vsel %vm264, %v236, 0
    %v308 = vsel %vm264, %v237, 0
    %v311 = vsel %vm264, %v238, 0
    %v314 = vsel %vm264, %v239, 0
    %v317 = vsel %vm264, %v240, 0
    %v320 = vsel %vm264, %v241, 0
    %v323 = vsel %vm264, %v242, 0
    %v326 = vsel %vm264, %v243, 0
    %v329 = vsel %vm264, %v244, 0
    %v332 = vsel %vm264, %v245, 0
    %v335 = vsel %vm264, %v246, 0
    %v338 = vsel %vm264, %v247, 0
    %340 = vmatprep.subr.mxu0 0.0
    %v341 = vand.u32 %v256, 4294901760
    %342 = vmatpush1.msra.mxu0 %v341
    %343 = vmatprep.subr.mxu0 0.0
    %v344 = vand.u32 %v257, 4294901760
    %345 = vmatpush1.msra.mxu0 %v344
    %346 = vmatprep.subr.mxu0 0.0
    %v347 = vand.u32 %v258, 4294901760
    %348 = vmatpush1.msra.mxu0 %v347
    %349 = vmatprep.subr.mxu0 0.0
    %v350 = vand.u32 %v259, 4294901760
    %351 = vmatpush1.msra.mxu0 %v350
    %352 = vmatprep.subr.mxu0 0.0
    %v353 = vand.u32 %v260, 4294901760
    %354 = vmatpush1.msra.mxu0 %v353
    %355 = vmatprep.subr.mxu0 0.0
    %v356 = vand.u32 %v261, 4294901760
    %357 = vmatpush1.msra.mxu0 %v356
    %358 = vmatprep.subr.mxu0 0.0
    %v359 = vand.u32 %v262, 4294901760
    %360 = vmatpush1.msra.mxu0 %v359
    %361 = vmatprep.subr.mxu0 0.0
    %v362 = vand.u32 %v263, 4294901760
    %363 = vmatpush1.msra.mxu0 %v362
    %364 = vmatprep.subr.mxu0 0.0
    %365 = vmatpush1.msra.mxu0 0.0
    %366 = vmatprep.subr.mxu0 0.0
    %367 = vmatpush1.msra.mxu0 0.0
    %368 = vmatprep.subr.mxu0 0.0
    %369 = vmatpush1.msra.mxu0 0.0
    %370 = vmatprep.subr.mxu0 0.0
    %371 = vmatpush1.msra.mxu0 0.0
    %372 = vmatprep.subr.mxu0 0.0
    %373 = vmatpush1.msra.mxu0 0.0
    %374 = vmatprep.subr.mxu0 0.0
    %375 = vmatpush1.msra.mxu0 0.0
    %376 = vmatprep.subr.mxu0 0.0
    %377 = vmatpush1.msra.mxu0 0.0
    %378 = vmatprep.subr.mxu0 0.0
    %379 = vmatpush1.msra.mxu0 0.0
    %380 = vmatprep.subr.mxu0 0.0
    %381 = vmatpush1.msra.mxu0 0.0
    %382 = vmatprep.subr.mxu0 0.0
    %383 = vmatpush1.msra.mxu0 0.0
    %384 = vmatprep.subr.mxu0 0.0
    %385 = vmatpush1.msra.mxu0 0.0
    %386 = vmatprep.subr.mxu0 0.0
    %387 = vmatpush1.msra.mxu0 0.0
    %388 = vmatprep.subr.mxu0 0.0
    %389 = vmatpush1.msra.mxu0 0.0
    %390 = vmatprep.subr.mxu0 0.0
    %391 = vmatpush1.msra.mxu0 0.0
    %392 = vmatprep.subr.mxu0 0.0
    %393 = vmatpush1.msra.mxu0 0.0
    %394 = vmatprep.subr.mxu0 0.0
    %395 = vmatpush1.msra.mxu0 0.0
    %396 = vmatprep.subr.mxu0 0.0
    %397 = vmatpush1.msra.mxu0 0.0
    %398 = vmatprep.subr.mxu0 0.0
    %399 = vmatpush1.msra.mxu0 0.0
    %400 = vmatprep.subr.mxu0 0.0
    %401 = vmatpush1.msra.mxu0 0.0
    %402 = vmatprep.subr.mxu0 0.0
    %403 = vmatpush1.msra.mxu0 0.0
    %404 = vmatprep.subr.mxu0 0.0
    %405 = vmatpush1.msra.mxu0 0.0
    %406 = vmatprep.subr.mxu0 0.0
    %407 = vmatpush1.msra.mxu0 0.0
    %408 = vmatprep.subr.mxu0 0.0
    %409 = vmatpush1.msra.mxu0 0.0
    %410 = vmatprep.subr.mxu0 0.0
    %411 = vmatpush1.msra.mxu0 0.0
    %412 = vmatprep.mubr.f32.mxu0 0.0
    %v413 = vand.u32 %v266, 4294901760
    %v414 = vsub.f32 %v266, %v413
    %v415 = vand.u32 %v414, 4294901760
    %v416 = vsub.f32 %v414, %v415
    %v417 = vand.u32 %v416, 4294901760
    %418 = vmatmul.mubr.f32.gmra.mrb[0].mxu0 %v417
    %v419 = vpop.f32.mrb[0].mxu0
    %v420 = vadd.f32 0.0, %v419
    %v421 = vpop.f32.mrb[0].mxu0
    %422 = vmatprep.mubr.f32.mxu0 0.0
    %v423 = vand.u32 %v269, 4294901760
    %v424 = vsub.f32 %v269, %v423
    %v425 = vand.u32 %v424, 4294901760
    %v426 = vsub.f32 %v424, %v425
    %v427 = vand.u32 %v426, 4294901760
    %428 = vmatmul.mubr.f32.gmra.mrb[0].mxu0 %v427
    %v429 = vpop.f32.mrb[0].mxu0
    %v430 = vadd.f32 0.0, %v429
    %v431 = vpop.f32.mrb[0].mxu0
    %432 = vmatprep.mubr.f32.mxu0 0.0
    %v433 = vand.u32 %v272, 4294901760
    %v434 = vsub.f32 %v272, %v433
    %v435 = vand.u32 %v434, 4294901760
    %v436 = vsub.f32 %v434, %v435
    %v437 = vand.u32 %v436, 4294901760
    %438 = vmatmul.mubr.f32.gmra.mrb[0].mxu0 %v437
    %v439 = vpop.f32.mrb[0].mxu0
    %v440 = vadd.f32 0.0, %v439
    %v441 = vpop.f32.mrb[0].mxu0
    %442 = vmatprep.mubr.f32.mxu0 0.0
    %v443 = vand.u32 %v275, 4294901760
    %v444 = vsub.f32 %v275, %v443
    %v445 = vand.u32 %v444, 4294901760
    %v446 = vsub.f32 %v444, %v445
    %v447 = vand.u32 %v446, 4294901760
    %448 = vmatmul.mubr.f32.gmra.mrb[0].mxu0 %v447
    %v449 = vpop.f32.mrb[0].mxu0
    %v450 = vadd.f32 0.0, %v449
    %v451 = vpop.f32.mrb[0].mxu0
    %452 = vmatprep.mubr.f32.mxu0 0.0
    %v453 = vand.u32 %v278, 4294901760
    %v454 = vsub.f32 %v278, %v453
    %v455 = vand.u32 %v454, 4294901760
    %v456 = vsub.f32 %v454, %v455
    %v457 = vand.u32 %v456, 4294901760
    %458 = vmatmul.mubr.f32.gmra.mrb[0].mxu0 %v457
    %v459 = vpop.f32.mrb[0].mxu0
    %v460 = vadd.f32 0.0, %v459
    %v461 = vpop.f32.mrb[0].mxu0
    %462 = vmatprep.mubr.f32.mxu0 0.0
    %v463 = vand.u32 %v281, 4294901760
    %v464 = vsub.f32 %v281, %v463
    %v465 = vand.u32 %v464, 4294901760
    %v466 = vsub.f32 %v464, %v465
    %v467 = vand.u32 %v466, 4294901760
    %468 = vmatmul.mubr.f32.gmra.mrb[0].mxu0 %v467
    %v469 = vpop.f32.mrb[0].mxu0
    %v470 = vadd.f32 0.0, %v469
    %v471 = vpop.f32.mrb[0].mxu0
    %472 = vmatprep.mubr.f32.mxu0 0.0
    %v473 = vand.u32 %v284, 4294901760
    %v474 = vsub.f32 %v284, %v473
    %v475 = vand.u32 %v474, 4294901760
    %v476 = vsub.f32 %v474, %v475
    %v477 = vand.u32 %v476, 4294901760
    %478 = vmatmul.mubr.f32.gmra.mrb[0].mxu0 %v477
    %v479 = vpop.f32.mrb[0].mxu0
    %v480 = vadd.f32 0.0, %v479
    %v481 = vpop.f32.mrb[0].mxu0
    %482 = vmatprep.mubr.f32.mxu0 0.0
    %v483 = vand.u32 %v287, 4294901760
    %v484 = vsub.f32 %v287, %v483
    %v485 = vand.u32 %v484, 4294901760
    %v486 = vsub.f32 %v484, %v485
    %v487 = vand.u32 %v486, 4294901760
    %488 = vmatmul.mubr.f32.gmra.mrb[0].mxu0 %v487
    %v489 = vpop.f32.mrb[0].mxu0
    %v490 = vadd.f32 0.0, %v489
    %v491 = vpop.f32.mrb[0].mxu0
    %492 = vmatprep.mubr.f32.mxu0 0.0
    %v493 = vand.u32 %v290, 4294901760
    %v494 = vsub.f32 %v290, %v493
    %v495 = vand.u32 %v494, 4294901760
    %v496 = vsub.f32 %v494, %v495
    %v497 = vand.u32 %v496, 4294901760
    %498 = vmatmul.mubr.f32.gmra.mrb[0].mxu0 %v497
    %v499 = vpop.f32.mrb[0].mxu0
    %v500 = vadd.f32 0.0, %v499
    %v501 = vpop.f32.mrb[0].mxu0
    %502 = vmatprep.mubr.f32.mxu0 0.0
    %v503 = vand.u32 %v293, 4294901760
    %v504 = vsub.f32 %v293, %v503
    %v505 = vand.u32 %v504, 4294901760
    %v506 = vsub.f32 %v504, %v505
    %v507 = vand.u32 %v506, 4294901760
    %508 = vmatmul.mubr.f32.gmra.mrb[0].mxu0 %v507
    %v509 = vpop.f32.mrb[0].mxu0
    %v510 = vadd.f32 0.0, %v509
    %v511 = vpop.f32.mrb[0].mxu0
    %512 = vmatprep.mubr.f32.mxu0 0.0
    %v513 = vand.u32 %v296, 4294901760
    %v514 = vsub.f32 %v296, %v513
    %v515 = vand.u32 %v514, 4294901760
    %v516 = vsub.f32 %v514, %v515
    %v517 = vand.u32 %v516, 4294901760
    %518 = vmatmul.mubr.f32.gmra.mrb[0].mxu0 %v517
    %v519 = vpop.f32.mrb[0].mxu0
    %v520 = vadd.f32 0.0, %v519
    %v521 = vpop.f32.mrb[0].mxu0
    %522 = vmatprep.mubr.f32.mxu0 0.0
    %v523 = vand.u32 %v299, 4294901760
    %v524 = vsub.f32 %v299, %v523
    %v525 = vand.u32 %v524, 4294901760
    %v526 = vsub.f32 %v524, %v525
    %v527 = vand.u32 %v526, 4294901760
    %528 = vmatmul.mubr.f32.gmra.mrb[0].mxu0 %v527
    %v529 = vpop.f32.mrb[0].mxu0
    %v530 = vadd.f32 0.0, %v529
    %v531 = vpop.f32.mrb[0].mxu0
    %532 = vmatprep.mubr.f32.mxu0 0.0
    %v533 = vand.u32 %v302, 4294901760
    %v534 = vsub.f32 %v302, %v533
    %v535 = vand.u32 %v534, 4294901760
    %v536 = vsub.f32 %v534, %v535
    %v537 = vand.u32 %v536, 4294901760
    %538 = vmatmul.mubr.f32.gmra.mrb[0].mxu0 %v537
    %v539 = vpop.f32.mrb[0].mxu0
    %v540 = vadd.f32 0.0, %v539
    %v541 = vpop.f32.mrb[0].mxu0
    %542 = vmatprep.mubr.f32.mxu0 0.0
    %v543 = vand.u32 %v305, 4294901760
    %v544 = vsub.f32 %v305, %v543
    %v545 = vand.u32 %v544, 4294901760
    %v546 = vsub.f32 %v544, %v545
    %v547 = vand.u32 %v546, 4294901760
    %548 = vmatmul.mubr.f32.gmra.mrb[0].mxu0 %v547
    %v549 = vpop.f32.mrb[0].mxu0
    %v550 = vadd.f32 0.0, %v549
    %v551 = vpop.f32.mrb[0].mxu0
    %552 = vmatprep.mubr.f32.mxu0 0.0
    %v553 = vand.u32 %v308, 4294901760
    %v554 = vsub.f32 %v308, %v553
    %v555 = vand.u32 %v554, 4294901760
    %v556 = vsub.f32 %v554, %v555
    %v557 = vand.u32 %v556, 4294901760
    %558 = vmatmul.mubr.f32.gmra.mrb[0].mxu0 %v557
    %v559 = vpop.f32.mrb[0].mxu0
    %v560 = vadd.f32 0.0, %v559
    %v561 = vpop.f32.mrb[0].mxu0
    %562 = vmatprep.mubr.f32.mxu0 0.0
    %v563 = vand.u32 %v311, 4294901760
    %v564 = vsub.f32 %v311, %v563
    %v565 = vand.u32 %v564, 4294901760
    %v566 = vsub.f32 %v564, %v565
    %v567 = vand.u32 %v566, 4294901760
    %568 = vmatmul.mubr.f32.gmra.mrb[0].mxu0 %v567
    %v569 = vpop.f32.mrb[0].mxu0
    %v570 = vadd.f32 0.0, %v569
    %v571 = vpop.f32.mrb[0].mxu0
    %572 = vmatprep.mubr.f32.mxu0 0.0
    %v573 = vand.u32 %v314, 4294901760
    %v574 = vsub.f32 %v314, %v573
    %v575 = vand.u32 %v574, 4294901760
    %v576 = vsub.f32 %v574, %v575
    %v577 = vand.u32 %v576, 4294901760
    %578 = vmatmul.mubr.f32.gmra.mrb[0].mxu0 %v577
    %v579 = vpop.f32.mrb[0].mxu0
    %v580 = vadd.f32 0.0, %v579
    %v581 = vpop.f32.mrb[0].mxu0
    %582 = vmatprep.mubr.f32.mxu0 0.0
    %v583 = vand.u32 %v317, 4294901760
    %v584 = vsub.f32 %v317, %v583
    %v585 = vand.u32 %v584, 4294901760
    %v586 = vsub.f32 %v584, %v585
    %v587 = vand.u32 %v586, 4294901760
    %588 = vmatmul.mubr.f32.gmra.mrb[0].mxu0 %v587
    %v589 = vpop.f32.mrb[0].mxu0
    %v590 = vadd.f32 0.0, %v589
    %v591 = vpop.f32.mrb[0].mxu0
    %592 = vmatprep.mubr.f32.mxu0 0.0
    %v593 = vand.u32 %v320, 4294901760
    %v594 = vsub.f32 %v320, %v593
    %v595 = vand.u32 %v594, 4294901760
    %v596 = vsub.f32 %v594, %v595
    %v597 = vand.u32 %v596, 4294901760
    %598 = vmatmul.mubr.f32.gmra.mrb[0].mxu0 %v597
    %v599 = vpop.f32.mrb[0].mxu0
    %v600 = vadd.f32 0.0, %v599
    %v601 = vpop.f32.mrb[0].mxu0
    %602 = vmatprep.mubr.f32.mxu0 0.0
    %v603 = vand.u32 %v323, 4294901760
    %v604 = vsub.f32 %v323, %v603
    %v605 = vand.u32 %v604, 4294901760
    %v606 = vsub.f32 %v604, %v605
    %v607 = vand.u32 %v606, 4294901760
    %608 = vmatmul.mubr.f32.gmra.mrb[0].mxu0 %v607
    %v609 = vpop.f32.mrb[0].mxu0
    %v610 = vadd.f32 0.0, %v609
    %v611 = vpop.f32.mrb[0].mxu0
    %612 = vmatprep.mubr.f32.mxu0 0.0
    %v613 = vand.u32 %v326, 4294901760
    %v614 = vsub.f32 %v326, %v613
    %v615 = vand.u32 %v614, 4294901760
    %v616 = vsub.f32 %v614, %v615
    %v617 = vand.u32 %v616, 4294901760
    %618 = vmatmul.mubr.f32.gmra.mrb[0].mxu0 %v617
    %v619 = vpop.f32.mrb[0].mxu0
    %v620 = vadd.f32 0.0, %v619
    %v621 = vpop.f32.mrb[0].mxu0
    %622 = vmatprep.mubr.f32.mxu0 0.0
    %v623 = vand.u32 %v329, 4294901760
    %v624 = vsub.f32 %v329, %v623
    %v625 = vand.u32 %v624, 4294901760
    %v626 = vsub.f32 %v624, %v625
    %v627 = vand.u32 %v626, 4294901760
    %628 = vmatmul.mubr.f32.gmra.mrb[0].mxu0 %v627
    %v629 = vpop.f32.mrb[0].mxu0
    %v630 = vadd.f32 0.0, %v629
    %v631 = vpop.f32.mrb[0].mxu0
    %632 = vmatprep.mubr.f32.mxu0 0.0
    %v633 = vand.u32 %v332, 4294901760
    %v634 = vsub.f32 %v332, %v633
    %v635 = vand.u32 %v634, 4294901760
    %v636 = vsub.f32 %v634, %v635
    %v637 = vand.u32 %v636, 4294901760
    %638 = vmatmul.mubr.f32.gmra.mrb[0].mxu0 %v637
    %v639 = vpop.f32.mrb[0].mxu0
    %v640 = vadd.f32 0.0, %v639
    %v641 = vpop.f32.mrb[0].mxu0
    %642 = vmatprep.mubr.f32.mxu0 0.0
    %v643 = vand.u32 %v335, 4294901760
    %v644 = vsub.f32 %v335, %v643
    %v645 = vand.u32 %v644, 4294901760
    %v646 = vsub.f32 %v644, %v645
    %v647 = vand.u32 %v646, 4294901760
    %648 = vmatmul.mubr.f32.gmra.mrb[0].mxu0 %v647
    %v649 = vpop.f32.mrb[0].mxu0
    %v650 = vadd.f32 0.0, %v649
    %v651 = vpop.f32.mrb[0].mxu0
    %652 = vmatprep.mubr.f32.mxu0 0.0
    %v653 = vand.u32 %v338, 4294901760
    %v654 = vsub.f32 %v338, %v653
    %v655 = vand.u32 %v654, 4294901760
    %v656 = vsub.f32 %v654, %v655
    %v657 = vand.u32 %v656, 4294901760
    %658 = vmatmul.mubr.f32.gmra.mrb[0].mxu0 %v657
    %v659 = vpop.f32.mrb[0].mxu0
    %v660 = vadd.f32 0.0, %v659
    %v661 = vpop.f32.mrb[0].mxu0
    %662 = vdwg.mxu0
    %663 = vmatprep.subr.mxu0 0.0
    %v664 = vand.u32 %v256, 4294901760
    %v665 = vsub.f32 %v256, %v664
    %v666 = vand.u32 %v665, 4294901760
    %v667 = vsub.f32 %v665, %v666
    %v668 = vand.u32 %v667, 4294901760
    %669 = vmatpush1.msra.mxu0 %v668
    %670 = vmatprep.subr.mxu0 0.0
    %v671 = vand.u32 %v257, 4294901760
    %v672 = vsub.f32 %v257, %v671
    %v673 = vand.u32 %v672, 4294901760
    %v674 = vsub.f32 %v672, %v673
    %v675 = vand.u32 %v674, 4294901760
    %676 = vmatpush1.msra.mxu0 %v675
    %677 = vmatprep.subr.mxu0 0.0
    %v678 = vand.u32 %v258, 4294901760
    %v679 = vsub.f32 %v258, %v678
    %v680 = vand.u32 %v679, 4294901760
    %v681 = vsub.f32 %v679, %v680
    %v682 = vand.u32 %v681, 4294901760
    %683 = vmatpush1.msra.mxu0 %v682
    %684 = vmatprep.subr.mxu0 0.0
    %v685 = vand.u32 %v259, 4294901760
    %v686 = vsub.f32 %v259, %v685
    %v687 = vand.u32 %v686, 4294901760
    %v688 = vsub.f32 %v686, %v687
    %v689 = vand.u32 %v688, 4294901760
    %690 = vmatpush1.msra.mxu0 %v689
    %691 = vmatprep.subr.mxu0 0.0
    %v692 = vand.u32 %v260, 4294901760
    %v693 = vsub.f32 %v260, %v692
    %v694 = vand.u32 %v693, 4294901760
    %v695 = vsub.f32 %v693, %v694
    %v696 = vand.u32 %v695, 4294901760
    %697 = vmatpush1.msra.mxu0 %v696
    %698 = vmatprep.subr.mxu0 0.0
    %v699 = vand.u32 %v261, 4294901760
    %v700 = vsub.f32 %v261, %v699
    %v701 = vand.u32 %v700, 4294901760
    %v702 = vsub.f32 %v700, %v701
    %v703 = vand.u32 %v702, 4294901760
    %704 = vmatpush1.msra.mxu0 %v703
    %705 = vmatprep.subr.mxu0 0.0
    %v706 = vand.u32 %v262, 4294901760
    %v707 = vsub.f32 %v262, %v706
    %v708 = vand.u32 %v707, 4294901760
    %v709 = vsub.f32 %v707, %v708
    %v710 = vand.u32 %v709, 4294901760
    %711 = vmatpush1.msra.mxu0 %v710
    %712 = vmatprep.subr.mxu0 0.0
    %v713 = vand.u32 %v263, 4294901760
    %v714 = vsub.f32 %v263, %v713
    %v715 = vand.u32 %v714, 4294901760
    %v716 = vsub.f32 %v714, %v715
    %v717 = vand.u32 %v716, 4294901760
    %718 = vmatpush1.msra.mxu0 %v717
    %719 = vmatprep.subr.mxu0 0.0
    %720 = vmatpush1.msra.mxu0 0.0
    %721 = vmatprep.subr.mxu0 0.0
    %722 = vmatpush1.msra.mxu0 0.0
    %723 = vmatprep.subr.mxu0 0.0
    %724 = vmatpush1.msra.mxu0 0.0
    %725 = vmatprep.subr.mxu0 0.0
    %726 = vmatpush1.msra.mxu0 0.0
    %727 = vmatprep.subr.mxu0 0.0
    %728 = vmatpush1.msra.mxu0 0.0
    %729 = vmatprep.subr.mxu0 0.0
    %730 = vmatpush1.msra.mxu0 0.0
    %731 = vmatprep.subr.mxu0 0.0
    %732 = vmatpush1.msra.mxu0 0.0
    %733 = vmatprep.subr.mxu0 0.0
    %734 = vmatpush1.msra.mxu0 0.0
    %735 = vmatprep.subr.mxu0 0.0
    %736 = vmatpush1.msra.mxu0 0.0
    %737 = vmatprep.subr.mxu0 0.0
    %738 = vmatpush1.msra.mxu0 0.0
    %739 = vmatprep.subr.mxu0 0.0
    %740 = vmatpush1.msra.mxu0 0.0
    %741 = vmatprep.subr.mxu0 0.0
    %742 = vmatpush1.msra.mxu0 0.0
    %743 = vmatprep.subr.mxu0 0.0
    %744 = vmatpush1.msra.mxu0 0.0
    %745 = vmatprep.subr.mxu0 0.0
    %746 = vmatpush1.msra.mxu0 0.0
    %747 = vmatprep.subr.mxu0 0.0
    %748 = vmatpush1.msra.mxu0 0.0
    %749 = vmatprep.subr.mxu0 0.0
    %750 = vmatpush1.msra.mxu0 0.0
    %751 = vmatprep.subr.mxu0 0.0
    %752 = vmatpush1.msra.mxu0 0.0
    %753 = vmatprep.subr.mxu0 0.0
    %754 = vmatpush1.msra.mxu0 0.0
    %755 = vmatprep.subr.mxu0 0.0
    %756 = vmatpush1.msra.mxu0 0.0
    %757 = vmatprep.subr.mxu0 0.0
    %758 = vmatpush1.msra.mxu0 0.0
    %759 = vmatprep.subr.mxu0 0.0
    %760 = vmatpush1.msra.mxu0 0.0
    %761 = vmatprep.subr.mxu0 0.0
    %762 = vmatpush1.msra.mxu0 0.0
    %763 = vmatprep.subr.mxu0 0.0
    %764 = vmatpush1.msra.mxu0 0.0
    %765 = vmatprep.subr.mxu0 0.0
    %766 = vmatpush1.msra.mxu0 0.0
    %767 = vmatprep.mubr.f32.mxu0 0.0
    %v768 = vand.u32 %v266, 4294901760
    %769 = vmatmul.mubr.f32.gmra.mrb[0].mxu0 %v768
    %v770 = vpop.f32.mrb[0].mxu0
    %v771 = vadd.f32 %v420, %v770
    %v772 = vpop.f32.mrb[0].mxu0
    %773 = vmatprep.mubr.f32.mxu0 0.0
    %v774 = vand.u32 %v269, 4294901760
    %775 = vmatmul.mubr.f32.gmra.mrb[0].mxu0 %v774
    %v776 = vpop.f32.mrb[0].mxu0
    %v777 = vadd.f32 %v430, %v776
    %v778 = vpop.f32.mrb[0].mxu0
    %779 = vmatprep.mubr.f32.mxu0 0.0
    %v780 = vand.u32 %v272, 4294901760
    %781 = vmatmul.mubr.f32.gmra.mrb[0].mxu0 %v780
    %v782 = vpop.f32.mrb[0].mxu0
    %v783 = vadd.f32 %v440, %v782
    %v784 = vpop.f32.mrb[0].mxu0
    %785 = vmatprep.mubr.f32.mxu0 0.0
    %v786 = vand.u32 %v275, 4294901760
    %787 = vmatmul.mubr.f32.gmra.mrb[0].mxu0 %v786
    %v788 = vpop.f32.mrb[0].mxu0
    %v789 = vadd.f32 %v450, %v788
    %v790 = vpop.f32.mrb[0].mxu0
    %791 = vmatprep.mubr.f32.mxu0 0.0
    %v792 = vand.u32 %v278, 4294901760
    %793 = vmatmul.mubr.f32.gmra.mrb[0].mxu0 %v792
    %v794 = vpop.f32.mrb[0].mxu0
    %v795 = vadd.f32 %v460, %v794
    %v796 = vpop.f32.mrb[0].mxu0
    %797 = vmatprep.mubr.f32.mxu0 0.0
    %v798 = vand.u32 %v281, 4294901760
    %799 = vmatmul.mubr.f32.gmra.mrb[0].mxu0 %v798
    %v800 = vpop.f32.mrb[0].mxu0
    %v801 = vadd.f32 %v470, %v800
    %v802 = vpop.f32.mrb[0].mxu0
    %803 = vmatprep.mubr.f32.mxu0 0.0
    %v804 = vand.u32 %v284, 4294901760
    %805 = vmatmul.mubr.f32.gmra.mrb[0].mxu0 %v804
    %v806 = vpop.f32.mrb[0].mxu0
    %v807 = vadd.f32 %v480, %v806
    %v808 = vpop.f32.mrb[0].mxu0
    %809 = vmatprep.mubr.f32.mxu0 0.0
    %v810 = vand.u32 %v287, 4294901760
    %811 = vmatmul.mubr.f32.gmra.mrb[0].mxu0 %v810
    %v812 = vpop.f32.mrb[0].mxu0
    %v813 = vadd.f32 %v490, %v812
    %v814 = vpop.f32.mrb[0].mxu0
    %815 = vmatprep.mubr.f32.mxu0 0.0
    %v816 = vand.u32 %v290, 4294901760
    %817 = vmatmul.mubr.f32.gmra.mrb[0].mxu0 %v816
    %v818 = vpop.f32.mrb[0].mxu0
    %v819 = vadd.f32 %v500, %v818
    %v820 = vpop.f32.mrb[0].mxu0
    %821 = vmatprep.mubr.f32.mxu0 0.0
    %v822 = vand.u32 %v293, 4294901760
    %823 = vmatmul.mubr.f32.gmra.mrb[0].mxu0 %v822
    %v824 = vpop.f32.mrb[0].mxu0
    %v825 = vadd.f32 %v510, %v824
    %v826 = vpop.f32.mrb[0].mxu0
    %827 = vmatprep.mubr.f32.mxu0 0.0
    %v828 = vand.u32 %v296, 4294901760
    %829 = vmatmul.mubr.f32.gmra.mrb[0].mxu0 %v828
    %v830 = vpop.f32.mrb[0].mxu0
    %v831 = vadd.f32 %v520, %v830
    %v832 = vpop.f32.mrb[0].mxu0
    %833 = vmatprep.mubr.f32.mxu0 0.0
    %v834 = vand.u32 %v299, 4294901760
    %835 = vmatmul.mubr.f32.gmra.mrb[0].mxu0 %v834
    %v836 = vpop.f32.mrb[0].mxu0
    %v837 = vadd.f32 %v530, %v836
    %v838 = vpop.f32.mrb[0].mxu0
    %839 = vmatprep.mubr.f32.mxu0 0.0
    %v840 = vand.u32 %v302, 4294901760
    %841 = vmatmul.mubr.f32.gmra.mrb[0].mxu0 %v840
    %v842 = vpop.f32.mrb[0].mxu0
    %v843 = vadd.f32 %v540, %v842
    %v844 = vpop.f32.mrb[0].mxu0
    %845 = vmatprep.mubr.f32.mxu0 0.0
    %v846 = vand.u32 %v305, 4294901760
    %847 = vmatmul.mubr.f32.gmra.mrb[0].mxu0 %v846
    %v848 = vpop.f32.mrb[0].mxu0
    %v849 = vadd.f32 %v550, %v848
    %v850 = vpop.f32.mrb[0].mxu0
    %851 = vmatprep.mubr.f32.mxu0 0.0
    %v852 = vand.u32 %v308, 4294901760
    %853 = vmatmul.mubr.f32.gmra.mrb[0].mxu0 %v852
    %v854 = vpop.f32.mrb[0].mxu0
    %v855 = vadd.f32 %v560, %v854
    %v856 = vpop.f32.mrb[0].mxu0
    %857 = vmatprep.mubr.f32.mxu0 0.0
    %v858 = vand.u32 %v311, 4294901760
    %859 = vmatmul.mubr.f32.gmra.mrb[0].mxu0 %v858
    %v860 = vpop.f32.mrb[0].mxu0
    %v861 = vadd.f32 %v570, %v860
    %v862 = vpop.f32.mrb[0].mxu0
    %863 = vmatprep.mubr.f32.mxu0 0.0
    %v864 = vand.u32 %v314, 4294901760
    %865 = vmatmul.mubr.f32.gmra.mrb[0].mxu0 %v864
    %v866 = vpop.f32.mrb[0].mxu0
    %v867 = vadd.f32 %v580, %v866
    %v868 = vpop.f32.mrb[0].mxu0
    %869 = vmatprep.mubr.f32.mxu0 0.0
    %v870 = vand.u32 %v317, 4294901760
    %871 = vmatmul.mubr.f32.gmra.mrb[0].mxu0 %v870
    %v872 = vpop.f32.mrb[0].mxu0
    %v873 = vadd.f32 %v590, %v872
    %v874 = vpop.f32.mrb[0].mxu0
    %875 = vmatprep.mubr.f32.mxu0 0.0
    %v876 = vand.u32 %v320, 4294901760
    %877 = vmatmul.mubr.f32.gmra.mrb[0].mxu0 %v876
    %v878 = vpop.f32.mrb[0].mxu0
    %v879 = vadd.f32 %v600, %v878
    %v880 = vpop.f32.mrb[0].mxu0
    %881 = vmatprep.mubr.f32.mxu0 0.0
    %v882 = vand.u32 %v323, 4294901760
    %883 = vmatmul.mubr.f32.gmra.mrb[0].mxu0 %v882
    %v884 = vpop.f32.mrb[0].mxu0
    %v885 = vadd.f32 %v610, %v884
    %v886 = vpop.f32.mrb[0].mxu0
    %887 = vmatprep.mubr.f32.mxu0 0.0
    %v888 = vand.u32 %v326, 4294901760
    %889 = vmatmul.mubr.f32.gmra.mrb[0].mxu0 %v888
    %v890 = vpop.f32.mrb[0].mxu0
    %v891 = vadd.f32 %v620, %v890
    %v892 = vpop.f32.mrb[0].mxu0
    %893 = vmatprep.mubr.f32.mxu0 0.0
    %v894 = vand.u32 %v329, 4294901760
    %895 = vmatmul.mubr.f32.gmra.mrb[0].mxu0 %v894
    %v896 = vpop.f32.mrb[0].mxu0
    %v897 = vadd.f32 %v630, %v896
    %v898 = vpop.f32.mrb[0].mxu0
    %899 = vmatprep.mubr.f32.mxu0 0.0
    %v900 = vand.u32 %v332, 4294901760
    %901 = vmatmul.mubr.f32.gmra.mrb[0].mxu0 %v900
    %v902 = vpop.f32.mrb[0].mxu0
    %v903 = vadd.f32 %v640, %v902
    %v904 = vpop.f32.mrb[0].mxu0
    %905 = vmatprep.mubr.f32.mxu0 0.0
    %v906 = vand.u32 %v335, 4294901760
    %907 = vmatmul.mubr.f32.gmra.mrb[0].mxu0 %v906
    %v908 = vpop.f32.mrb[0].mxu0
    %v909 = vadd.f32 %v650, %v908
    %v910 = vpop.f32.mrb[0].mxu0
    %911 = vmatprep.mubr.f32.mxu0 0.0
    %v912 = vand.u32 %v338, 4294901760
    %913 = vmatmul.mubr.f32.gmra.mrb[0].mxu0 %v912
    %v914 = vpop.f32.mrb[0].mxu0
    %v915 = vadd.f32 %v660, %v914
    %v916 = vpop.f32.mrb[0].mxu0
    %917 = vdwg.mxu0
    %918 = vmatprep.subr.mxu0 0.0
    %v919 = vand.u32 %v256, 4294901760
    %v920 = vsub.f32 %v256, %v919
    %921 = vmatpush1.msra.mxu0 %v920
    %922 = vmatprep.subr.mxu0 0.0
    %v923 = vand.u32 %v257, 4294901760
    %v924 = vsub.f32 %v257, %v923
    %925 = vmatpush1.msra.mxu0 %v924
    %926 = vmatprep.subr.mxu0 0.0
    %v927 = vand.u32 %v258, 4294901760
    %v928 = vsub.f32 %v258, %v927
    %929 = vmatpush1.msra.mxu0 %v928
    %930 = vmatprep.subr.mxu0 0.0
    %v931 = vand.u32 %v259, 4294901760
    %v932 = vsub.f32 %v259, %v931
    %933 = vmatpush1.msra.mxu0 %v932
    %934 = vmatprep.subr.mxu0 0.0
    %v935 = vand.u32 %v260, 4294901760
    %v936 = vsub.f32 %v260, %v935
    %937 = vmatpush1.msra.mxu0 %v936
    %938 = vmatprep.subr.mxu0 0.0
    %v939 = vand.u32 %v261, 4294901760
    %v940 = vsub.f32 %v261, %v939
    %941 = vmatpush1.msra.mxu0 %v940
    %942 = vmatprep.subr.mxu0 0.0
    %v943 = vand.u32 %v262, 4294901760
    %v944 = vsub.f32 %v262, %v943
    %945 = vmatpush1.msra.mxu0 %v944
    %946 = vmatprep.subr.mxu0 0.0
    %v947 = vand.u32 %v263, 4294901760
    %v948 = vsub.f32 %v263, %v947
    %949 = vmatpush1.msra.mxu0 %v948
    %950 = vmatprep.subr.mxu0 0.0
    %951 = vmatpush1.msra.mxu0 0.0
    %952 = vmatprep.subr.mxu0 0.0
    %953 = vmatpush1.msra.mxu0 0.0
    %954 = vmatprep.subr.mxu0 0.0
    %955 = vmatpush1.msra.mxu0 0.0
    %956 = vmatprep.subr.mxu0 0.0
    %957 = vmatpush1.msra.mxu0 0.0
    %958 = vmatprep.subr.mxu0 0.0
    %959 = vmatpush1.msra.mxu0 0.0
    %960 = vmatprep.subr.mxu0 0.0
    %961 = vmatpush1.msra.mxu0 0.0
    %962 = vmatprep.subr.mxu0 0.0
    %963 = vmatpush1.msra.mxu0 0.0
    %964 = vmatprep.subr.mxu0 0.0
    %965 = vmatpush1.msra.mxu0 0.0
    %966 = vmatprep.subr.mxu0 0.0
    %967 = vmatpush1.msra.mxu0 0.0
    %968 = vmatprep.subr.mxu0 0.0
    %969 = vmatpush1.msra.mxu0 0.0
    %970 = vmatprep.subr.mxu0 0.0
    %971 = vmatpush1.msra.mxu0 0.0
    %972 = vmatprep.subr.mxu0 0.0
    %973 = vmatpush1.msra.mxu0 0.0
    %974 = vmatprep.subr.mxu0 0.0
    %975 = vmatpush1.msra.mxu0 0.0
    %976 = vmatprep.subr.mxu0 0.0
    %977 = vmatpush1.msra.mxu0 0.0
    %978 = vmatprep.subr.mxu0 0.0
    %979 = vmatpush1.msra.mxu0 0.0
    %980 = vmatprep.subr.mxu0 0.0
    %981 = vmatpush1.msra.mxu0 0.0
    %982 = vmatprep.subr.mxu0 0.0
    %983 = vmatpush1.msra.mxu0 0.0
    %984 = vmatprep.subr.mxu0 0.0
    %985 = vmatpush1.msra.mxu0 0.0
    %986 = vmatprep.subr.mxu0 0.0
    %987 = vmatpush1.msra.mxu0 0.0
    %988 = vmatprep.subr.mxu0 0.0
    %989 = vmatpush1.msra.mxu0 0.0
    %990 = vmatprep.subr.mxu0 0.0
    %991 = vmatpush1.msra.mxu0 0.0
    %992 = vmatprep.subr.mxu0 0.0
    %993 = vmatpush1.msra.mxu0 0.0
    %994 = vmatprep.subr.mxu0 0.0
    %995 = vmatpush1.msra.mxu0 0.0
    %996 = vmatprep.subr.mxu0 0.0
    %997 = vmatpush1.msra.mxu0 0.0
    %998 = vmatprep.mubr.f32.mxu0 0.0
    %v999 = vand.u32 %v266, 4294901760
    %v1000 = vsub.f32 %v266, %v999
    %1001 = vmatmul.mubr.f32.gmra.mrb[0].mxu0 %v1000
    %v1002 = vpop.f32.mrb[0].mxu0
    %v1003 = vadd.f32 %v771, %v1002
    %v1004 = vpop.f32.mrb[0].mxu0
    %1005 = vmatprep.mubr.f32.mxu0 0.0
    %v1006 = vand.u32 %v269, 4294901760
    %v1007 = vsub.f32 %v269, %v1006
    %1008 = vmatmul.mubr.f32.gmra.mrb[0].mxu0 %v1007
    %v1009 = vpop.f32.mrb[0].mxu0
    %v1010 = vadd.f32 %v777, %v1009
    %v1011 = vpop.f32.mrb[0].mxu0
    %1012 = vmatprep.mubr.f32.mxu0 0.0
    %v1013 = vand.u32 %v272, 4294901760
    %v1014 = vsub.f32 %v272, %v1013
    %1015 = vmatmul.mubr.f32.gmra.mrb[0].mxu0 %v1014
    %v1016 = vpop.f32.mrb[0].mxu0
    %v1017 = vadd.f32 %v783, %v1016
    %v1018 = vpop.f32.mrb[0].mxu0
    %1019 = vmatprep.mubr.f32.mxu0 0.0
    %v1020 = vand.u32 %v275, 4294901760
    %v1021 = vsub.f32 %v275, %v1020
    %1022 = vmatmul.mubr.f32.gmra.mrb[0].mxu0 %v1021
    %v1023 = vpop.f32.mrb[0].mxu0
    %v1024 = vadd.f32 %v789, %v1023
    %v1025 = vpop.f32.mrb[0].mxu0
    %1026 = vmatprep.mubr.f32.mxu0 0.0
    %v1027 = vand.u32 %v278, 4294901760
    %v1028 = vsub.f32 %v278, %v1027
    %1029 = vmatmul.mubr.f32.gmra.mrb[0].mxu0 %v1028
    %v1030 = vpop.f32.mrb[0].mxu0
    %v1031 = vadd.f32 %v795, %v1030
    %v1032 = vpop.f32.mrb[0].mxu0
    %1033 = vmatprep.mubr.f32.mxu0 0.0
    %v1034 = vand.u32 %v281, 4294901760
    %v1035 = vsub.f32 %v281, %v1034
    %1036 = vmatmul.mubr.f32.gmra.mrb[0].mxu0 %v1035
    %v1037 = vpop.f32.mrb[0].mxu0
    %v1038 = vadd.f32 %v801, %v1037
    %v1039 = vpop.f32.mrb[0].mxu0
    %1040 = vmatprep.mubr.f32.mxu0 0.0
    %v1041 = vand.u32 %v284, 4294901760
    %v1042 = vsub.f32 %v284, %v1041
    %1043 = vmatmul.mubr.f32.gmra.mrb[0].mxu0 %v1042
    %v1044 = vpop.f32.mrb[0].mxu0
    %v1045 = vadd.f32 %v807, %v1044
    %v1046 = vpop.f32.mrb[0].mxu0
    %1047 = vmatprep.mubr.f32.mxu0 0.0
    %v1048 = vand.u32 %v287, 4294901760
    %v1049 = vsub.f32 %v287, %v1048
    %1050 = vmatmul.mubr.f32.gmra.mrb[0].mxu0 %v1049
    %v1051 = vpop.f32.mrb[0].mxu0
    %v1052 = vadd.f32 %v813, %v1051
    %v1053 = vpop.f32.mrb[0].mxu0
    %1054 = vmatprep.mubr.f32.mxu0 0.0
    %v1055 = vand.u32 %v290, 4294901760
    %v1056 = vsub.f32 %v290, %v1055
    %1057 = vmatmul.mubr.f32.gmra.mrb[0].mxu0 %v1056
    %v1058 = vpop.f32.mrb[0].mxu0
    %v1059 = vadd.f32 %v819, %v1058
    %v1060 = vpop.f32.mrb[0].mxu0
    %1061 = vmatprep.mubr.f32.mxu0 0.0
    %v1062 = vand.u32 %v293, 4294901760
    %v1063 = vsub.f32 %v293, %v1062
    %1064 = vmatmul.mubr.f32.gmra.mrb[0].mxu0 %v1063
    %v1065 = vpop.f32.mrb[0].mxu0
    %v1066 = vadd.f32 %v825, %v1065
    %v1067 = vpop.f32.mrb[0].mxu0
    %1068 = vmatprep.mubr.f32.mxu0 0.0
    %v1069 = vand.u32 %v296, 4294901760
    %v1070 = vsub.f32 %v296, %v1069
    %1071 = vmatmul.mubr.f32.gmra.mrb[0].mxu0 %v1070
    %v1072 = vpop.f32.mrb[0].mxu0
    %v1073 = vadd.f32 %v831, %v1072
    %v1074 = vpop.f32.mrb[0].mxu0
    %1075 = vmatprep.mubr.f32.mxu0 0.0
    %v1076 = vand.u32 %v299, 4294901760
    %v1077 = vsub.f32 %v299, %v1076
    %1078 = vmatmul.mubr.f32.gmra.mrb[0].mxu0 %v1077
    %v1079 = vpop.f32.mrb[0].mxu0
    %v1080 = vadd.f32 %v837, %v1079
    %v1081 = vpop.f32.mrb[0].mxu0
    %1082 = vmatprep.mubr.f32.mxu0 0.0
    %v1083 = vand.u32 %v302, 4294901760
    %v1084 = vsub.f32 %v302, %v1083
    %1085 = vmatmul.mubr.f32.gmra.mrb[0].mxu0 %v1084
    %v1086 = vpop.f32.mrb[0].mxu0
    %v1087 = vadd.f32 %v843, %v1086
    %v1088 = vpop.f32.mrb[0].mxu0
    %1089 = vmatprep.mubr.f32.mxu0 0.0
    %v1090 = vand.u32 %v305, 4294901760
    %v1091 = vsub.f32 %v305, %v1090
    %1092 = vmatmul.mubr.f32.gmra.mrb[0].mxu0 %v1091
    %v1093 = vpop.f32.mrb[0].mxu0
    %v1094 = vadd.f32 %v849, %v1093
    %v1095 = vpop.f32.mrb[0].mxu0
    %1096 = vmatprep.mubr.f32.mxu0 0.0
    %v1097 = vand.u32 %v308, 4294901760
    %v1098 = vsub.f32 %v308, %v1097
    %1099 = vmatmul.mubr.f32.gmra.mrb[0].mxu0 %v1098
    %v1100 = vpop.f32.mrb[0].mxu0
    %v1101 = vadd.f32 %v855, %v1100
    %v1102 = vpop.f32.mrb[0].mxu0
    %1103 = vmatprep.mubr.f32.mxu0 0.0
    %v1104 = vand.u32 %v311, 4294901760
    %v1105 = vsub.f32 %v311, %v1104
    %1106 = vmatmul.mubr.f32.gmra.mrb[0].mxu0 %v1105
    %v1107 = vpop.f32.mrb[0].mxu0
    %v1108 = vadd.f32 %v861, %v1107
    %v1109 = vpop.f32.mrb[0].mxu0
    %1110 = vmatprep.mubr.f32.mxu0 0.0
    %v1111 = vand.u32 %v314, 4294901760
    %v1112 = vsub.f32 %v314, %v1111
    %1113 = vmatmul.mubr.f32.gmra.mrb[0].mxu0 %v1112
    %v1114 = vpop.f32.mrb[0].mxu0
    %v1115 = vadd.f32 %v867, %v1114
    %v1116 = vpop.f32.mrb[0].mxu0
    %1117 = vmatprep.mubr.f32.mxu0 0.0
    %v1118 = vand.u32 %v317, 4294901760
    %v1119 = vsub.f32 %v317, %v1118
    %1120 = vmatmul.mubr.f32.gmra.mrb[0].mxu0 %v1119
    %v1121 = vpop.f32.mrb[0].mxu0
    %v1122 = vadd.f32 %v873, %v1121
    %v1123 = vpop.f32.mrb[0].mxu0
    %1124 = vmatprep.mubr.f32.mxu0 0.0
    %v1125 = vand.u32 %v320, 4294901760
    %v1126 = vsub.f32 %v320, %v1125
    %1127 = vmatmul.mubr.f32.gmra.mrb[0].mxu0 %v1126
    %v1128 = vpop.f32.mrb[0].mxu0
    %v1129 = vadd.f32 %v879, %v1128
    %v1130 = vpop.f32.mrb[0].mxu0
    %1131 = vmatprep.mubr.f32.mxu0 0.0
    %v1132 = vand.u32 %v323, 4294901760
    %v1133 = vsub.f32 %v323, %v1132
    %1134 = vmatmul.mubr.f32.gmra.mrb[0].mxu0 %v1133
    %v1135 = vpop.f32.mrb[0].mxu0
    %v1136 = vadd.f32 %v885, %v1135
    %v1137 = vpop.f32.mrb[0].mxu0
    %1138 = vmatprep.mubr.f32.mxu0 0.0
    %v1139 = vand.u32 %v326, 4294901760
    %v1140 = vsub.f32 %v326, %v1139
    %1141 = vmatmul.mubr.f32.gmra.mrb[0].mxu0 %v1140
    %v1142 = vpop.f32.mrb[0].mxu0
    %v1143 = vadd.f32 %v891, %v1142
    %v1144 = vpop.f32.mrb[0].mxu0
    %1145 = vmatprep.mubr.f32.mxu0 0.0
    %v1146 = vand.u32 %v329, 4294901760
    %v1147 = vsub.f32 %v329, %v1146
    %1148 = vmatmul.mubr.f32.gmra.mrb[0].mxu0 %v1147
    %v1149 = vpop.f32.mrb[0].mxu0
    %v1150 = vadd.f32 %v897, %v1149
    %v1151 = vpop.f32.mrb[0].mxu0
    %1152 = vmatprep.mubr.f32.mxu0 0.0
    %v1153 = vand.u32 %v332, 4294901760
    %v1154 = vsub.f32 %v332, %v1153
    %1155 = vmatmul.mubr.f32.gmra.mrb[0].mxu0 %v1154
    %v1156 = vpop.f32.mrb[0].mxu0
    %v1157 = vadd.f32 %v903, %v1156
    %v1158 = vpop.f32.mrb[0].mxu0
    %1159 = vmatprep.mubr.f32.mxu0 0.0
    %v1160 = vand.u32 %v335, 4294901760
    %v1161 = vsub.f32 %v335, %v1160
    %1162 = vmatmul.mubr.f32.gmra.mrb[0].mxu0 %v1161
    %v1163 = vpop.f32.mrb[0].mxu0
    %v1164 = vadd.f32 %v909, %v1163
    %v1165 = vpop.f32.mrb[0].mxu0
    %1166 = vmatprep.mubr.f32.mxu0 0.0
    %v1167 = vand.u32 %v338, 4294901760
    %v1168 = vsub.f32 %v338, %v1167
    %1169 = vmatmul.mubr.f32.gmra.mrb[0].mxu0 %v1168
    %v1170 = vpop.f32.mrb[0].mxu0
    %v1171 = vadd.f32 %v915, %v1170
    %v1172 = vpop.f32.mrb[0].mxu0
    %1173 = vdwg.mxu0
    %1174 = vmatprep.subr.mxu0 0.0
    %v1175 = vand.u32 %v256, 4294901760
    %1176 = vmatpush1.msra.mxu0 %v1175
    %1177 = vmatprep.subr.mxu0 0.0
    %v1178 = vand.u32 %v257, 4294901760
    %1179 = vmatpush1.msra.mxu0 %v1178
    %1180 = vmatprep.subr.mxu0 0.0
    %v1181 = vand.u32 %v258, 4294901760
    %1182 = vmatpush1.msra.mxu0 %v1181
    %1183 = vmatprep.subr.mxu0 0.0
    %v1184 = vand.u32 %v259, 4294901760
    %1185 = vmatpush1.msra.mxu0 %v1184
    %1186 = vmatprep.subr.mxu0 0.0
    %v1187 = vand.u32 %v260, 4294901760
    %1188 = vmatpush1.msra.mxu0 %v1187
    %1189 = vmatprep.subr.mxu0 0.0
    %v1190 = vand.u32 %v261, 4294901760
    %1191 = vmatpush1.msra.mxu0 %v1190
    %1192 = vmatprep.subr.mxu0 0.0
    %v1193 = vand.u32 %v262, 4294901760
    %1194 = vmatpush1.msra.mxu0 %v1193
    %1195 = vmatprep.subr.mxu0 0.0
    %v1196 = vand.u32 %v263, 4294901760
    %1197 = vmatpush1.msra.mxu0 %v1196
    %1198 = vmatprep.subr.mxu0 0.0
    %1199 = vmatpush1.msra.mxu0 0.0
    %1200 = vmatprep.subr.mxu0 0.0
    %1201 = vmatpush1.msra.mxu0 0.0
    %1202 = vmatprep.subr.mxu0 0.0
    %1203 = vmatpush1.msra.mxu0 0.0
    %1204 = vmatprep.subr.mxu0 0.0
    %1205 = vmatpush1.msra.mxu0 0.0
    %1206 = vmatprep.subr.mxu0 0.0
    %1207 = vmatpush1.msra.mxu0 0.0
    %1208 = vmatprep.subr.mxu0 0.0
    %1209 = vmatpush1.msra.mxu0 0.0
    %1210 = vmatprep.subr.mxu0 0.0
    %1211 = vmatpush1.msra.mxu0 0.0
    %1212 = vmatprep.subr.mxu0 0.0
    %1213 = vmatpush1.msra.mxu0 0.0
    %1214 = vmatprep.subr.mxu0 0.0
    %1215 = vmatpush1.msra.mxu0 0.0
    %1216 = vmatprep.subr.mxu0 0.0
    %1217 = vmatpush1.msra.mxu0 0.0
    %1218 = vmatprep.subr.mxu0 0.0
    %1219 = vmatpush1.msra.mxu0 0.0
    %1220 = vmatprep.subr.mxu0 0.0
    %1221 = vmatpush1.msra.mxu0 0.0
    %1222 = vmatprep.subr.mxu0 0.0
    %1223 = vmatpush1.msra.mxu0 0.0
    %1224 = vmatprep.subr.mxu0 0.0
    %1225 = vmatpush1.msra.mxu0 0.0
    %1226 = vmatprep.subr.mxu0 0.0
    %1227 = vmatpush1.msra.mxu0 0.0
    %1228 = vmatprep.subr.mxu0 0.0
    %1229 = vmatpush1.msra.mxu0 0.0
    %1230 = vmatprep.subr.mxu0 0.0
    %1231 = vmatpush1.msra.mxu0 0.0
    %1232 = vmatprep.subr.mxu0 0.0
    %1233 = vmatpush1.msra.mxu0 0.0
    %1234 = vmatprep.subr.mxu0 0.0
    %1235 = vmatpush1.msra.mxu0 0.0
    %1236 = vmatprep.subr.mxu0 0.0
    %1237 = vmatpush1.msra.mxu0 0.0
    %1238 = vmatprep.subr.mxu0 0.0
    %1239 = vmatpush1.msra.mxu0 0.0
    %1240 = vmatprep.subr.mxu0 0.0
    %1241 = vmatpush1.msra.mxu0 0.0
    %1242 = vmatprep.subr.mxu0 0.0
    %1243 = vmatpush1.msra.mxu0 0.0
    %1244 = vmatprep.subr.mxu0 0.0
    %1245 = vmatpush1.msra.mxu0 0.0
    %1246 = vmatprep.mubr.f32.mxu0 0.0
    %v1247 = vand.u32 %v266, 4294901760
    %v1248 = vsub.f32 %v266, %v1247
    %v1249 = vand.u32 %v1248, 4294901760
    %1250 = vmatmul.mubr.f32.gmra.mrb[0].mxu0 %v1249
    %v1251 = vpop.f32.mrb[0].mxu0
    %v1252 = vadd.f32 %v1003, %v1251
    %v1253 = vpop.f32.mrb[0].mxu0
    %1254 = vmatprep.mubr.f32.mxu0 0.0
    %v1255 = vand.u32 %v269, 4294901760
    %v1256 = vsub.f32 %v269, %v1255
    %v1257 = vand.u32 %v1256, 4294901760
    %1258 = vmatmul.mubr.f32.gmra.mrb[0].mxu0 %v1257
    %v1259 = vpop.f32.mrb[0].mxu0
    %v1260 = vadd.f32 %v1010, %v1259
    %v1261 = vpop.f32.mrb[0].mxu0
    %1262 = vmatprep.mubr.f32.mxu0 0.0
    %v1263 = vand.u32 %v272, 4294901760
    %v1264 = vsub.f32 %v272, %v1263
    %v1265 = vand.u32 %v1264, 4294901760
    %1266 = vmatmul.mubr.f32.gmra.mrb[0].mxu0 %v1265
    %v1267 = vpop.f32.mrb[0].mxu0
    %v1268 = vadd.f32 %v1017, %v1267
    %v1269 = vpop.f32.mrb[0].mxu0
    %1270 = vmatprep.mubr.f32.mxu0 0.0
    %v1271 = vand.u32 %v275, 4294901760
    %v1272 = vsub.f32 %v275, %v1271
    %v1273 = vand.u32 %v1272, 4294901760
    %1274 = vmatmul.mubr.f32.gmra.mrb[0].mxu0 %v1273
    %v1275 = vpop.f32.mrb[0].mxu0
    %v1276 = vadd.f32 %v1024, %v1275
    %v1277 = vpop.f32.mrb[0].mxu0
    %1278 = vmatprep.mubr.f32.mxu0 0.0
    %v1279 = vand.u32 %v278, 4294901760
    %v1280 = vsub.f32 %v278, %v1279
    %v1281 = vand.u32 %v1280, 4294901760
    %1282 = vmatmul.mubr.f32.gmra.mrb[0].mxu0 %v1281
    %v1283 = vpop.f32.mrb[0].mxu0
    %v1284 = vadd.f32 %v1031, %v1283
    %v1285 = vpop.f32.mrb[0].mxu0
    %1286 = vmatprep.mubr.f32.mxu0 0.0
    %v1287 = vand.u32 %v281, 4294901760
    %v1288 = vsub.f32 %v281, %v1287
    %v1289 = vand.u32 %v1288, 4294901760
    %1290 = vmatmul.mubr.f32.gmra.mrb[0].mxu0 %v1289
    %v1291 = vpop.f32.mrb[0].mxu0
    %v1292 = vadd.f32 %v1038, %v1291
    %v1293 = vpop.f32.mrb[0].mxu0
    %1294 = vmatprep.mubr.f32.mxu0 0.0
    %v1295 = vand.u32 %v284, 4294901760
    %v1296 = vsub.f32 %v284, %v1295
    %v1297 = vand.u32 %v1296, 4294901760
    %1298 = vmatmul.mubr.f32.gmra.mrb[0].mxu0 %v1297
    %v1299 = vpop.f32.mrb[0].mxu0
    %v1300 = vadd.f32 %v1045, %v1299
    %v1301 = vpop.f32.mrb[0].mxu0
    %1302 = vmatprep.mubr.f32.mxu0 0.0
    %v1303 = vand.u32 %v287, 4294901760
    %v1304 = vsub.f32 %v287, %v1303
    %v1305 = vand.u32 %v1304, 4294901760
    %1306 = vmatmul.mubr.f32.gmra.mrb[0].mxu0 %v1305
    %v1307 = vpop.f32.mrb[0].mxu0
    %v1308 = vadd.f32 %v1052, %v1307
    %v1309 = vpop.f32.mrb[0].mxu0
    %1310 = vmatprep.mubr.f32.mxu0 0.0
    %v1311 = vand.u32 %v290, 4294901760
    %v1312 = vsub.f32 %v290, %v1311
    %v1313 = vand.u32 %v1312, 4294901760
    %1314 = vmatmul.mubr.f32.gmra.mrb[0].mxu0 %v1313
    %v1315 = vpop.f32.mrb[0].mxu0
    %v1316 = vadd.f32 %v1059, %v1315
    %v1317 = vpop.f32.mrb[0].mxu0
    %1318 = vmatprep.mubr.f32.mxu0 0.0
    %v1319 = vand.u32 %v293, 4294901760
    %v1320 = vsub.f32 %v293, %v1319
    %v1321 = vand.u32 %v1320, 4294901760
    %1322 = vmatmul.mubr.f32.gmra.mrb[0].mxu0 %v1321
    %v1323 = vpop.f32.mrb[0].mxu0
    %v1324 = vadd.f32 %v1066, %v1323
    %v1325 = vpop.f32.mrb[0].mxu0
    %1326 = vmatprep.mubr.f32.mxu0 0.0
    %v1327 = vand.u32 %v296, 4294901760
    %v1328 = vsub.f32 %v296, %v1327
    %v1329 = vand.u32 %v1328, 4294901760
    %1330 = vmatmul.mubr.f32.gmra.mrb[0].mxu0 %v1329
    %v1331 = vpop.f32.mrb[0].mxu0
    %v1332 = vadd.f32 %v1073, %v1331
    %v1333 = vpop.f32.mrb[0].mxu0
    %1334 = vmatprep.mubr.f32.mxu0 0.0
    %v1335 = vand.u32 %v299, 4294901760
    %v1336 = vsub.f32 %v299, %v1335
    %v1337 = vand.u32 %v1336, 4294901760
    %1338 = vmatmul.mubr.f32.gmra.mrb[0].mxu0 %v1337
    %v1339 = vpop.f32.mrb[0].mxu0
    %v1340 = vadd.f32 %v1080, %v1339
    %v1341 = vpop.f32.mrb[0].mxu0
    %1342 = vmatprep.mubr.f32.mxu0 0.0
    %v1343 = vand.u32 %v302, 4294901760
    %v1344 = vsub.f32 %v302, %v1343
    %v1345 = vand.u32 %v1344, 4294901760
    %1346 = vmatmul.mubr.f32.gmra.mrb[0].mxu0 %v1345
    %v1347 = vpop.f32.mrb[0].mxu0
    %v1348 = vadd.f32 %v1087, %v1347
    %v1349 = vpop.f32.mrb[0].mxu0
    %1350 = vmatprep.mubr.f32.mxu0 0.0
    %v1351 = vand.u32 %v305, 4294901760
    %v1352 = vsub.f32 %v305, %v1351
    %v1353 = vand.u32 %v1352, 4294901760
    %1354 = vmatmul.mubr.f32.gmra.mrb[0].mxu0 %v1353
    %v1355 = vpop.f32.mrb[0].mxu0
    %v1356 = vadd.f32 %v1094, %v1355
    %v1357 = vpop.f32.mrb[0].mxu0
    %1358 = vmatprep.mubr.f32.mxu0 0.0
    %v1359 = vand.u32 %v308, 4294901760
    %v1360 = vsub.f32 %v308, %v1359
    %v1361 = vand.u32 %v1360, 4294901760
    %1362 = vmatmul.mubr.f32.gmra.mrb[0].mxu0 %v1361
    %v1363 = vpop.f32.mrb[0].mxu0
    %v1364 = vadd.f32 %v1101, %v1363
    %v1365 = vpop.f32.mrb[0].mxu0
    %1366 = vmatprep.mubr.f32.mxu0 0.0
    %v1367 = vand.u32 %v311, 4294901760
    %v1368 = vsub.f32 %v311, %v1367
    %v1369 = vand.u32 %v1368, 4294901760
    %1370 = vmatmul.mubr.f32.gmra.mrb[0].mxu0 %v1369
    %v1371 = vpop.f32.mrb[0].mxu0
    %v1372 = vadd.f32 %v1108, %v1371
    %v1373 = vpop.f32.mrb[0].mxu0
    %1374 = vmatprep.mubr.f32.mxu0 0.0
    %v1375 = vand.u32 %v314, 4294901760
    %v1376 = vsub.f32 %v314, %v1375
    %v1377 = vand.u32 %v1376, 4294901760
    %1378 = vmatmul.mubr.f32.gmra.mrb[0].mxu0 %v1377
    %v1379 = vpop.f32.mrb[0].mxu0
    %v1380 = vadd.f32 %v1115, %v1379
    %v1381 = vpop.f32.mrb[0].mxu0
    %1382 = vmatprep.mubr.f32.mxu0 0.0
    %v1383 = vand.u32 %v317, 4294901760
    %v1384 = vsub.f32 %v317, %v1383
    %v1385 = vand.u32 %v1384, 4294901760
    %1386 = vmatmul.mubr.f32.gmra.mrb[0].mxu0 %v1385
    %v1387 = vpop.f32.mrb[0].mxu0
    %v1388 = vadd.f32 %v1122, %v1387
    %v1389 = vpop.f32.mrb[0].mxu0
    %1390 = vmatprep.mubr.f32.mxu0 0.0
    %v1391 = vand.u32 %v320, 4294901760
    %v1392 = vsub.f32 %v320, %v1391
    %v1393 = vand.u32 %v1392, 4294901760
    %1394 = vmatmul.mubr.f32.gmra.mrb[0].mxu0 %v1393
    %v1395 = vpop.f32.mrb[0].mxu0
    %v1396 = vadd.f32 %v1129, %v1395
    %v1397 = vpop.f32.mrb[0].mxu0
    %1398 = vmatprep.mubr.f32.mxu0 0.0
    %v1399 = vand.u32 %v323, 4294901760
    %v1400 = vsub.f32 %v323, %v1399
    %v1401 = vand.u32 %v1400, 4294901760
    %1402 = vmatmul.mubr.f32.gmra.mrb[0].mxu0 %v1401
    %v1403 = vpop.f32.mrb[0].mxu0
    %v1404 = vadd.f32 %v1136, %v1403
    %v1405 = vpop.f32.mrb[0].mxu0
    %1406 = vmatprep.mubr.f32.mxu0 0.0
    %v1407 = vand.u32 %v326, 4294901760
    %v1408 = vsub.f32 %v326, %v1407
    %v1409 = vand.u32 %v1408, 4294901760
    %1410 = vmatmul.mubr.f32.gmra.mrb[0].mxu0 %v1409
    %v1411 = vpop.f32.mrb[0].mxu0
    %v1412 = vadd.f32 %v1143, %v1411
    %v1413 = vpop.f32.mrb[0].mxu0
    %1414 = vmatprep.mubr.f32.mxu0 0.0
    %v1415 = vand.u32 %v329, 4294901760
    %v1416 = vsub.f32 %v329, %v1415
    %v1417 = vand.u32 %v1416, 4294901760
    %1418 = vmatmul.mubr.f32.gmra.mrb[0].mxu0 %v1417
    %v1419 = vpop.f32.mrb[0].mxu0
    %v1420 = vadd.f32 %v1150, %v1419
    %v1421 = vpop.f32.mrb[0].mxu0
    %1422 = vmatprep.mubr.f32.mxu0 0.0
    %v1423 = vand.u32 %v332, 4294901760
    %v1424 = vsub.f32 %v332, %v1423
    %v1425 = vand.u32 %v1424, 4294901760
    %1426 = vmatmul.mubr.f32.gmra.mrb[0].mxu0 %v1425
    %v1427 = vpop.f32.mrb[0].mxu0
    %v1428 = vadd.f32 %v1157, %v1427
    %v1429 = vpop.f32.mrb[0].mxu0
    %1430 = vmatprep.mubr.f32.mxu0 0.0
    %v1431 = vand.u32 %v335, 4294901760
    %v1432 = vsub.f32 %v335, %v1431
    %v1433 = vand.u32 %v1432, 4294901760
    %1434 = vmatmul.mubr.f32.gmra.mrb[0].mxu0 %v1433
    %v1435 = vpop.f32.mrb[0].mxu0
    %v1436 = vadd.f32 %v1164, %v1435
    %v1437 = vpop.f32.mrb[0].mxu0
    %1438 = vmatprep.mubr.f32.mxu0 0.0
    %v1439 = vand.u32 %v338, 4294901760
    %v1440 = vsub.f32 %v338, %v1439
    %v1441 = vand.u32 %v1440, 4294901760
    %1442 = vmatmul.mubr.f32.gmra.mrb[0].mxu0 %v1441
    %v1443 = vpop.f32.mrb[0].mxu0
    %v1444 = vadd.f32 %v1171, %v1443
    %v1445 = vpop.f32.mrb[0].mxu0
    %1446 = vdwg.mxu0
    %1447 = vmatprep.subr.mxu0 0.0
    %v1448 = vand.u32 %v256, 4294901760
    %v1449 = vsub.f32 %v256, %v1448
    %v1450 = vand.u32 %v1449, 4294901760
    %1451 = vmatpush1.msra.mxu0 %v1450
    %1452 = vmatprep.subr.mxu0 0.0
    %v1453 = vand.u32 %v257, 4294901760
    %v1454 = vsub.f32 %v257, %v1453
    %v1455 = vand.u32 %v1454, 4294901760
    %1456 = vmatpush1.msra.mxu0 %v1455
    %1457 = vmatprep.subr.mxu0 0.0
    %v1458 = vand.u32 %v258, 4294901760
    %v1459 = vsub.f32 %v258, %v1458
    %v1460 = vand.u32 %v1459, 4294901760
    %1461 = vmatpush1.msra.mxu0 %v1460
    %1462 = vmatprep.subr.mxu0 0.0
    %v1463 = vand.u32 %v259, 4294901760
    %v1464 = vsub.f32 %v259, %v1463
    %v1465 = vand.u32 %v1464, 4294901760
    %1466 = vmatpush1.msra.mxu0 %v1465
    %1467 = vmatprep.subr.mxu0 0.0
    %v1468 = vand.u32 %v260, 4294901760
    %v1469 = vsub.f32 %v260, %v1468
    %v1470 = vand.u32 %v1469, 4294901760
    %1471 = vmatpush1.msra.mxu0 %v1470
    %1472 = vmatprep.subr.mxu0 0.0
    %v1473 = vand.u32 %v261, 4294901760
    %v1474 = vsub.f32 %v261, %v1473
    %v1475 = vand.u32 %v1474, 4294901760
    %1476 = vmatpush1.msra.mxu0 %v1475
    %1477 = vmatprep.subr.mxu0 0.0
    %v1478 = vand.u32 %v262, 4294901760
    %v1479 = vsub.f32 %v262, %v1478
    %v1480 = vand.u32 %v1479, 4294901760
    %1481 = vmatpush1.msra.mxu0 %v1480
    %1482 = vmatprep.subr.mxu0 0.0
    %v1483 = vand.u32 %v263, 4294901760
    %v1484 = vsub.f32 %v263, %v1483
    %v1485 = vand.u32 %v1484, 4294901760
    %1486 = vmatpush1.msra.mxu0 %v1485
    %1487 = vmatprep.subr.mxu0 0.0
    %1488 = vmatpush1.msra.mxu0 0.0
    %1489 = vmatprep.subr.mxu0 0.0
    %1490 = vmatpush1.msra.mxu0 0.0
    %1491 = vmatprep.subr.mxu0 0.0
    %1492 = vmatpush1.msra.mxu0 0.0
    %1493 = vmatprep.subr.mxu0 0.0
    %1494 = vmatpush1.msra.mxu0 0.0
    %1495 = vmatprep.subr.mxu0 0.0
    %1496 = vmatpush1.msra.mxu0 0.0
    %1497 = vmatprep.subr.mxu0 0.0
    %1498 = vmatpush1.msra.mxu0 0.0
    %1499 = vmatprep.subr.mxu0 0.0
    %1500 = vmatpush1.msra.mxu0 0.0
    %1501 = vmatprep.subr.mxu0 0.0
    %1502 = vmatpush1.msra.mxu0 0.0
    %1503 = vmatprep.subr.mxu0 0.0
    %1504 = vmatpush1.msra.mxu0 0.0
    %1505 = vmatprep.subr.mxu0 0.0
    %1506 = vmatpush1.msra.mxu0 0.0
    %1507 = vmatprep.subr.mxu0 0.0
    %1508 = vmatpush1.msra.mxu0 0.0
    %1509 = vmatprep.subr.mxu0 0.0
    %1510 = vmatpush1.msra.mxu0 0.0
    %1511 = vmatprep.subr.mxu0 0.0
    %1512 = vmatpush1.msra.mxu0 0.0
    %1513 = vmatprep.subr.mxu0 0.0
    %1514 = vmatpush1.msra.mxu0 0.0
    %1515 = vmatprep.subr.mxu0 0.0
    %1516 = vmatpush1.msra.mxu0 0.0
    %1517 = vmatprep.subr.mxu0 0.0
    %1518 = vmatpush1.msra.mxu0 0.0
    %1519 = vmatprep.subr.mxu0 0.0
    %1520 = vmatpush1.msra.mxu0 0.0
    %1521 = vmatprep.subr.mxu0 0.0
    %1522 = vmatpush1.msra.mxu0 0.0
    %1523 = vmatprep.subr.mxu0 0.0
    %1524 = vmatpush1.msra.mxu0 0.0
    %1525 = vmatprep.subr.mxu0 0.0
    %1526 = vmatpush1.msra.mxu0 0.0
    %1527 = vmatprep.subr.mxu0 0.0
    %1528 = vmatpush1.msra.mxu0 0.0
    %1529 = vmatprep.subr.mxu0 0.0
    %1530 = vmatpush1.msra.mxu0 0.0
    %1531 = vmatprep.subr.mxu0 0.0
    %1532 = vmatpush1.msra.mxu0 0.0
    %1533 = vmatprep.subr.mxu0 0.0
    %1534 = vmatpush1.msra.mxu0 0.0
    %1535 = vmatprep.mubr.f32.mxu0 0.0
    %v1536 = vand.u32 %v266, 4294901760
    %1537 = vmatmul.mubr.f32.gmra.mrb[0].mxu0 %v1536
    %v1538 = vpop.f32.mrb[0].mxu0
    %v1539 = vadd.f32 %v1252, %v1538
    %v1540 = vpop.f32.mrb[0].mxu0
    %1541 = vmatprep.mubr.f32.mxu0 0.0
    %v1542 = vand.u32 %v269, 4294901760
    %1543 = vmatmul.mubr.f32.gmra.mrb[0].mxu0 %v1542
    %v1544 = vpop.f32.mrb[0].mxu0
    %v1545 = vadd.f32 %v1260, %v1544
    %v1546 = vpop.f32.mrb[0].mxu0
    %1547 = vmatprep.mubr.f32.mxu0 0.0
    %v1548 = vand.u32 %v272, 4294901760
    %1549 = vmatmul.mubr.f32.gmra.mrb[0].mxu0 %v1548
    %v1550 = vpop.f32.mrb[0].mxu0
    %v1551 = vadd.f32 %v1268, %v1550
    %v1552 = vpop.f32.mrb[0].mxu0
    %1553 = vmatprep.mubr.f32.mxu0 0.0
    %v1554 = vand.u32 %v275, 4294901760
    %1555 = vmatmul.mubr.f32.gmra.mrb[0].mxu0 %v1554
    %v1556 = vpop.f32.mrb[0].mxu0
    %v1557 = vadd.f32 %v1276, %v1556
    %v1558 = vpop.f32.mrb[0].mxu0
    %1559 = vmatprep.mubr.f32.mxu0 0.0
    %v1560 = vand.u32 %v278, 4294901760
    %1561 = vmatmul.mubr.f32.gmra.mrb[0].mxu0 %v1560
    %v1562 = vpop.f32.mrb[0].mxu0
    %v1563 = vadd.f32 %v1284, %v1562
    %v1564 = vpop.f32.mrb[0].mxu0
    %1565 = vmatprep.mubr.f32.mxu0 0.0
    %v1566 = vand.u32 %v281, 4294901760
    %1567 = vmatmul.mubr.f32.gmra.mrb[0].mxu0 %v1566
    %v1568 = vpop.f32.mrb[0].mxu0
    %v1569 = vadd.f32 %v1292, %v1568
    %v1570 = vpop.f32.mrb[0].mxu0
    %1571 = vmatprep.mubr.f32.mxu0 0.0
    %v1572 = vand.u32 %v284, 4294901760
    %1573 = vmatmul.mubr.f32.gmra.mrb[0].mxu0 %v1572
    %v1574 = vpop.f32.mrb[0].mxu0
    %v1575 = vadd.f32 %v1300, %v1574
    %v1576 = vpop.f32.mrb[0].mxu0
    %1577 = vmatprep.mubr.f32.mxu0 0.0
    %v1578 = vand.u32 %v287, 4294901760
    %1579 = vmatmul.mubr.f32.gmra.mrb[0].mxu0 %v1578
    %v1580 = vpop.f32.mrb[0].mxu0
    %v1581 = vadd.f32 %v1308, %v1580
    %v1582 = vpop.f32.mrb[0].mxu0
    %1583 = vmatprep.mubr.f32.mxu0 0.0
    %v1584 = vand.u32 %v290, 4294901760
    %1585 = vmatmul.mubr.f32.gmra.mrb[0].mxu0 %v1584
    %v1586 = vpop.f32.mrb[0].mxu0
    %v1587 = vadd.f32 %v1316, %v1586
    %v1588 = vpop.f32.mrb[0].mxu0
    %1589 = vmatprep.mubr.f32.mxu0 0.0
    %v1590 = vand.u32 %v293, 4294901760
    %1591 = vmatmul.mubr.f32.gmra.mrb[0].mxu0 %v1590
    %v1592 = vpop.f32.mrb[0].mxu0
    %v1593 = vadd.f32 %v1324, %v1592
    %v1594 = vpop.f32.mrb[0].mxu0
    %1595 = vmatprep.mubr.f32.mxu0 0.0
    %v1596 = vand.u32 %v296, 4294901760
    %1597 = vmatmul.mubr.f32.gmra.mrb[0].mxu0 %v1596
    %v1598 = vpop.f32.mrb[0].mxu0
    %v1599 = vadd.f32 %v1332, %v1598
    %v1600 = vpop.f32.mrb[0].mxu0
    %1601 = vmatprep.mubr.f32.mxu0 0.0
    %v1602 = vand.u32 %v299, 4294901760
    %1603 = vmatmul.mubr.f32.gmra.mrb[0].mxu0 %v1602
    %v1604 = vpop.f32.mrb[0].mxu0
    %v1605 = vadd.f32 %v1340, %v1604
    %v1606 = vpop.f32.mrb[0].mxu0
    %1607 = vmatprep.mubr.f32.mxu0 0.0
    %v1608 = vand.u32 %v302, 4294901760
    %1609 = vmatmul.mubr.f32.gmra.mrb[0].mxu0 %v1608
    %v1610 = vpop.f32.mrb[0].mxu0
    %v1611 = vadd.f32 %v1348, %v1610
    %v1612 = vpop.f32.mrb[0].mxu0
    %1613 = vmatprep.mubr.f32.mxu0 0.0
    %v1614 = vand.u32 %v305, 4294901760
    %1615 = vmatmul.mubr.f32.gmra.mrb[0].mxu0 %v1614
    %v1616 = vpop.f32.mrb[0].mxu0
    %v1617 = vadd.f32 %v1356, %v1616
    %v1618 = vpop.f32.mrb[0].mxu0
    %1619 = vmatprep.mubr.f32.mxu0 0.0
    %v1620 = vand.u32 %v308, 4294901760
    %1621 = vmatmul.mubr.f32.gmra.mrb[0].mxu0 %v1620
    %v1622 = vpop.f32.mrb[0].mxu0
    %v1623 = vadd.f32 %v1364, %v1622
    %v1624 = vpop.f32.mrb[0].mxu0
    %1625 = vmatprep.mubr.f32.mxu0 0.0
    %v1626 = vand.u32 %v311, 4294901760
    %1627 = vmatmul.mubr.f32.gmra.mrb[0].mxu0 %v1626
    %v1628 = vpop.f32.mrb[0].mxu0
    %v1629 = vadd.f32 %v1372, %v1628
    %v1630 = vpop.f32.mrb[0].mxu0
    %1631 = vmatprep.mubr.f32.mxu0 0.0
    %v1632 = vand.u32 %v314, 4294901760
    %1633 = vmatmul.mubr.f32.gmra.mrb[0].mxu0 %v1632
    %v1634 = vpop.f32.mrb[0].mxu0
    %v1635 = vadd.f32 %v1380, %v1634
    %v1636 = vpop.f32.mrb[0].mxu0
    %1637 = vmatprep.mubr.f32.mxu0 0.0
    %v1638 = vand.u32 %v317, 4294901760
    %1639 = vmatmul.mubr.f32.gmra.mrb[0].mxu0 %v1638
    %v1640 = vpop.f32.mrb[0].mxu0
    %v1641 = vadd.f32 %v1388, %v1640
    %v1642 = vpop.f32.mrb[0].mxu0
    %1643 = vmatprep.mubr.f32.mxu0 0.0
    %v1644 = vand.u32 %v320, 4294901760
    %1645 = vmatmul.mubr.f32.gmra.mrb[0].mxu0 %v1644
    %v1646 = vpop.f32.mrb[0].mxu0
    %v1647 = vadd.f32 %v1396, %v1646
    %v1648 = vpop.f32.mrb[0].mxu0
    %1649 = vmatprep.mubr.f32.mxu0 0.0
    %v1650 = vand.u32 %v323, 4294901760
    %1651 = vmatmul.mubr.f32.gmra.mrb[0].mxu0 %v1650
    %v1652 = vpop.f32.mrb[0].mxu0
    %v1653 = vadd.f32 %v1404, %v1652
    %v1654 = vpop.f32.mrb[0].mxu0
    %1655 = vmatprep.mubr.f32.mxu0 0.0
    %v1656 = vand.u32 %v326, 4294901760
    %1657 = vmatmul.mubr.f32.gmra.mrb[0].mxu0 %v1656
    %v1658 = vpop.f32.mrb[0].mxu0
    %v1659 = vadd.f32 %v1412, %v1658
    %v1660 = vpop.f32.mrb[0].mxu0
    %1661 = vmatprep.mubr.f32.mxu0 0.0
    %v1662 = vand.u32 %v329, 4294901760
    %1663 = vmatmul.mubr.f32.gmra.mrb[0].mxu0 %v1662
    %v1664 = vpop.f32.mrb[0].mxu0
    %v1665 = vadd.f32 %v1420, %v1664
    %v1666 = vpop.f32.mrb[0].mxu0
    %1667 = vmatprep.mubr.f32.mxu0 0.0
    %v1668 = vand.u32 %v332, 4294901760
    %1669 = vmatmul.mubr.f32.gmra.mrb[0].mxu0 %v1668
    %v1670 = vpop.f32.mrb[0].mxu0
    %v1671 = vadd.f32 %v1428, %v1670
    %v1672 = vpop.f32.mrb[0].mxu0
    %1673 = vmatprep.mubr.f32.mxu0 0.0
    %v1674 = vand.u32 %v335, 4294901760
    %1675 = vmatmul.mubr.f32.gmra.mrb[0].mxu0 %v1674
    %v1676 = vpop.f32.mrb[0].mxu0
    %v1677 = vadd.f32 %v1436, %v1676
    %v1678 = vpop.f32.mrb[0].mxu0
    %1679 = vmatprep.mubr.f32.mxu0 0.0
    %v1680 = vand.u32 %v338, 4294901760
    %1681 = vmatmul.mubr.f32.gmra.mrb[0].mxu0 %v1680
    %v1682 = vpop.f32.mrb[0].mxu0
    %v1683 = vadd.f32 %v1444, %v1682
    %v1684 = vpop.f32.mrb[0].mxu0
    %1685 = vdwg.mxu0
    %1686 = vmatprep.subr.mxu0 0.0
    %v1687 = vand.u32 %v256, 4294901760
    %1688 = vmatpush1.msra.mxu0 %v1687
    %1689 = vmatprep.subr.mxu0 0.0
    %v1690 = vand.u32 %v257, 4294901760
    %1691 = vmatpush1.msra.mxu0 %v1690
    %1692 = vmatprep.subr.mxu0 0.0
    %v1693 = vand.u32 %v258, 4294901760
    %1694 = vmatpush1.msra.mxu0 %v1693
    %1695 = vmatprep.subr.mxu0 0.0
    %v1696 = vand.u32 %v259, 4294901760
    %1697 = vmatpush1.msra.mxu0 %v1696
    %1698 = vmatprep.subr.mxu0 0.0
    %v1699 = vand.u32 %v260, 4294901760
    %1700 = vmatpush1.msra.mxu0 %v1699
    %1701 = vmatprep.subr.mxu0 0.0
    %v1702 = vand.u32 %v261, 4294901760
    %1703 = vmatpush1.msra.mxu0 %v1702
    %1704 = vmatprep.subr.mxu0 0.0
    %v1705 = vand.u32 %v262, 4294901760
    %1706 = vmatpush1.msra.mxu0 %v1705
    %1707 = vmatprep.subr.mxu0 0.0
    %v1708 = vand.u32 %v263, 4294901760
    %1709 = vmatpush1.msra.mxu0 %v1708
    %1710 = vmatprep.subr.mxu0 0.0
    %1711 = vmatpush1.msra.mxu0 0.0
    %1712 = vmatprep.subr.mxu0 0.0
    %1713 = vmatpush1.msra.mxu0 0.0
    %1714 = vmatprep.subr.mxu0 0.0
    %1715 = vmatpush1.msra.mxu0 0.0
    %1716 = vmatprep.subr.mxu0 0.0
    %1717 = vmatpush1.msra.mxu0 0.0
    %1718 = vmatprep.subr.mxu0 0.0
    %1719 = vmatpush1.msra.mxu0 0.0
    %1720 = vmatprep.subr.mxu0 0.0
    %1721 = vmatpush1.msra.mxu0 0.0
    %1722 = vmatprep.subr.mxu0 0.0
    %1723 = vmatpush1.msra.mxu0 0.0
    %1724 = vmatprep.subr.mxu0 0.0
    %1725 = vmatpush1.msra.mxu0 0.0
    %1726 = vmatprep.subr.mxu0 0.0
    %1727 = vmatpush1.msra.mxu0 0.0
    %1728 = vmatprep.subr.mxu0 0.0
    %1729 = vmatpush1.msra.mxu0 0.0
    %1730 = vmatprep.subr.mxu0 0.0
    %1731 = vmatpush1.msra.mxu0 0.0
    %1732 = vmatprep.subr.mxu0 0.0
    %1733 = vmatpush1.msra.mxu0 0.0
    %1734 = vmatprep.subr.mxu0 0.0
    %1735 = vmatpush1.msra.mxu0 0.0
    %1736 = vmatprep.subr.mxu0 0.0
    %1737 = vmatpush1.msra.mxu0 0.0
    %1738 = vmatprep.subr.mxu0 0.0
    %1739 = vmatpush1.msra.mxu0 0.0
    %1740 = vmatprep.subr.mxu0 0.0
    %1741 = vmatpush1.msra.mxu0 0.0
    %1742 = vmatprep.subr.mxu0 0.0
    %1743 = vmatpush1.msra.mxu0 0.0
    %1744 = vmatprep.subr.mxu0 0.0
    %1745 = vmatpush1.msra.mxu0 0.0
    %1746 = vmatprep.subr.mxu0 0.0
    %1747 = vmatpush1.msra.mxu0 0.0
    %1748 = vmatprep.subr.mxu0 0.0
    %1749 = vmatpush1.msra.mxu0 0.0
    %1750 = vmatprep.subr.mxu0 0.0
    %1751 = vmatpush1.msra.mxu0 0.0
    %1752 = vmatprep.subr.mxu0 0.0
    %1753 = vmatpush1.msra.mxu0 0.0
    %1754 = vmatprep.subr.mxu0 0.0
    %1755 = vmatpush1.msra.mxu0 0.0
    %1756 = vmatprep.subr.mxu0 0.0
    %1757 = vmatpush1.msra.mxu0 0.0
    %1758 = vmatprep.mubr.f32.mxu0 0.0
    %v1759 = vand.u32 %v266, 4294901760
    %1760 = vmatmul.mubr.f32.gmra.mrb[0].mxu0 %v1759
    %v1761 = vpop.f32.mrb[0].mxu0
    %v1762 = vadd.f32 %v1539, %v1761
    %v1763 = vpop.f32.mrb[0].mxu0
    %1764 = vmatprep.mubr.f32.mxu0 0.0
    %v1765 = vand.u32 %v269, 4294901760
    %1766 = vmatmul.mubr.f32.gmra.mrb[0].mxu0 %v1765
    %v1767 = vpop.f32.mrb[0].mxu0
    %v1768 = vadd.f32 %v1545, %v1767
    %v1769 = vpop.f32.mrb[0].mxu0
    %1770 = vmatprep.mubr.f32.mxu0 0.0
    %v1771 = vand.u32 %v272, 4294901760
    %1772 = vmatmul.mubr.f32.gmra.mrb[0].mxu0 %v1771
    %v1773 = vpop.f32.mrb[0].mxu0
    %v1774 = vadd.f32 %v1551, %v1773
    %v1775 = vpop.f32.mrb[0].mxu0
    %1776 = vmatprep.mubr.f32.mxu0 0.0
    %v1777 = vand.u32 %v275, 4294901760
    %1778 = vmatmul.mubr.f32.gmra.mrb[0].mxu0 %v1777
    %v1779 = vpop.f32.mrb[0].mxu0
    %v1780 = vadd.f32 %v1557, %v1779
    %v1781 = vpop.f32.mrb[0].mxu0
    %1782 = vmatprep.mubr.f32.mxu0 0.0
    %v1783 = vand.u32 %v278, 4294901760
    %1784 = vmatmul.mubr.f32.gmra.mrb[0].mxu0 %v1783
    %v1785 = vpop.f32.mrb[0].mxu0
    %v1786 = vadd.f32 %v1563, %v1785
    %v1787 = vpop.f32.mrb[0].mxu0
    %1788 = vmatprep.mubr.f32.mxu0 0.0
    %v1789 = vand.u32 %v281, 4294901760
    %1790 = vmatmul.mubr.f32.gmra.mrb[0].mxu0 %v1789
    %v1791 = vpop.f32.mrb[0].mxu0
    %v1792 = vadd.f32 %v1569, %v1791
    %v1793 = vpop.f32.mrb[0].mxu0
    %1794 = vmatprep.mubr.f32.mxu0 0.0
    %v1795 = vand.u32 %v284, 4294901760
    %1796 = vmatmul.mubr.f32.gmra.mrb[0].mxu0 %v1795
    %v1797 = vpop.f32.mrb[0].mxu0
    %v1798 = vadd.f32 %v1575, %v1797
    %v1799 = vpop.f32.mrb[0].mxu0
    %1800 = vmatprep.mubr.f32.mxu0 0.0
    %v1801 = vand.u32 %v287, 4294901760
    %1802 = vmatmul.mubr.f32.gmra.mrb[0].mxu0 %v1801
    %v1803 = vpop.f32.mrb[0].mxu0
    %v1804 = vadd.f32 %v1581, %v1803
    %v1805 = vpop.f32.mrb[0].mxu0
    %1806 = vmatprep.mubr.f32.mxu0 0.0
    %v1807 = vand.u32 %v290, 4294901760
    %1808 = vmatmul.mubr.f32.gmra.mrb[0].mxu0 %v1807
    %v1809 = vpop.f32.mrb[0].mxu0
    %v1810 = vadd.f32 %v1587, %v1809
    %v1811 = vpop.f32.mrb[0].mxu0
    %1812 = vmatprep.mubr.f32.mxu0 0.0
    %v1813 = vand.u32 %v293, 4294901760
    %1814 = vmatmul.mubr.f32.gmra.mrb[0].mxu0 %v1813
    %v1815 = vpop.f32.mrb[0].mxu0
    %v1816 = vadd.f32 %v1593, %v1815
    %v1817 = vpop.f32.mrb[0].mxu0
    %1818 = vmatprep.mubr.f32.mxu0 0.0
    %v1819 = vand.u32 %v296, 4294901760
    %1820 = vmatmul.mubr.f32.gmra.mrb[0].mxu0 %v1819
    %v1821 = vpop.f32.mrb[0].mxu0
    %v1822 = vadd.f32 %v1599, %v1821
    %v1823 = vpop.f32.mrb[0].mxu0
    %1824 = vmatprep.mubr.f32.mxu0 0.0
    %v1825 = vand.u32 %v299, 4294901760
    %1826 = vmatmul.mubr.f32.gmra.mrb[0].mxu0 %v1825
    %v1827 = vpop.f32.mrb[0].mxu0
    %v1828 = vadd.f32 %v1605, %v1827
    %v1829 = vpop.f32.mrb[0].mxu0
    %1830 = vmatprep.mubr.f32.mxu0 0.0
    %v1831 = vand.u32 %v302, 4294901760
    %1832 = vmatmul.mubr.f32.gmra.mrb[0].mxu0 %v1831
    %v1833 = vpop.f32.mrb[0].mxu0
    %v1834 = vadd.f32 %v1611, %v1833
    %v1835 = vpop.f32.mrb[0].mxu0
    %1836 = vmatprep.mubr.f32.mxu0 0.0
    %v1837 = vand.u32 %v305, 4294901760
    %1838 = vmatmul.mubr.f32.gmra.mrb[0].mxu0 %v1837
    %v1839 = vpop.f32.mrb[0].mxu0
    %v1840 = vadd.f32 %v1617, %v1839
    %v1841 = vpop.f32.mrb[0].mxu0
    %1842 = vmatprep.mubr.f32.mxu0 0.0
    %v1843 = vand.u32 %v308, 4294901760
    %1844 = vmatmul.mubr.f32.gmra.mrb[0].mxu0 %v1843
    %v1845 = vpop.f32.mrb[0].mxu0
    %v1846 = vadd.f32 %v1623, %v1845
    %v1847 = vpop.f32.mrb[0].mxu0
    %1848 = vmatprep.mubr.f32.mxu0 0.0
    %v1849 = vand.u32 %v311, 4294901760
    %1850 = vmatmul.mubr.f32.gmra.mrb[0].mxu0 %v1849
    %v1851 = vpop.f32.mrb[0].mxu0
    %v1852 = vadd.f32 %v1629, %v1851
    %v1853 = vpop.f32.mrb[0].mxu0
    %1854 = vmatprep.mubr.f32.mxu0 0.0
    %v1855 = vand.u32 %v314, 4294901760
    %1856 = vmatmul.mubr.f32.gmra.mrb[0].mxu0 %v1855
    %v1857 = vpop.f32.mrb[0].mxu0
    %v1858 = vadd.f32 %v1635, %v1857
    %v1859 = vpop.f32.mrb[0].mxu0
    %1860 = vmatprep.mubr.f32.mxu0 0.0
    %v1861 = vand.u32 %v317, 4294901760
    %1862 = vmatmul.mubr.f32.gmra.mrb[0].mxu0 %v1861
    %v1863 = vpop.f32.mrb[0].mxu0
    %v1864 = vadd.f32 %v1641, %v1863
    %v1865 = vpop.f32.mrb[0].mxu0
    %1866 = vmatprep.mubr.f32.mxu0 0.0
    %v1867 = vand.u32 %v320, 4294901760
    %1868 = vmatmul.mubr.f32.gmra.mrb[0].mxu0 %v1867
    %v1869 = vpop.f32.mrb[0].mxu0
    %v1870 = vadd.f32 %v1647, %v1869
    %v1871 = vpop.f32.mrb[0].mxu0
    %1872 = vmatprep.mubr.f32.mxu0 0.0
    %v1873 = vand.u32 %v323, 4294901760
    %1874 = vmatmul.mubr.f32.gmra.mrb[0].mxu0 %v1873
    %v1875 = vpop.f32.mrb[0].mxu0
    %v1876 = vadd.f32 %v1653, %v1875
    %v1877 = vpop.f32.mrb[0].mxu0
    %1878 = vmatprep.mubr.f32.mxu0 0.0
    %v1879 = vand.u32 %v326, 4294901760
    %1880 = vmatmul.mubr.f32.gmra.mrb[0].mxu0 %v1879
    %v1881 = vpop.f32.mrb[0].mxu0
    %v1882 = vadd.f32 %v1659, %v1881
    %v1883 = vpop.f32.mrb[0].mxu0
    %1884 = vmatprep.mubr.f32.mxu0 0.0
    %v1885 = vand.u32 %v329, 4294901760
    %1886 = vmatmul.mubr.f32.gmra.mrb[0].mxu0 %v1885
    %v1887 = vpop.f32.mrb[0].mxu0
    %v1888 = vadd.f32 %v1665, %v1887
    %v1889 = vpop.f32.mrb[0].mxu0
    %1890 = vmatprep.mubr.f32.mxu0 0.0
    %v1891 = vand.u32 %v332, 4294901760
    %1892 = vmatmul.mubr.f32.gmra.mrb[0].mxu0 %v1891
    %v1893 = vpop.f32.mrb[0].mxu0
    %v1894 = vadd.f32 %v1671, %v1893
    %v1895 = vpop.f32.mrb[0].mxu0
    %1896 = vmatprep.mubr.f32.mxu0 0.0
    %v1897 = vand.u32 %v335, 4294901760
    %1898 = vmatmul.mubr.f32.gmra.mrb[0].mxu0 %v1897
    %v1899 = vpop.f32.mrb[0].mxu0
    %v1900 = vadd.f32 %v1677, %v1899
    %v1901 = vpop.f32.mrb[0].mxu0
    %1902 = vmatprep.mubr.f32.mxu0 0.0
    %v1903 = vand.u32 %v338, 4294901760
    %1904 = vmatmul.mubr.f32.gmra.mrb[0].mxu0 %v1903
    %v1905 = vpop.f32.mrb[0].mxu0
    %v1906 = vadd.f32 %v1683, %v1905
    %v1907 = vpop.f32.mrb[0].mxu0
    %1908 = vdwg.mxu0
    %v1909 = vmul.f32 %v1762, %v46
    %v1910 = vmul.f32 %v1768, %v47
    %v1911 = vmul.f32 %v1774, %v48
    %v1912 = vmul.f32 %v1780, %v49
    %v1913 = vmul.f32 %v1786, %v50
    %v1914 = vmul.f32 %v1792, %v51
    %v1915 = vmul.f32 %v1798, %v52
    %v1916 = vmul.f32 %v1804, %v53
    %v1917 = vmul.f32 %v1810, %v54
    %v1918 = vmul.f32 %v1816, %v55
    %v1919 = vmul.f32 %v1822, %v56
    %v1920 = vmul.f32 %v1828, %v57
    %v1921 = vmul.f32 %v1834, %v58
    %v1922 = vmul.f32 %v1840, %v59
    %v1923 = vmul.f32 %v1846, %v60
    %v1924 = vmul.f32 %v1852, %v61
    %v1925 = vmul.f32 %v1858, %v62
    %v1926 = vmul.f32 %v1864, %v63
    %v1927 = vmul.f32 %v1870, %v64
    %v1928 = vmul.f32 %v1876, %v65
    %v1929 = vmul.f32 %v1882, %v66
    %v1930 = vmul.f32 %v1888, %v67
    %v1931 = vmul.f32 %v1894, %v68
    %v1932 = vmul.f32 %v1900, %v69
    %v1933 = vmul.f32 %v1906, %v70
    %v1934 = vmul.f32 %v1909, 0.5
    %v1935 = vmul.f32 %v1910, 0.5
    %v1936 = vmul.f32 %v1911, 0.5
    %v1937 = vmul.f32 %v1912, 0.5
    %v1938 = vmul.f32 %v1913, 0.5
    %v1939 = vmul.f32 %v1914, 0.5
    %v1940 = vmul.f32 %v1915, 0.5
    %v1941 = vmul.f32 %v1916, 0.5
    %v1942 = vmul.f32 %v1917, 0.5
    %v1943 = vmul.f32 %v1918, 0.5
    %v1944 = vmul.f32 %v1919, 0.5
    %v1945 = vmul.f32 %v1920, 0.5
    %v1946 = vmul.f32 %v1921, 0.5
    %v1947 = vmul.f32 %v1922, 0.5
    %v1948 = vmul.f32 %v1923, 0.5
    %v1949 = vmul.f32 %v1924, 0.5
    %v1950 = vmul.f32 %v1925, 0.5
    %v1951 = vmul.f32 %v1926, 0.5
    %v1952 = vmul.f32 %v1927, 0.5
    %v1953 = vmul.f32 %v1928, 0.5
    %v1954 = vmul.f32 %v1929, 0.5
    %v1955 = vmul.f32 %v1930, 0.5
    %v1956 = vmul.f32 %v1931, 0.5
    %v1957 = vmul.f32 %v1932, 0.5
    %v1958 = vmul.f32 %v1933, 0.5
    %1959 = vmatprep.subr.mxu0 0.0
    %v1960 = vand.u32 %v248, 4294901760
    %1961 = vmatpush1.msra.mxu0 %v1960
    %1962 = vmatprep.subr.mxu0 0.0
    %v1963 = vand.u32 %v249, 4294901760
    %1964 = vmatpush1.msra.mxu0 %v1963
    %1965 = vmatprep.subr.mxu0 0.0
    %v1966 = vand.u32 %v250, 4294901760
    %1967 = vmatpush1.msra.mxu0 %v1966
    %1968 = vmatprep.subr.mxu0 0.0
    %v1969 = vand.u32 %v251, 4294901760
    %1970 = vmatpush1.msra.mxu0 %v1969
    %1971 = vmatprep.subr.mxu0 0.0
    %v1972 = vand.u32 %v252, 4294901760
    %1973 = vmatpush1.msra.mxu0 %v1972
    %1974 = vmatprep.subr.mxu0 0.0
    %v1975 = vand.u32 %v253, 4294901760
    %1976 = vmatpush1.msra.mxu0 %v1975
    %1977 = vmatprep.subr.mxu0 0.0
    %v1978 = vand.u32 %v254, 4294901760
    %1979 = vmatpush1.msra.mxu0 %v1978
    %1980 = vmatprep.subr.mxu0 0.0
    %v1981 = vand.u32 %v255, 4294901760
    %1982 = vmatpush1.msra.mxu0 %v1981
    %1983 = vmatprep.subr.mxu0 0.0
    %1984 = vmatpush1.msra.mxu0 0.0
    %1985 = vmatprep.subr.mxu0 0.0
    %1986 = vmatpush1.msra.mxu0 0.0
    %1987 = vmatprep.subr.mxu0 0.0
    %1988 = vmatpush1.msra.mxu0 0.0
    %1989 = vmatprep.subr.mxu0 0.0
    %1990 = vmatpush1.msra.mxu0 0.0
    %1991 = vmatprep.subr.mxu0 0.0
    %1992 = vmatpush1.msra.mxu0 0.0
    %1993 = vmatprep.subr.mxu0 0.0
    %1994 = vmatpush1.msra.mxu0 0.0
    %1995 = vmatprep.subr.mxu0 0.0
    %1996 = vmatpush1.msra.mxu0 0.0
    %1997 = vmatprep.subr.mxu0 0.0
    %1998 = vmatpush1.msra.mxu0 0.0
    %1999 = vmatprep.subr.mxu0 0.0
    %2000 = vmatpush1.msra.mxu0 0.0
    %2001 = vmatprep.subr.mxu0 0.0
    %2002 = vmatpush1.msra.mxu0 0.0
    %2003 = vmatprep.subr.mxu0 0.0
    %2004 = vmatpush1.msra.mxu0 0.0
    %2005 = vmatprep.subr.mxu0 0.0
    %2006 = vmatpush1.msra.mxu0 0.0
    %2007 = vmatprep.subr.mxu0 0.0
    %2008 = vmatpush1.msra.mxu0 0.0
    %2009 = vmatprep.subr.mxu0 0.0
    %2010 = vmatpush1.msra.mxu0 0.0
    %2011 = vmatprep.subr.mxu0 0.0
    %2012 = vmatpush1.msra.mxu0 0.0
    %2013 = vmatprep.subr.mxu0 0.0
    %2014 = vmatpush1.msra.mxu0 0.0
    %2015 = vmatprep.subr.mxu0 0.0
    %2016 = vmatpush1.msra.mxu0 0.0
    %2017 = vmatprep.subr.mxu0 0.0
    %2018 = vmatpush1.msra.mxu0 0.0
    %2019 = vmatprep.subr.mxu0 0.0
    %2020 = vmatpush1.msra.mxu0 0.0
    %2021 = vmatprep.subr.mxu0 0.0
    %2022 = vmatpush1.msra.mxu0 0.0
    %2023 = vmatprep.subr.mxu0 0.0
    %2024 = vmatpush1.msra.mxu0 0.0
    %2025 = vmatprep.subr.mxu0 0.0
    %2026 = vmatpush1.msra.mxu0 0.0
    %2027 = vmatprep.subr.mxu0 0.0
    %2028 = vmatpush1.msra.mxu0 0.0
    %2029 = vmatprep.subr.mxu0 0.0
    %2030 = vmatpush1.msra.mxu0 0.0
    %2031 = vmatprep.mubr.f32.mxu0 0.0
    %v2032 = vand.u32 %v266, 4294901760
    %v2033 = vsub.f32 %v266, %v2032
    %v2034 = vand.u32 %v2033, 4294901760
    %v2035 = vsub.f32 %v2033, %v2034
    %v2036 = vand.u32 %v2035, 4294901760
    %2037 = vmatmul.mubr.f32.gmra.mrb[0].mxu0 %v2036
    %v2038 = vpop.f32.mrb[0].mxu0
    %v2039 = vadd.f32 %v1934, %v2038
    %v2040 = vpop.f32.mrb[0].mxu0
    %2041 = vmatprep.mubr.f32.mxu0 0.0
    %v2042 = vand.u32 %v269, 4294901760
    %v2043 = vsub.f32 %v269, %v2042
    %v2044 = vand.u32 %v2043, 4294901760
    %v2045 = vsub.f32 %v2043, %v2044
    %v2046 = vand.u32 %v2045, 4294901760
    %2047 = vmatmul.mubr.f32.gmra.mrb[0].mxu0 %v2046
    %v2048 = vpop.f32.mrb[0].mxu0
    %v2049 = vadd.f32 %v1935, %v2048
    %v2050 = vpop.f32.mrb[0].mxu0
    %2051 = vmatprep.mubr.f32.mxu0 0.0
    %v2052 = vand.u32 %v272, 4294901760
    %v2053 = vsub.f32 %v272, %v2052
    %v2054 = vand.u32 %v2053, 4294901760
    %v2055 = vsub.f32 %v2053, %v2054
    %v2056 = vand.u32 %v2055, 4294901760
    %2057 = vmatmul.mubr.f32.gmra.mrb[0].mxu0 %v2056
    %v2058 = vpop.f32.mrb[0].mxu0
    %v2059 = vadd.f32 %v1936, %v2058
    %v2060 = vpop.f32.mrb[0].mxu0
    %2061 = vmatprep.mubr.f32.mxu0 0.0
    %v2062 = vand.u32 %v275, 4294901760
    %v2063 = vsub.f32 %v275, %v2062
    %v2064 = vand.u32 %v2063, 4294901760
    %v2065 = vsub.f32 %v2063, %v2064
    %v2066 = vand.u32 %v2065, 4294901760
    %2067 = vmatmul.mubr.f32.gmra.mrb[0].mxu0 %v2066
    %v2068 = vpop.f32.mrb[0].mxu0
    %v2069 = vadd.f32 %v1937, %v2068
    %v2070 = vpop.f32.mrb[0].mxu0
    %2071 = vmatprep.mubr.f32.mxu0 0.0
    %v2072 = vand.u32 %v278, 4294901760
    %v2073 = vsub.f32 %v278, %v2072
    %v2074 = vand.u32 %v2073, 4294901760
    %v2075 = vsub.f32 %v2073, %v2074
    %v2076 = vand.u32 %v2075, 4294901760
    %2077 = vmatmul.mubr.f32.gmra.mrb[0].mxu0 %v2076
    %v2078 = vpop.f32.mrb[0].mxu0
    %v2079 = vadd.f32 %v1938, %v2078
    %v2080 = vpop.f32.mrb[0].mxu0
    %2081 = vmatprep.mubr.f32.mxu0 0.0
    %v2082 = vand.u32 %v281, 4294901760
    %v2083 = vsub.f32 %v281, %v2082
    %v2084 = vand.u32 %v2083, 4294901760
    %v2085 = vsub.f32 %v2083, %v2084
    %v2086 = vand.u32 %v2085, 4294901760
    %2087 = vmatmul.mubr.f32.gmra.mrb[0].mxu0 %v2086
    %v2088 = vpop.f32.mrb[0].mxu0
    %v2089 = vadd.f32 %v1939, %v2088
    %v2090 = vpop.f32.mrb[0].mxu0
    %2091 = vmatprep.mubr.f32.mxu0 0.0
    %v2092 = vand.u32 %v284, 4294901760
    %v2093 = vsub.f32 %v284, %v2092
    %v2094 = vand.u32 %v2093, 4294901760
    %v2095 = vsub.f32 %v2093, %v2094
    %v2096 = vand.u32 %v2095, 4294901760
    %2097 = vmatmul.mubr.f32.gmra.mrb[0].mxu0 %v2096
    %v2098 = vpop.f32.mrb[0].mxu0
    %v2099 = vadd.f32 %v1940, %v2098
    %v2100 = vpop.f32.mrb[0].mxu0
    %2101 = vmatprep.mubr.f32.mxu0 0.0
    %v2102 = vand.u32 %v287, 4294901760
    %v2103 = vsub.f32 %v287, %v2102
    %v2104 = vand.u32 %v2103, 4294901760
    %v2105 = vsub.f32 %v2103, %v2104
    %v2106 = vand.u32 %v2105, 4294901760
    %2107 = vmatmul.mubr.f32.gmra.mrb[0].mxu0 %v2106
    %v2108 = vpop.f32.mrb[0].mxu0
    %v2109 = vadd.f32 %v1941, %v2108
    %v2110 = vpop.f32.mrb[0].mxu0
    %2111 = vmatprep.mubr.f32.mxu0 0.0
    %v2112 = vand.u32 %v290, 4294901760
    %v2113 = vsub.f32 %v290, %v2112
    %v2114 = vand.u32 %v2113, 4294901760
    %v2115 = vsub.f32 %v2113, %v2114
    %v2116 = vand.u32 %v2115, 4294901760
    %2117 = vmatmul.mubr.f32.gmra.mrb[0].mxu0 %v2116
    %v2118 = vpop.f32.mrb[0].mxu0
    %v2119 = vadd.f32 %v1942, %v2118
    %v2120 = vpop.f32.mrb[0].mxu0
    %2121 = vmatprep.mubr.f32.mxu0 0.0
    %v2122 = vand.u32 %v293, 4294901760
    %v2123 = vsub.f32 %v293, %v2122
    %v2124 = vand.u32 %v2123, 4294901760
    %v2125 = vsub.f32 %v2123, %v2124
    %v2126 = vand.u32 %v2125, 4294901760
    %2127 = vmatmul.mubr.f32.gmra.mrb[0].mxu0 %v2126
    %v2128 = vpop.f32.mrb[0].mxu0
    %v2129 = vadd.f32 %v1943, %v2128
    %v2130 = vpop.f32.mrb[0].mxu0
    %2131 = vmatprep.mubr.f32.mxu0 0.0
    %v2132 = vand.u32 %v296, 4294901760
    %v2133 = vsub.f32 %v296, %v2132
    %v2134 = vand.u32 %v2133, 4294901760
    %v2135 = vsub.f32 %v2133, %v2134
    %v2136 = vand.u32 %v2135, 4294901760
    %2137 = vmatmul.mubr.f32.gmra.mrb[0].mxu0 %v2136
    %v2138 = vpop.f32.mrb[0].mxu0
    %v2139 = vadd.f32 %v1944, %v2138
    %v2140 = vpop.f32.mrb[0].mxu0
    %2141 = vmatprep.mubr.f32.mxu0 0.0
    %v2142 = vand.u32 %v299, 4294901760
    %v2143 = vsub.f32 %v299, %v2142
    %v2144 = vand.u32 %v2143, 4294901760
    %v2145 = vsub.f32 %v2143, %v2144
    %v2146 = vand.u32 %v2145, 4294901760
    %2147 = vmatmul.mubr.f32.gmra.mrb[0].mxu0 %v2146
    %v2148 = vpop.f32.mrb[0].mxu0
    %v2149 = vadd.f32 %v1945, %v2148
    %v2150 = vpop.f32.mrb[0].mxu0
    %2151 = vmatprep.mubr.f32.mxu0 0.0
    %v2152 = vand.u32 %v302, 4294901760
    %v2153 = vsub.f32 %v302, %v2152
    %v2154 = vand.u32 %v2153, 4294901760
    %v2155 = vsub.f32 %v2153, %v2154
    %v2156 = vand.u32 %v2155, 4294901760
    %2157 = vmatmul.mubr.f32.gmra.mrb[0].mxu0 %v2156
    %v2158 = vpop.f32.mrb[0].mxu0
    %v2159 = vadd.f32 %v1946, %v2158
    %v2160 = vpop.f32.mrb[0].mxu0
    %2161 = vmatprep.mubr.f32.mxu0 0.0
    %v2162 = vand.u32 %v305, 4294901760
    %v2163 = vsub.f32 %v305, %v2162
    %v2164 = vand.u32 %v2163, 4294901760
    %v2165 = vsub.f32 %v2163, %v2164
    %v2166 = vand.u32 %v2165, 4294901760
    %2167 = vmatmul.mubr.f32.gmra.mrb[0].mxu0 %v2166
    %v2168 = vpop.f32.mrb[0].mxu0
    %v2169 = vadd.f32 %v1947, %v2168
    %v2170 = vpop.f32.mrb[0].mxu0
    %2171 = vmatprep.mubr.f32.mxu0 0.0
    %v2172 = vand.u32 %v308, 4294901760
    %v2173 = vsub.f32 %v308, %v2172
    %v2174 = vand.u32 %v2173, 4294901760
    %v2175 = vsub.f32 %v2173, %v2174
    %v2176 = vand.u32 %v2175, 4294901760
    %2177 = vmatmul.mubr.f32.gmra.mrb[0].mxu0 %v2176
    %v2178 = vpop.f32.mrb[0].mxu0
    %v2179 = vadd.f32 %v1948, %v2178
    %v2180 = vpop.f32.mrb[0].mxu0
    %2181 = vmatprep.mubr.f32.mxu0 0.0
    %v2182 = vand.u32 %v311, 4294901760
    %v2183 = vsub.f32 %v311, %v2182
    %v2184 = vand.u32 %v2183, 4294901760
    %v2185 = vsub.f32 %v2183, %v2184
    %v2186 = vand.u32 %v2185, 4294901760
    %2187 = vmatmul.mubr.f32.gmra.mrb[0].mxu0 %v2186
    %v2188 = vpop.f32.mrb[0].mxu0
    %v2189 = vadd.f32 %v1949, %v2188
    %v2190 = vpop.f32.mrb[0].mxu0
    %2191 = vmatprep.mubr.f32.mxu0 0.0
    %v2192 = vand.u32 %v314, 4294901760
    %v2193 = vsub.f32 %v314, %v2192
    %v2194 = vand.u32 %v2193, 4294901760
    %v2195 = vsub.f32 %v2193, %v2194
    %v2196 = vand.u32 %v2195, 4294901760
    %2197 = vmatmul.mubr.f32.gmra.mrb[0].mxu0 %v2196
    %v2198 = vpop.f32.mrb[0].mxu0
    %v2199 = vadd.f32 %v1950, %v2198
    %v2200 = vpop.f32.mrb[0].mxu0
    %2201 = vmatprep.mubr.f32.mxu0 0.0
    %v2202 = vand.u32 %v317, 4294901760
    %v2203 = vsub.f32 %v317, %v2202
    %v2204 = vand.u32 %v2203, 4294901760
    %v2205 = vsub.f32 %v2203, %v2204
    %v2206 = vand.u32 %v2205, 4294901760
    %2207 = vmatmul.mubr.f32.gmra.mrb[0].mxu0 %v2206
    %v2208 = vpop.f32.mrb[0].mxu0
    %v2209 = vadd.f32 %v1951, %v2208
    %v2210 = vpop.f32.mrb[0].mxu0
    %2211 = vmatprep.mubr.f32.mxu0 0.0
    %v2212 = vand.u32 %v320, 4294901760
    %v2213 = vsub.f32 %v320, %v2212
    %v2214 = vand.u32 %v2213, 4294901760
    %v2215 = vsub.f32 %v2213, %v2214
    %v2216 = vand.u32 %v2215, 4294901760
    %2217 = vmatmul.mubr.f32.gmra.mrb[0].mxu0 %v2216
    %v2218 = vpop.f32.mrb[0].mxu0
    %v2219 = vadd.f32 %v1952, %v2218
    %v2220 = vpop.f32.mrb[0].mxu0
    %2221 = vmatprep.mubr.f32.mxu0 0.0
    %v2222 = vand.u32 %v323, 4294901760
    %v2223 = vsub.f32 %v323, %v2222
    %v2224 = vand.u32 %v2223, 4294901760
    %v2225 = vsub.f32 %v2223, %v2224
    %v2226 = vand.u32 %v2225, 4294901760
    %2227 = vmatmul.mubr.f32.gmra.mrb[0].mxu0 %v2226
    %v2228 = vpop.f32.mrb[0].mxu0
    %v2229 = vadd.f32 %v1953, %v2228
    %v2230 = vpop.f32.mrb[0].mxu0
    %2231 = vmatprep.mubr.f32.mxu0 0.0
    %v2232 = vand.u32 %v326, 4294901760
    %v2233 = vsub.f32 %v326, %v2232
    %v2234 = vand.u32 %v2233, 4294901760
    %v2235 = vsub.f32 %v2233, %v2234
    %v2236 = vand.u32 %v2235, 4294901760
    %2237 = vmatmul.mubr.f32.gmra.mrb[0].mxu0 %v2236
    %v2238 = vpop.f32.mrb[0].mxu0
    %v2239 = vadd.f32 %v1954, %v2238
    %v2240 = vpop.f32.mrb[0].mxu0
    %2241 = vmatprep.mubr.f32.mxu0 0.0
    %v2242 = vand.u32 %v329, 4294901760
    %v2243 = vsub.f32 %v329, %v2242
    %v2244 = vand.u32 %v2243, 4294901760
    %v2245 = vsub.f32 %v2243, %v2244
    %v2246 = vand.u32 %v2245, 4294901760
    %2247 = vmatmul.mubr.f32.gmra.mrb[0].mxu0 %v2246
    %v2248 = vpop.f32.mrb[0].mxu0
    %v2249 = vadd.f32 %v1955, %v2248
    %v2250 = vpop.f32.mrb[0].mxu0
    %2251 = vmatprep.mubr.f32.mxu0 0.0
    %v2252 = vand.u32 %v332, 4294901760
    %v2253 = vsub.f32 %v332, %v2252
    %v2254 = vand.u32 %v2253, 4294901760
    %v2255 = vsub.f32 %v2253, %v2254
    %v2256 = vand.u32 %v2255, 4294901760
    %2257 = vmatmul.mubr.f32.gmra.mrb[0].mxu0 %v2256
    %v2258 = vpop.f32.mrb[0].mxu0
    %v2259 = vadd.f32 %v1956, %v2258
    %v2260 = vpop.f32.mrb[0].mxu0
    %2261 = vmatprep.mubr.f32.mxu0 0.0
    %v2262 = vand.u32 %v335, 4294901760
    %v2263 = vsub.f32 %v335, %v2262
    %v2264 = vand.u32 %v2263, 4294901760
    %v2265 = vsub.f32 %v2263, %v2264
    %v2266 = vand.u32 %v2265, 4294901760
    %2267 = vmatmul.mubr.f32.gmra.mrb[0].mxu0 %v2266
    %v2268 = vpop.f32.mrb[0].mxu0
    %v2269 = vadd.f32 %v1957, %v2268
    %v2270 = vpop.f32.mrb[0].mxu0
    %2271 = vmatprep.mubr.f32.mxu0 0.0
    %v2272 = vand.u32 %v338, 4294901760
    %v2273 = vsub.f32 %v338, %v2272
    %v2274 = vand.u32 %v2273, 4294901760
    %v2275 = vsub.f32 %v2273, %v2274
    %v2276 = vand.u32 %v2275, 4294901760
    %2277 = vmatmul.mubr.f32.gmra.mrb[0].mxu0 %v2276
    %v2278 = vpop.f32.mrb[0].mxu0
    %v2279 = vadd.f32 %v1958, %v2278
    %v2280 = vpop.f32.mrb[0].mxu0
    %2281 = vdwg.mxu0
    %2282 = vmatprep.subr.mxu0 0.0
    %v2283 = vand.u32 %v248, 4294901760
    %v2284 = vsub.f32 %v248, %v2283
    %v2285 = vand.u32 %v2284, 4294901760
    %v2286 = vsub.f32 %v2284, %v2285
    %v2287 = vand.u32 %v2286, 4294901760
    %2288 = vmatpush1.msra.mxu0 %v2287
    %2289 = vmatprep.subr.mxu0 0.0
    %v2290 = vand.u32 %v249, 4294901760
    %v2291 = vsub.f32 %v249, %v2290
    %v2292 = vand.u32 %v2291, 4294901760
    %v2293 = vsub.f32 %v2291, %v2292
    %v2294 = vand.u32 %v2293, 4294901760
    %2295 = vmatpush1.msra.mxu0 %v2294
    %2296 = vmatprep.subr.mxu0 0.0
    %v2297 = vand.u32 %v250, 4294901760
    %v2298 = vsub.f32 %v250, %v2297
    %v2299 = vand.u32 %v2298, 4294901760
    %v2300 = vsub.f32 %v2298, %v2299
    %v2301 = vand.u32 %v2300, 4294901760
    %2302 = vmatpush1.msra.mxu0 %v2301
    %2303 = vmatprep.subr.mxu0 0.0
    %v2304 = vand.u32 %v251, 4294901760
    %v2305 = vsub.f32 %v251, %v2304
    %v2306 = vand.u32 %v2305, 4294901760
    %v2307 = vsub.f32 %v2305, %v2306
    %v2308 = vand.u32 %v2307, 4294901760
    %2309 = vmatpush1.msra.mxu0 %v2308
    %2310 = vmatprep.subr.mxu0 0.0
    %v2311 = vand.u32 %v252, 4294901760
    %v2312 = vsub.f32 %v252, %v2311
    %v2313 = vand.u32 %v2312, 4294901760
    %v2314 = vsub.f32 %v2312, %v2313
    %v2315 = vand.u32 %v2314, 4294901760
    %2316 = vmatpush1.msra.mxu0 %v2315
    %2317 = vmatprep.subr.mxu0 0.0
    %v2318 = vand.u32 %v253, 4294901760
    %v2319 = vsub.f32 %v253, %v2318
    %v2320 = vand.u32 %v2319, 4294901760
    %v2321 = vsub.f32 %v2319, %v2320
    %v2322 = vand.u32 %v2321, 4294901760
    %2323 = vmatpush1.msra.mxu0 %v2322
    %2324 = vmatprep.subr.mxu0 0.0
    %v2325 = vand.u32 %v254, 4294901760
    %v2326 = vsub.f32 %v254, %v2325
    %v2327 = vand.u32 %v2326, 4294901760
    %v2328 = vsub.f32 %v2326, %v2327
    %v2329 = vand.u32 %v2328, 4294901760
    %2330 = vmatpush1.msra.mxu0 %v2329
    %2331 = vmatprep.subr.mxu0 0.0
    %v2332 = vand.u32 %v255, 4294901760
    %v2333 = vsub.f32 %v255, %v2332
    %v2334 = vand.u32 %v2333, 4294901760
    %v2335 = vsub.f32 %v2333, %v2334
    %v2336 = vand.u32 %v2335, 4294901760
    %2337 = vmatpush1.msra.mxu0 %v2336
    %2338 = vmatprep.subr.mxu0 0.0
    %2339 = vmatpush1.msra.mxu0 0.0
    %2340 = vmatprep.subr.mxu0 0.0
    %2341 = vmatpush1.msra.mxu0 0.0
    %2342 = vmatprep.subr.mxu0 0.0
    %2343 = vmatpush1.msra.mxu0 0.0
    %2344 = vmatprep.subr.mxu0 0.0
    %2345 = vmatpush1.msra.mxu0 0.0
    %2346 = vmatprep.subr.mxu0 0.0
    %2347 = vmatpush1.msra.mxu0 0.0
    %2348 = vmatprep.subr.mxu0 0.0
    %2349 = vmatpush1.msra.mxu0 0.0
    %2350 = vmatprep.subr.mxu0 0.0
    %2351 = vmatpush1.msra.mxu0 0.0
    %2352 = vmatprep.subr.mxu0 0.0
    %2353 = vmatpush1.msra.mxu0 0.0
    %2354 = vmatprep.subr.mxu0 0.0
    %2355 = vmatpush1.msra.mxu0 0.0
    %2356 = vmatprep.subr.mxu0 0.0
    %2357 = vmatpush1.msra.mxu0 0.0
    %2358 = vmatprep.subr.mxu0 0.0
    %2359 = vmatpush1.msra.mxu0 0.0
    %2360 = vmatprep.subr.mxu0 0.0
    %2361 = vmatpush1.msra.mxu0 0.0
    %2362 = vmatprep.subr.mxu0 0.0
    %2363 = vmatpush1.msra.mxu0 0.0
    %2364 = vmatprep.subr.mxu0 0.0
    %2365 = vmatpush1.msra.mxu0 0.0
    %2366 = vmatprep.subr.mxu0 0.0
    %2367 = vmatpush1.msra.mxu0 0.0
    %2368 = vmatprep.subr.mxu0 0.0
    %2369 = vmatpush1.msra.mxu0 0.0
    %2370 = vmatprep.subr.mxu0 0.0
    %2371 = vmatpush1.msra.mxu0 0.0
    %2372 = vmatprep.subr.mxu0 0.0
    %2373 = vmatpush1.msra.mxu0 0.0
    %2374 = vmatprep.subr.mxu0 0.0
    %2375 = vmatpush1.msra.mxu0 0.0
    %2376 = vmatprep.subr.mxu0 0.0
    %2377 = vmatpush1.msra.mxu0 0.0
    %2378 = vmatprep.subr.mxu0 0.0
    %2379 = vmatpush1.msra.mxu0 0.0
    %2380 = vmatprep.subr.mxu0 0.0
    %2381 = vmatpush1.msra.mxu0 0.0
    %2382 = vmatprep.subr.mxu0 0.0
    %2383 = vmatpush1.msra.mxu0 0.0
    %2384 = vmatprep.subr.mxu0 0.0
    %2385 = vmatpush1.msra.mxu0 0.0
    %2386 = vmatprep.mubr.f32.mxu0 0.0
    %v2387 = vand.u32 %v266, 4294901760
    %2388 = vmatmul.mubr.f32.gmra.mrb[0].mxu0 %v2387
    %v2389 = vpop.f32.mrb[0].mxu0
    %v2390 = vadd.f32 %v2039, %v2389
    %v2391 = vpop.f32.mrb[0].mxu0
    %2392 = vmatprep.mubr.f32.mxu0 0.0
    %v2393 = vand.u32 %v269, 4294901760
    %2394 = vmatmul.mubr.f32.gmra.mrb[0].mxu0 %v2393
    %v2395 = vpop.f32.mrb[0].mxu0
    %v2396 = vadd.f32 %v2049, %v2395
    %v2397 = vpop.f32.mrb[0].mxu0
    %2398 = vmatprep.mubr.f32.mxu0 0.0
    %v2399 = vand.u32 %v272, 4294901760
    %2400 = vmatmul.mubr.f32.gmra.mrb[0].mxu0 %v2399
    %v2401 = vpop.f32.mrb[0].mxu0
    %v2402 = vadd.f32 %v2059, %v2401
    %v2403 = vpop.f32.mrb[0].mxu0
    %2404 = vmatprep.mubr.f32.mxu0 0.0
    %v2405 = vand.u32 %v275, 4294901760
    %2406 = vmatmul.mubr.f32.gmra.mrb[0].mxu0 %v2405
    %v2407 = vpop.f32.mrb[0].mxu0
    %v2408 = vadd.f32 %v2069, %v2407
    %v2409 = vpop.f32.mrb[0].mxu0
    %2410 = vmatprep.mubr.f32.mxu0 0.0
    %v2411 = vand.u32 %v278, 4294901760
    %2412 = vmatmul.mubr.f32.gmra.mrb[0].mxu0 %v2411
    %v2413 = vpop.f32.mrb[0].mxu0
    %v2414 = vadd.f32 %v2079, %v2413
    %v2415 = vpop.f32.mrb[0].mxu0
    %2416 = vmatprep.mubr.f32.mxu0 0.0
    %v2417 = vand.u32 %v281, 4294901760
    %2418 = vmatmul.mubr.f32.gmra.mrb[0].mxu0 %v2417
    %v2419 = vpop.f32.mrb[0].mxu0
    %v2420 = vadd.f32 %v2089, %v2419
    %v2421 = vpop.f32.mrb[0].mxu0
    %2422 = vmatprep.mubr.f32.mxu0 0.0
    %v2423 = vand.u32 %v284, 4294901760
    %2424 = vmatmul.mubr.f32.gmra.mrb[0].mxu0 %v2423
    %v2425 = vpop.f32.mrb[0].mxu0
    %v2426 = vadd.f32 %v2099, %v2425
    %v2427 = vpop.f32.mrb[0].mxu0
    %2428 = vmatprep.mubr.f32.mxu0 0.0
    %v2429 = vand.u32 %v287, 4294901760
    %2430 = vmatmul.mubr.f32.gmra.mrb[0].mxu0 %v2429
    %v2431 = vpop.f32.mrb[0].mxu0
    %v2432 = vadd.f32 %v2109, %v2431
    %v2433 = vpop.f32.mrb[0].mxu0
    %2434 = vmatprep.mubr.f32.mxu0 0.0
    %v2435 = vand.u32 %v290, 4294901760
    %2436 = vmatmul.mubr.f32.gmra.mrb[0].mxu0 %v2435
    %v2437 = vpop.f32.mrb[0].mxu0
    %v2438 = vadd.f32 %v2119, %v2437
    %v2439 = vpop.f32.mrb[0].mxu0
    %2440 = vmatprep.mubr.f32.mxu0 0.0
    %v2441 = vand.u32 %v293, 4294901760
    %2442 = vmatmul.mubr.f32.gmra.mrb[0].mxu0 %v2441
    %v2443 = vpop.f32.mrb[0].mxu0
    %v2444 = vadd.f32 %v2129, %v2443
    %v2445 = vpop.f32.mrb[0].mxu0
    %2446 = vmatprep.mubr.f32.mxu0 0.0
    %v2447 = vand.u32 %v296, 4294901760
    %2448 = vmatmul.mubr.f32.gmra.mrb[0].mxu0 %v2447
    %v2449 = vpop.f32.mrb[0].mxu0
    %v2450 = vadd.f32 %v2139, %v2449
    %v2451 = vpop.f32.mrb[0].mxu0
    %2452 = vmatprep.mubr.f32.mxu0 0.0
    %v2453 = vand.u32 %v299, 4294901760
    %2454 = vmatmul.mubr.f32.gmra.mrb[0].mxu0 %v2453
    %v2455 = vpop.f32.mrb[0].mxu0
    %v2456 = vadd.f32 %v2149, %v2455
    %v2457 = vpop.f32.mrb[0].mxu0
    %2458 = vmatprep.mubr.f32.mxu0 0.0
    %v2459 = vand.u32 %v302, 4294901760
    %2460 = vmatmul.mubr.f32.gmra.mrb[0].mxu0 %v2459
    %v2461 = vpop.f32.mrb[0].mxu0
    %v2462 = vadd.f32 %v2159, %v2461
    %v2463 = vpop.f32.mrb[0].mxu0
    %2464 = vmatprep.mubr.f32.mxu0 0.0
    %v2465 = vand.u32 %v305, 4294901760
    %2466 = vmatmul.mubr.f32.gmra.mrb[0].mxu0 %v2465
    %v2467 = vpop.f32.mrb[0].mxu0
    %v2468 = vadd.f32 %v2169, %v2467
    %v2469 = vpop.f32.mrb[0].mxu0
    %2470 = vmatprep.mubr.f32.mxu0 0.0
    %v2471 = vand.u32 %v308, 4294901760
    %2472 = vmatmul.mubr.f32.gmra.mrb[0].mxu0 %v2471
    %v2473 = vpop.f32.mrb[0].mxu0
    %v2474 = vadd.f32 %v2179, %v2473
    %v2475 = vpop.f32.mrb[0].mxu0
    %2476 = vmatprep.mubr.f32.mxu0 0.0
    %v2477 = vand.u32 %v311, 4294901760
    %2478 = vmatmul.mubr.f32.gmra.mrb[0].mxu0 %v2477
    %v2479 = vpop.f32.mrb[0].mxu0
    %v2480 = vadd.f32 %v2189, %v2479
    %v2481 = vpop.f32.mrb[0].mxu0
    %2482 = vmatprep.mubr.f32.mxu0 0.0
    %v2483 = vand.u32 %v314, 4294901760
    %2484 = vmatmul.mubr.f32.gmra.mrb[0].mxu0 %v2483
    %v2485 = vpop.f32.mrb[0].mxu0
    %v2486 = vadd.f32 %v2199, %v2485
    %v2487 = vpop.f32.mrb[0].mxu0
    %2488 = vmatprep.mubr.f32.mxu0 0.0
    %v2489 = vand.u32 %v317, 4294901760
    %2490 = vmatmul.mubr.f32.gmra.mrb[0].mxu0 %v2489
    %v2491 = vpop.f32.mrb[0].mxu0
    %v2492 = vadd.f32 %v2209, %v2491
    %v2493 = vpop.f32.mrb[0].mxu0
    %2494 = vmatprep.mubr.f32.mxu0 0.0
    %v2495 = vand.u32 %v320, 4294901760
    %2496 = vmatmul.mubr.f32.gmra.mrb[0].mxu0 %v2495
    %v2497 = vpop.f32.mrb[0].mxu0
    %v2498 = vadd.f32 %v2219, %v2497
    %v2499 = vpop.f32.mrb[0].mxu0
    %2500 = vmatprep.mubr.f32.mxu0 0.0
    %v2501 = vand.u32 %v323, 4294901760
    %2502 = vmatmul.mubr.f32.gmra.mrb[0].mxu0 %v2501
    %v2503 = vpop.f32.mrb[0].mxu0
    %v2504 = vadd.f32 %v2229, %v2503
    %v2505 = vpop.f32.mrb[0].mxu0
    %2506 = vmatprep.mubr.f32.mxu0 0.0
    %v2507 = vand.u32 %v326, 4294901760
    %2508 = vmatmul.mubr.f32.gmra.mrb[0].mxu0 %v2507
    %v2509 = vpop.f32.mrb[0].mxu0
    %v2510 = vadd.f32 %v2239, %v2509
    %v2511 = vpop.f32.mrb[0].mxu0
    %2512 = vmatprep.mubr.f32.mxu0 0.0
    %v2513 = vand.u32 %v329, 4294901760
    %2514 = vmatmul.mubr.f32.gmra.mrb[0].mxu0 %v2513
    %v2515 = vpop.f32.mrb[0].mxu0
    %v2516 = vadd.f32 %v2249, %v2515
    %v2517 = vpop.f32.mrb[0].mxu0
    %2518 = vmatprep.mubr.f32.mxu0 0.0
    %v2519 = vand.u32 %v332, 4294901760
    %2520 = vmatmul.mubr.f32.gmra.mrb[0].mxu0 %v2519
    %v2521 = vpop.f32.mrb[0].mxu0
    %v2522 = vadd.f32 %v2259, %v2521
    %v2523 = vpop.f32.mrb[0].mxu0
    %2524 = vmatprep.mubr.f32.mxu0 0.0
    %v2525 = vand.u32 %v335, 4294901760
    %2526 = vmatmul.mubr.f32.gmra.mrb[0].mxu0 %v2525
    %v2527 = vpop.f32.mrb[0].mxu0
    %v2528 = vadd.f32 %v2269, %v2527
    %v2529 = vpop.f32.mrb[0].mxu0
    %2530 = vmatprep.mubr.f32.mxu0 0.0
    %v2531 = vand.u32 %v338, 4294901760
    %2532 = vmatmul.mubr.f32.gmra.mrb[0].mxu0 %v2531
    %v2533 = vpop.f32.mrb[0].mxu0
    %v2534 = vadd.f32 %v2279, %v2533
    %v2535 = vpop.f32.mrb[0].mxu0
    %2536 = vdwg.mxu0
    %2537 = vmatprep.subr.mxu0 0.0
    %v2538 = vand.u32 %v248, 4294901760
    %v2539 = vsub.f32 %v248, %v2538
    %2540 = vmatpush1.msra.mxu0 %v2539
    %2541 = vmatprep.subr.mxu0 0.0
    %v2542 = vand.u32 %v249, 4294901760
    %v2543 = vsub.f32 %v249, %v2542
    %2544 = vmatpush1.msra.mxu0 %v2543
    %2545 = vmatprep.subr.mxu0 0.0
    %v2546 = vand.u32 %v250, 4294901760
    %v2547 = vsub.f32 %v250, %v2546
    %2548 = vmatpush1.msra.mxu0 %v2547
    %2549 = vmatprep.subr.mxu0 0.0
    %v2550 = vand.u32 %v251, 4294901760
    %v2551 = vsub.f32 %v251, %v2550
    %2552 = vmatpush1.msra.mxu0 %v2551
    %2553 = vmatprep.subr.mxu0 0.0
    %v2554 = vand.u32 %v252, 4294901760
    %v2555 = vsub.f32 %v252, %v2554
    %2556 = vmatpush1.msra.mxu0 %v2555
    %2557 = vmatprep.subr.mxu0 0.0
    %v2558 = vand.u32 %v253, 4294901760
    %v2559 = vsub.f32 %v253, %v2558
    %2560 = vmatpush1.msra.mxu0 %v2559
    %2561 = vmatprep.subr.mxu0 0.0
    %v2562 = vand.u32 %v254, 4294901760
    %v2563 = vsub.f32 %v254, %v2562
    %2564 = vmatpush1.msra.mxu0 %v2563
    %2565 = vmatprep.subr.mxu0 0.0
    %v2566 = vand.u32 %v255, 4294901760
    %v2567 = vsub.f32 %v255, %v2566
    %2568 = vmatpush1.msra.mxu0 %v2567
    %2569 = vmatprep.subr.mxu0 0.0
    %2570 = vmatpush1.msra.mxu0 0.0
    %2571 = vmatprep.subr.mxu0 0.0
    %2572 = vmatpush1.msra.mxu0 0.0
    %2573 = vmatprep.subr.mxu0 0.0
    %2574 = vmatpush1.msra.mxu0 0.0
    %2575 = vmatprep.subr.mxu0 0.0
    %2576 = vmatpush1.msra.mxu0 0.0
    %2577 = vmatprep.subr.mxu0 0.0
    %2578 = vmatpush1.msra.mxu0 0.0
    %2579 = vmatprep.subr.mxu0 0.0
    %2580 = vmatpush1.msra.mxu0 0.0
    %2581 = vmatprep.subr.mxu0 0.0
    %2582 = vmatpush1.msra.mxu0 0.0
    %2583 = vmatprep.subr.mxu0 0.0
    %2584 = vmatpush1.msra.mxu0 0.0
    %2585 = vmatprep.subr.mxu0 0.0
    %2586 = vmatpush1.msra.mxu0 0.0
    %2587 = vmatprep.subr.mxu0 0.0
    %2588 = vmatpush1.msra.mxu0 0.0
    %2589 = vmatprep.subr.mxu0 0.0
    %2590 = vmatpush1.msra.mxu0 0.0
    %2591 = vmatprep.subr.mxu0 0.0
    %2592 = vmatpush1.msra.mxu0 0.0
    %2593 = vmatprep.subr.mxu0 0.0
    %2594 = vmatpush1.msra.mxu0 0.0
    %2595 = vmatprep.subr.mxu0 0.0
    %2596 = vmatpush1.msra.mxu0 0.0
    %2597 = vmatprep.subr.mxu0 0.0
    %2598 = vmatpush1.msra.mxu0 0.0
    %2599 = vmatprep.subr.mxu0 0.0
    %2600 = vmatpush1.msra.mxu0 0.0
    %2601 = vmatprep.subr.mxu0 0.0
    %2602 = vmatpush1.msra.mxu0 0.0
    %2603 = vmatprep.subr.mxu0 0.0
    %2604 = vmatpush1.msra.mxu0 0.0
    %2605 = vmatprep.subr.mxu0 0.0
    %2606 = vmatpush1.msra.mxu0 0.0
    %2607 = vmatprep.subr.mxu0 0.0
    %2608 = vmatpush1.msra.mxu0 0.0
    %2609 = vmatprep.subr.mxu0 0.0
    %2610 = vmatpush1.msra.mxu0 0.0
    %2611 = vmatprep.subr.mxu0 0.0
    %2612 = vmatpush1.msra.mxu0 0.0
    %2613 = vmatprep.subr.mxu0 0.0
    %2614 = vmatpush1.msra.mxu0 0.0
    %2615 = vmatprep.subr.mxu0 0.0
    %2616 = vmatpush1.msra.mxu0 0.0
    %2617 = vmatprep.mubr.f32.mxu0 0.0
    %v2618 = vand.u32 %v266, 4294901760
    %v2619 = vsub.f32 %v266, %v2618
    %2620 = vmatmul.mubr.f32.gmra.mrb[0].mxu0 %v2619
    %v2621 = vpop.f32.mrb[0].mxu0
    %v2622 = vadd.f32 %v2390, %v2621
    %v2623 = vpop.f32.mrb[0].mxu0
    %2624 = vmatprep.mubr.f32.mxu0 0.0
    %v2625 = vand.u32 %v269, 4294901760
    %v2626 = vsub.f32 %v269, %v2625
    %2627 = vmatmul.mubr.f32.gmra.mrb[0].mxu0 %v2626
    %v2628 = vpop.f32.mrb[0].mxu0
    %v2629 = vadd.f32 %v2396, %v2628
    %v2630 = vpop.f32.mrb[0].mxu0
    %2631 = vmatprep.mubr.f32.mxu0 0.0
    %v2632 = vand.u32 %v272, 4294901760
    %v2633 = vsub.f32 %v272, %v2632
    %2634 = vmatmul.mubr.f32.gmra.mrb[0].mxu0 %v2633
    %v2635 = vpop.f32.mrb[0].mxu0
    %v2636 = vadd.f32 %v2402, %v2635
    %v2637 = vpop.f32.mrb[0].mxu0
    %2638 = vmatprep.mubr.f32.mxu0 0.0
    %v2639 = vand.u32 %v275, 4294901760
    %v2640 = vsub.f32 %v275, %v2639
    %2641 = vmatmul.mubr.f32.gmra.mrb[0].mxu0 %v2640
    %v2642 = vpop.f32.mrb[0].mxu0
    %v2643 = vadd.f32 %v2408, %v2642
    %v2644 = vpop.f32.mrb[0].mxu0
    %2645 = vmatprep.mubr.f32.mxu0 0.0
    %v2646 = vand.u32 %v278, 4294901760
    %v2647 = vsub.f32 %v278, %v2646
    %2648 = vmatmul.mubr.f32.gmra.mrb[0].mxu0 %v2647
    %v2649 = vpop.f32.mrb[0].mxu0
    %v2650 = vadd.f32 %v2414, %v2649
    %v2651 = vpop.f32.mrb[0].mxu0
    %2652 = vmatprep.mubr.f32.mxu0 0.0
    %v2653 = vand.u32 %v281, 4294901760
    %v2654 = vsub.f32 %v281, %v2653
    %2655 = vmatmul.mubr.f32.gmra.mrb[0].mxu0 %v2654
    %v2656 = vpop.f32.mrb[0].mxu0
    %v2657 = vadd.f32 %v2420, %v2656
    %v2658 = vpop.f32.mrb[0].mxu0
    %2659 = vmatprep.mubr.f32.mxu0 0.0
    %v2660 = vand.u32 %v284, 4294901760
    %v2661 = vsub.f32 %v284, %v2660
    %2662 = vmatmul.mubr.f32.gmra.mrb[0].mxu0 %v2661
    %v2663 = vpop.f32.mrb[0].mxu0
    %v2664 = vadd.f32 %v2426, %v2663
    %v2665 = vpop.f32.mrb[0].mxu0
    %2666 = vmatprep.mubr.f32.mxu0 0.0
    %v2667 = vand.u32 %v287, 4294901760
    %v2668 = vsub.f32 %v287, %v2667
    %2669 = vmatmul.mubr.f32.gmra.mrb[0].mxu0 %v2668
    %v2670 = vpop.f32.mrb[0].mxu0
    %v2671 = vadd.f32 %v2432, %v2670
    %v2672 = vpop.f32.mrb[0].mxu0
    %2673 = vmatprep.mubr.f32.mxu0 0.0
    %v2674 = vand.u32 %v290, 4294901760
    %v2675 = vsub.f32 %v290, %v2674
    %2676 = vmatmul.mubr.f32.gmra.mrb[0].mxu0 %v2675
    %v2677 = vpop.f32.mrb[0].mxu0
    %v2678 = vadd.f32 %v2438, %v2677
    %v2679 = vpop.f32.mrb[0].mxu0
    %2680 = vmatprep.mubr.f32.mxu0 0.0
    %v2681 = vand.u32 %v293, 4294901760
    %v2682 = vsub.f32 %v293, %v2681
    %2683 = vmatmul.mubr.f32.gmra.mrb[0].mxu0 %v2682
    %v2684 = vpop.f32.mrb[0].mxu0
    %v2685 = vadd.f32 %v2444, %v2684
    %v2686 = vpop.f32.mrb[0].mxu0
    %2687 = vmatprep.mubr.f32.mxu0 0.0
    %v2688 = vand.u32 %v296, 4294901760
    %v2689 = vsub.f32 %v296, %v2688
    %2690 = vmatmul.mubr.f32.gmra.mrb[0].mxu0 %v2689
    %v2691 = vpop.f32.mrb[0].mxu0
    %v2692 = vadd.f32 %v2450, %v2691
    %v2693 = vpop.f32.mrb[0].mxu0
    %2694 = vmatprep.mubr.f32.mxu0 0.0
    %v2695 = vand.u32 %v299, 4294901760
    %v2696 = vsub.f32 %v299, %v2695
    %2697 = vmatmul.mubr.f32.gmra.mrb[0].mxu0 %v2696
    %v2698 = vpop.f32.mrb[0].mxu0
    %v2699 = vadd.f32 %v2456, %v2698
    %v2700 = vpop.f32.mrb[0].mxu0
    %2701 = vmatprep.mubr.f32.mxu0 0.0
    %v2702 = vand.u32 %v302, 4294901760
    %v2703 = vsub.f32 %v302, %v2702
    %2704 = vmatmul.mubr.f32.gmra.mrb[0].mxu0 %v2703
    %v2705 = vpop.f32.mrb[0].mxu0
    %v2706 = vadd.f32 %v2462, %v2705
    %v2707 = vpop.f32.mrb[0].mxu0
    %2708 = vmatprep.mubr.f32.mxu0 0.0
    %v2709 = vand.u32 %v305, 4294901760
    %v2710 = vsub.f32 %v305, %v2709
    %2711 = vmatmul.mubr.f32.gmra.mrb[0].mxu0 %v2710
    %v2712 = vpop.f32.mrb[0].mxu0
    %v2713 = vadd.f32 %v2468, %v2712
    %v2714 = vpop.f32.mrb[0].mxu0
    %2715 = vmatprep.mubr.f32.mxu0 0.0
    %v2716 = vand.u32 %v308, 4294901760
    %v2717 = vsub.f32 %v308, %v2716
    %2718 = vmatmul.mubr.f32.gmra.mrb[0].mxu0 %v2717
    %v2719 = vpop.f32.mrb[0].mxu0
    %v2720 = vadd.f32 %v2474, %v2719
    %v2721 = vpop.f32.mrb[0].mxu0
    %2722 = vmatprep.mubr.f32.mxu0 0.0
    %v2723 = vand.u32 %v311, 4294901760
    %v2724 = vsub.f32 %v311, %v2723
    %2725 = vmatmul.mubr.f32.gmra.mrb[0].mxu0 %v2724
    %v2726 = vpop.f32.mrb[0].mxu0
    %v2727 = vadd.f32 %v2480, %v2726
    %v2728 = vpop.f32.mrb[0].mxu0
    %2729 = vmatprep.mubr.f32.mxu0 0.0
    %v2730 = vand.u32 %v314, 4294901760
    %v2731 = vsub.f32 %v314, %v2730
    %2732 = vmatmul.mubr.f32.gmra.mrb[0].mxu0 %v2731
    %v2733 = vpop.f32.mrb[0].mxu0
    %v2734 = vadd.f32 %v2486, %v2733
    %v2735 = vpop.f32.mrb[0].mxu0
    %2736 = vmatprep.mubr.f32.mxu0 0.0
    %v2737 = vand.u32 %v317, 4294901760
    %v2738 = vsub.f32 %v317, %v2737
    %2739 = vmatmul.mubr.f32.gmra.mrb[0].mxu0 %v2738
    %v2740 = vpop.f32.mrb[0].mxu0
    %v2741 = vadd.f32 %v2492, %v2740
    %v2742 = vpop.f32.mrb[0].mxu0
    %2743 = vmatprep.mubr.f32.mxu0 0.0
    %v2744 = vand.u32 %v320, 4294901760
    %v2745 = vsub.f32 %v320, %v2744
    %2746 = vmatmul.mubr.f32.gmra.mrb[0].mxu0 %v2745
    %v2747 = vpop.f32.mrb[0].mxu0
    %v2748 = vadd.f32 %v2498, %v2747
    %v2749 = vpop.f32.mrb[0].mxu0
    %2750 = vmatprep.mubr.f32.mxu0 0.0
    %v2751 = vand.u32 %v323, 4294901760
    %v2752 = vsub.f32 %v323, %v2751
    %2753 = vmatmul.mubr.f32.gmra.mrb[0].mxu0 %v2752
    %v2754 = vpop.f32.mrb[0].mxu0
    %v2755 = vadd.f32 %v2504, %v2754
    %v2756 = vpop.f32.mrb[0].mxu0
    %2757 = vmatprep.mubr.f32.mxu0 0.0
    %v2758 = vand.u32 %v326, 4294901760
    %v2759 = vsub.f32 %v326, %v2758
    %2760 = vmatmul.mubr.f32.gmra.mrb[0].mxu0 %v2759
    %v2761 = vpop.f32.mrb[0].mxu0
    %v2762 = vadd.f32 %v2510, %v2761
    %v2763 = vpop.f32.mrb[0].mxu0
    %2764 = vmatprep.mubr.f32.mxu0 0.0
    %v2765 = vand.u32 %v329, 4294901760
    %v2766 = vsub.f32 %v329, %v2765
    %2767 = vmatmul.mubr.f32.gmra.mrb[0].mxu0 %v2766
    %v2768 = vpop.f32.mrb[0].mxu0
    %v2769 = vadd.f32 %v2516, %v2768
    %v2770 = vpop.f32.mrb[0].mxu0
    %2771 = vmatprep.mubr.f32.mxu0 0.0
    %v2772 = vand.u32 %v332, 4294901760
    %v2773 = vsub.f32 %v332, %v2772
    %2774 = vmatmul.mubr.f32.gmra.mrb[0].mxu0 %v2773
    %v2775 = vpop.f32.mrb[0].mxu0
    %v2776 = vadd.f32 %v2522, %v2775
    %v2777 = vpop.f32.mrb[0].mxu0
    %2778 = vmatprep.mubr.f32.mxu0 0.0
    %v2779 = vand.u32 %v335, 4294901760
    %v2780 = vsub.f32 %v335, %v2779
    %2781 = vmatmul.mubr.f32.gmra.mrb[0].mxu0 %v2780
    %v2782 = vpop.f32.mrb[0].mxu0
    %v2783 = vadd.f32 %v2528, %v2782
    %v2784 = vpop.f32.mrb[0].mxu0
    %2785 = vmatprep.mubr.f32.mxu0 0.0
    %v2786 = vand.u32 %v338, 4294901760
    %v2787 = vsub.f32 %v338, %v2786
    %2788 = vmatmul.mubr.f32.gmra.mrb[0].mxu0 %v2787
    %v2789 = vpop.f32.mrb[0].mxu0
    %v2790 = vadd.f32 %v2534, %v2789
    %v2791 = vpop.f32.mrb[0].mxu0
    %2792 = vdwg.mxu0
    %2793 = vmatprep.subr.mxu0 0.0
    %v2794 = vand.u32 %v248, 4294901760
    %2795 = vmatpush1.msra.mxu0 %v2794
    %2796 = vmatprep.subr.mxu0 0.0
    %v2797 = vand.u32 %v249, 4294901760
    %2798 = vmatpush1.msra.mxu0 %v2797
    %2799 = vmatprep.subr.mxu0 0.0
    %v2800 = vand.u32 %v250, 4294901760
    %2801 = vmatpush1.msra.mxu0 %v2800
    %2802 = vmatprep.subr.mxu0 0.0
    %v2803 = vand.u32 %v251, 4294901760
    %2804 = vmatpush1.msra.mxu0 %v2803
    %2805 = vmatprep.subr.mxu0 0.0
    %v2806 = vand.u32 %v252, 4294901760
    %2807 = vmatpush1.msra.mxu0 %v2806
    %2808 = vmatprep.subr.mxu0 0.0
    %v2809 = vand.u32 %v253, 4294901760
    %2810 = vmatpush1.msra.mxu0 %v2809
    %2811 = vmatprep.subr.mxu0 0.0
    %v2812 = vand.u32 %v254, 4294901760
    %2813 = vmatpush1.msra.mxu0 %v2812
    %2814 = vmatprep.subr.mxu0 0.0
    %v2815 = vand.u32 %v255, 4294901760
    %2816 = vmatpush1.msra.mxu0 %v2815
    %2817 = vmatprep.subr.mxu0 0.0
    %2818 = vmatpush1.msra.mxu0 0.0
    %2819 = vmatprep.subr.mxu0 0.0
    %2820 = vmatpush1.msra.mxu0 0.0
    %2821 = vmatprep.subr.mxu0 0.0
    %2822 = vmatpush1.msra.mxu0 0.0
    %2823 = vmatprep.subr.mxu0 0.0
    %2824 = vmatpush1.msra.mxu0 0.0
    %2825 = vmatprep.subr.mxu0 0.0
    %2826 = vmatpush1.msra.mxu0 0.0
    %2827 = vmatprep.subr.mxu0 0.0
    %2828 = vmatpush1.msra.mxu0 0.0
    %2829 = vmatprep.subr.mxu0 0.0
    %2830 = vmatpush1.msra.mxu0 0.0
    %2831 = vmatprep.subr.mxu0 0.0
    %2832 = vmatpush1.msra.mxu0 0.0
    %2833 = vmatprep.subr.mxu0 0.0
    %2834 = vmatpush1.msra.mxu0 0.0
    %2835 = vmatprep.subr.mxu0 0.0
    %2836 = vmatpush1.msra.mxu0 0.0
    %2837 = vmatprep.subr.mxu0 0.0
    %2838 = vmatpush1.msra.mxu0 0.0
    %2839 = vmatprep.subr.mxu0 0.0
    %2840 = vmatpush1.msra.mxu0 0.0
    %2841 = vmatprep.subr.mxu0 0.0
    %2842 = vmatpush1.msra.mxu0 0.0
    %2843 = vmatprep.subr.mxu0 0.0
    %2844 = vmatpush1.msra.mxu0 0.0
    %2845 = vmatprep.subr.mxu0 0.0
    %2846 = vmatpush1.msra.mxu0 0.0
    %2847 = vmatprep.subr.mxu0 0.0
    %2848 = vmatpush1.msra.mxu0 0.0
    %2849 = vmatprep.subr.mxu0 0.0
    %2850 = vmatpush1.msra.mxu0 0.0
    %2851 = vmatprep.subr.mxu0 0.0
    %2852 = vmatpush1.msra.mxu0 0.0
    %2853 = vmatprep.subr.mxu0 0.0
    %2854 = vmatpush1.msra.mxu0 0.0
    %2855 = vmatprep.subr.mxu0 0.0
    %2856 = vmatpush1.msra.mxu0 0.0
    %2857 = vmatprep.subr.mxu0 0.0
    %2858 = vmatpush1.msra.mxu0 0.0
    %2859 = vmatprep.subr.mxu0 0.0
    %2860 = vmatpush1.msra.mxu0 0.0
    %2861 = vmatprep.subr.mxu0 0.0
    %2862 = vmatpush1.msra.mxu0 0.0
    %2863 = vmatprep.subr.mxu0 0.0
    %2864 = vmatpush1.msra.mxu0 0.0
    %2865 = vmatprep.mubr.f32.mxu0 0.0
    %v2866 = vand.u32 %v266, 4294901760
    %v2867 = vsub.f32 %v266, %v2866
    %v2868 = vand.u32 %v2867, 4294901760
    %2869 = vmatmul.mubr.f32.gmra.mrb[0].mxu0 %v2868
    %v2870 = vpop.f32.mrb[0].mxu0
    %v2871 = vadd.f32 %v2622, %v2870
    %v2872 = vpop.f32.mrb[0].mxu0
    %2873 = vmatprep.mubr.f32.mxu0 0.0
    %v2874 = vand.u32 %v269, 4294901760
    %v2875 = vsub.f32 %v269, %v2874
    %v2876 = vand.u32 %v2875, 4294901760
    %2877 = vmatmul.mubr.f32.gmra.mrb[0].mxu0 %v2876
    %v2878 = vpop.f32.mrb[0].mxu0
    %v2879 = vadd.f32 %v2629, %v2878
    %v2880 = vpop.f32.mrb[0].mxu0
    %2881 = vmatprep.mubr.f32.mxu0 0.0
    %v2882 = vand.u32 %v272, 4294901760
    %v2883 = vsub.f32 %v272, %v2882
    %v2884 = vand.u32 %v2883, 4294901760
    %2885 = vmatmul.mubr.f32.gmra.mrb[0].mxu0 %v2884
    %v2886 = vpop.f32.mrb[0].mxu0
    %v2887 = vadd.f32 %v2636, %v2886
    %v2888 = vpop.f32.mrb[0].mxu0
    %2889 = vmatprep.mubr.f32.mxu0 0.0
    %v2890 = vand.u32 %v275, 4294901760
    %v2891 = vsub.f32 %v275, %v2890
    %v2892 = vand.u32 %v2891, 4294901760
    %2893 = vmatmul.mubr.f32.gmra.mrb[0].mxu0 %v2892
    %v2894 = vpop.f32.mrb[0].mxu0
    %v2895 = vadd.f32 %v2643, %v2894
    %v2896 = vpop.f32.mrb[0].mxu0
    %2897 = vmatprep.mubr.f32.mxu0 0.0
    %v2898 = vand.u32 %v278, 4294901760
    %v2899 = vsub.f32 %v278, %v2898
    %v2900 = vand.u32 %v2899, 4294901760
    %2901 = vmatmul.mubr.f32.gmra.mrb[0].mxu0 %v2900
    %v2902 = vpop.f32.mrb[0].mxu0
    %v2903 = vadd.f32 %v2650, %v2902
    %v2904 = vpop.f32.mrb[0].mxu0
    %2905 = vmatprep.mubr.f32.mxu0 0.0
    %v2906 = vand.u32 %v281, 4294901760
    %v2907 = vsub.f32 %v281, %v2906
    %v2908 = vand.u32 %v2907, 4294901760
    %2909 = vmatmul.mubr.f32.gmra.mrb[0].mxu0 %v2908
    %v2910 = vpop.f32.mrb[0].mxu0
    %v2911 = vadd.f32 %v2657, %v2910
    %v2912 = vpop.f32.mrb[0].mxu0
    %2913 = vmatprep.mubr.f32.mxu0 0.0
    %v2914 = vand.u32 %v284, 4294901760
    %v2915 = vsub.f32 %v284, %v2914
    %v2916 = vand.u32 %v2915, 4294901760
    %2917 = vmatmul.mubr.f32.gmra.mrb[0].mxu0 %v2916
    %v2918 = vpop.f32.mrb[0].mxu0
    %v2919 = vadd.f32 %v2664, %v2918
    %v2920 = vpop.f32.mrb[0].mxu0
    %2921 = vmatprep.mubr.f32.mxu0 0.0
    %v2922 = vand.u32 %v287, 4294901760
    %v2923 = vsub.f32 %v287, %v2922
    %v2924 = vand.u32 %v2923, 4294901760
    %2925 = vmatmul.mubr.f32.gmra.mrb[0].mxu0 %v2924
    %v2926 = vpop.f32.mrb[0].mxu0
    %v2927 = vadd.f32 %v2671, %v2926
    %v2928 = vpop.f32.mrb[0].mxu0
    %2929 = vmatprep.mubr.f32.mxu0 0.0
    %v2930 = vand.u32 %v290, 4294901760
    %v2931 = vsub.f32 %v290, %v2930
    %v2932 = vand.u32 %v2931, 4294901760
    %2933 = vmatmul.mubr.f32.gmra.mrb[0].mxu0 %v2932
    %v2934 = vpop.f32.mrb[0].mxu0
    %v2935 = vadd.f32 %v2678, %v2934
    %v2936 = vpop.f32.mrb[0].mxu0
    %2937 = vmatprep.mubr.f32.mxu0 0.0
    %v2938 = vand.u32 %v293, 4294901760
    %v2939 = vsub.f32 %v293, %v2938
    %v2940 = vand.u32 %v2939, 4294901760
    %2941 = vmatmul.mubr.f32.gmra.mrb[0].mxu0 %v2940
    %v2942 = vpop.f32.mrb[0].mxu0
    %v2943 = vadd.f32 %v2685, %v2942
    %v2944 = vpop.f32.mrb[0].mxu0
    %2945 = vmatprep.mubr.f32.mxu0 0.0
    %v2946 = vand.u32 %v296, 4294901760
    %v2947 = vsub.f32 %v296, %v2946
    %v2948 = vand.u32 %v2947, 4294901760
    %2949 = vmatmul.mubr.f32.gmra.mrb[0].mxu0 %v2948
    %v2950 = vpop.f32.mrb[0].mxu0
    %v2951 = vadd.f32 %v2692, %v2950
    %v2952 = vpop.f32.mrb[0].mxu0
    %2953 = vmatprep.mubr.f32.mxu0 0.0
    %v2954 = vand.u32 %v299, 4294901760
    %v2955 = vsub.f32 %v299, %v2954
    %v2956 = vand.u32 %v2955, 4294901760
    %2957 = vmatmul.mubr.f32.gmra.mrb[0].mxu0 %v2956
    %v2958 = vpop.f32.mrb[0].mxu0
    %v2959 = vadd.f32 %v2699, %v2958
    %v2960 = vpop.f32.mrb[0].mxu0
    %2961 = vmatprep.mubr.f32.mxu0 0.0
    %v2962 = vand.u32 %v302, 4294901760
    %v2963 = vsub.f32 %v302, %v2962
    %v2964 = vand.u32 %v2963, 4294901760
    %2965 = vmatmul.mubr.f32.gmra.mrb[0].mxu0 %v2964
    %v2966 = vpop.f32.mrb[0].mxu0
    %v2967 = vadd.f32 %v2706, %v2966
    %v2968 = vpop.f32.mrb[0].mxu0
    %2969 = vmatprep.mubr.f32.mxu0 0.0
    %v2970 = vand.u32 %v305, 4294901760
    %v2971 = vsub.f32 %v305, %v2970
    %v2972 = vand.u32 %v2971, 4294901760
    %2973 = vmatmul.mubr.f32.gmra.mrb[0].mxu0 %v2972
    %v2974 = vpop.f32.mrb[0].mxu0
    %v2975 = vadd.f32 %v2713, %v2974
    %v2976 = vpop.f32.mrb[0].mxu0
    %2977 = vmatprep.mubr.f32.mxu0 0.0
    %v2978 = vand.u32 %v308, 4294901760
    %v2979 = vsub.f32 %v308, %v2978
    %v2980 = vand.u32 %v2979, 4294901760
    %2981 = vmatmul.mubr.f32.gmra.mrb[0].mxu0 %v2980
    %v2982 = vpop.f32.mrb[0].mxu0
    %v2983 = vadd.f32 %v2720, %v2982
    %v2984 = vpop.f32.mrb[0].mxu0
    %2985 = vmatprep.mubr.f32.mxu0 0.0
    %v2986 = vand.u32 %v311, 4294901760
    %v2987 = vsub.f32 %v311, %v2986
    %v2988 = vand.u32 %v2987, 4294901760
    %2989 = vmatmul.mubr.f32.gmra.mrb[0].mxu0 %v2988
    %v2990 = vpop.f32.mrb[0].mxu0
    %v2991 = vadd.f32 %v2727, %v2990
    %v2992 = vpop.f32.mrb[0].mxu0
    %2993 = vmatprep.mubr.f32.mxu0 0.0
    %v2994 = vand.u32 %v314, 4294901760
    %v2995 = vsub.f32 %v314, %v2994
    %v2996 = vand.u32 %v2995, 4294901760
    %2997 = vmatmul.mubr.f32.gmra.mrb[0].mxu0 %v2996
    %v2998 = vpop.f32.mrb[0].mxu0
    %v2999 = vadd.f32 %v2734, %v2998
    %v3000 = vpop.f32.mrb[0].mxu0
    %3001 = vmatprep.mubr.f32.mxu0 0.0
    %v3002 = vand.u32 %v317, 4294901760
    %v3003 = vsub.f32 %v317, %v3002
    %v3004 = vand.u32 %v3003, 4294901760
    %3005 = vmatmul.mubr.f32.gmra.mrb[0].mxu0 %v3004
    %v3006 = vpop.f32.mrb[0].mxu0
    %v3007 = vadd.f32 %v2741, %v3006
    %v3008 = vpop.f32.mrb[0].mxu0
    %3009 = vmatprep.mubr.f32.mxu0 0.0
    %v3010 = vand.u32 %v320, 4294901760
    %v3011 = vsub.f32 %v320, %v3010
    %v3012 = vand.u32 %v3011, 4294901760
    %3013 = vmatmul.mubr.f32.gmra.mrb[0].mxu0 %v3012
    %v3014 = vpop.f32.mrb[0].mxu0
    %v3015 = vadd.f32 %v2748, %v3014
    %v3016 = vpop.f32.mrb[0].mxu0
    %3017 = vmatprep.mubr.f32.mxu0 0.0
    %v3018 = vand.u32 %v323, 4294901760
    %v3019 = vsub.f32 %v323, %v3018
    %v3020 = vand.u32 %v3019, 4294901760
    %3021 = vmatmul.mubr.f32.gmra.mrb[0].mxu0 %v3020
    %v3022 = vpop.f32.mrb[0].mxu0
    %v3023 = vadd.f32 %v2755, %v3022
    %v3024 = vpop.f32.mrb[0].mxu0
    %3025 = vmatprep.mubr.f32.mxu0 0.0
    %v3026 = vand.u32 %v326, 4294901760
    %v3027 = vsub.f32 %v326, %v3026
    %v3028 = vand.u32 %v3027, 4294901760
    %3029 = vmatmul.mubr.f32.gmra.mrb[0].mxu0 %v3028
    %v3030 = vpop.f32.mrb[0].mxu0
    %v3031 = vadd.f32 %v2762, %v3030
    %v3032 = vpop.f32.mrb[0].mxu0
    %3033 = vmatprep.mubr.f32.mxu0 0.0
    %v3034 = vand.u32 %v329, 4294901760
    %v3035 = vsub.f32 %v329, %v3034
    %v3036 = vand.u32 %v3035, 4294901760
    %3037 = vmatmul.mubr.f32.gmra.mrb[0].mxu0 %v3036
    %v3038 = vpop.f32.mrb[0].mxu0
    %v3039 = vadd.f32 %v2769, %v3038
    %v3040 = vpop.f32.mrb[0].mxu0
    %3041 = vmatprep.mubr.f32.mxu0 0.0
    %v3042 = vand.u32 %v332, 4294901760
    %v3043 = vsub.f32 %v332, %v3042
    %v3044 = vand.u32 %v3043, 4294901760
    %3045 = vmatmul.mubr.f32.gmra.mrb[0].mxu0 %v3044
    %v3046 = vpop.f32.mrb[0].mxu0
    %v3047 = vadd.f32 %v2776, %v3046
    %v3048 = vpop.f32.mrb[0].mxu0
    %3049 = vmatprep.mubr.f32.mxu0 0.0
    %v3050 = vand.u32 %v335, 4294901760
    %v3051 = vsub.f32 %v335, %v3050
    %v3052 = vand.u32 %v3051, 4294901760
    %3053 = vmatmul.mubr.f32.gmra.mrb[0].mxu0 %v3052
    %v3054 = vpop.f32.mrb[0].mxu0
    %v3055 = vadd.f32 %v2783, %v3054
    %v3056 = vpop.f32.mrb[0].mxu0
    %3057 = vmatprep.mubr.f32.mxu0 0.0
    %v3058 = vand.u32 %v338, 4294901760
    %v3059 = vsub.f32 %v338, %v3058
    %v3060 = vand.u32 %v3059, 4294901760
    %3061 = vmatmul.mubr.f32.gmra.mrb[0].mxu0 %v3060
    %v3062 = vpop.f32.mrb[0].mxu0
    %v3063 = vadd.f32 %v2790, %v3062
    %v3064 = vpop.f32.mrb[0].mxu0
    %3065 = vdwg.mxu0
    %3066 = vmatprep.subr.mxu0 0.0
    %v3067 = vand.u32 %v248, 4294901760
    %v3068 = vsub.f32 %v248, %v3067
    %v3069 = vand.u32 %v3068, 4294901760
    %3070 = vmatpush1.msra.mxu0 %v3069
    %3071 = vmatprep.subr.mxu0 0.0
    %v3072 = vand.u32 %v249, 4294901760
    %v3073 = vsub.f32 %v249, %v3072
    %v3074 = vand.u32 %v3073, 4294901760
    %3075 = vmatpush1.msra.mxu0 %v3074
    %3076 = vmatprep.subr.mxu0 0.0
    %v3077 = vand.u32 %v250, 4294901760
    %v3078 = vsub.f32 %v250, %v3077
    %v3079 = vand.u32 %v3078, 4294901760
    %3080 = vmatpush1.msra.mxu0 %v3079
    %3081 = vmatprep.subr.mxu0 0.0
    %v3082 = vand.u32 %v251, 4294901760
    %v3083 = vsub.f32 %v251, %v3082
    %v3084 = vand.u32 %v3083, 4294901760
    %3085 = vmatpush1.msra.mxu0 %v3084
    %3086 = vmatprep.subr.mxu0 0.0
    %v3087 = vand.u32 %v252, 4294901760
    %v3088 = vsub.f32 %v252, %v3087
    %v3089 = vand.u32 %v3088, 4294901760
    %3090 = vmatpush1.msra.mxu0 %v3089
    %3091 = vmatprep.subr.mxu0 0.0
    %v3092 = vand.u32 %v253, 4294901760
    %v3093 = vsub.f32 %v253, %v3092
    %v3094 = vand.u32 %v3093, 4294901760
    %3095 = vmatpush1.msra.mxu0 %v3094
    %3096 = vmatprep.subr.mxu0 0.0
    %v3097 = vand.u32 %v254, 4294901760
    %v3098 = vsub.f32 %v254, %v3097
    %v3099 = vand.u32 %v3098, 4294901760
    %3100 = vmatpush1.msra.mxu0 %v3099
    %3101 = vmatprep.subr.mxu0 0.0
    %v3102 = vand.u32 %v255, 4294901760
    %v3103 = vsub.f32 %v255, %v3102
    %v3104 = vand.u32 %v3103, 4294901760
    %3105 = vmatpush1.msra.mxu0 %v3104
    %3106 = vmatprep.subr.mxu0 0.0
    %3107 = vmatpush1.msra.mxu0 0.0
    %3108 = vmatprep.subr.mxu0 0.0
    %3109 = vmatpush1.msra.mxu0 0.0
    %3110 = vmatprep.subr.mxu0 0.0
    %3111 = vmatpush1.msra.mxu0 0.0
    %3112 = vmatprep.subr.mxu0 0.0
    %3113 = vmatpush1.msra.mxu0 0.0
    %3114 = vmatprep.subr.mxu0 0.0
    %3115 = vmatpush1.msra.mxu0 0.0
    %3116 = vmatprep.subr.mxu0 0.0
    %3117 = vmatpush1.msra.mxu0 0.0
    %3118 = vmatprep.subr.mxu0 0.0
    %3119 = vmatpush1.msra.mxu0 0.0
    %3120 = vmatprep.subr.mxu0 0.0
    %3121 = vmatpush1.msra.mxu0 0.0
    %3122 = vmatprep.subr.mxu0 0.0
    %3123 = vmatpush1.msra.mxu0 0.0
    %3124 = vmatprep.subr.mxu0 0.0
    %3125 = vmatpush1.msra.mxu0 0.0
    %3126 = vmatprep.subr.mxu0 0.0
    %3127 = vmatpush1.msra.mxu0 0.0
    %3128 = vmatprep.subr.mxu0 0.0
    %3129 = vmatpush1.msra.mxu0 0.0
    %3130 = vmatprep.subr.mxu0 0.0
    %3131 = vmatpush1.msra.mxu0 0.0
    %3132 = vmatprep.subr.mxu0 0.0
    %3133 = vmatpush1.msra.mxu0 0.0
    %3134 = vmatprep.subr.mxu0 0.0
    %3135 = vmatpush1.msra.mxu0 0.0
    %3136 = vmatprep.subr.mxu0 0.0
    %3137 = vmatpush1.msra.mxu0 0.0
    %3138 = vmatprep.subr.mxu0 0.0
    %3139 = vmatpush1.msra.mxu0 0.0
    %3140 = vmatprep.subr.mxu0 0.0
    %3141 = vmatpush1.msra.mxu0 0.0
    %3142 = vmatprep.subr.mxu0 0.0
    %3143 = vmatpush1.msra.mxu0 0.0
    %3144 = vmatprep.subr.mxu0 0.0
    %3145 = vmatpush1.msra.mxu0 0.0
    %3146 = vmatprep.subr.mxu0 0.0
    %3147 = vmatpush1.msra.mxu0 0.0
    %3148 = vmatprep.subr.mxu0 0.0
    %3149 = vmatpush1.msra.mxu0 0.0
    %3150 = vmatprep.subr.mxu0 0.0
    %3151 = vmatpush1.msra.mxu0 0.0
    %3152 = vmatprep.subr.mxu0 0.0
    %3153 = vmatpush1.msra.mxu0 0.0
    %3154 = vmatprep.mubr.f32.mxu0 0.0
    %v3155 = vand.u32 %v266, 4294901760
    %3156 = vmatmul.mubr.f32.gmra.mrb[0].mxu0 %v3155
    %v3157 = vpop.f32.mrb[0].mxu0
    %v3158 = vadd.f32 %v2871, %v3157
    %v3159 = vpop.f32.mrb[0].mxu0
    %3160 = vmatprep.mubr.f32.mxu0 0.0
    %v3161 = vand.u32 %v269, 4294901760
    %3162 = vmatmul.mubr.f32.gmra.mrb[0].mxu0 %v3161
    %v3163 = vpop.f32.mrb[0].mxu0
    %v3164 = vadd.f32 %v2879, %v3163
    %v3165 = vpop.f32.mrb[0].mxu0
    %3166 = vmatprep.mubr.f32.mxu0 0.0
    %v3167 = vand.u32 %v272, 4294901760
    %3168 = vmatmul.mubr.f32.gmra.mrb[0].mxu0 %v3167
    %v3169 = vpop.f32.mrb[0].mxu0
    %v3170 = vadd.f32 %v2887, %v3169
    %v3171 = vpop.f32.mrb[0].mxu0
    %3172 = vmatprep.mubr.f32.mxu0 0.0
    %v3173 = vand.u32 %v275, 4294901760
    %3174 = vmatmul.mubr.f32.gmra.mrb[0].mxu0 %v3173
    %v3175 = vpop.f32.mrb[0].mxu0
    %v3176 = vadd.f32 %v2895, %v3175
    %v3177 = vpop.f32.mrb[0].mxu0
    %3178 = vmatprep.mubr.f32.mxu0 0.0
    %v3179 = vand.u32 %v278, 4294901760
    %3180 = vmatmul.mubr.f32.gmra.mrb[0].mxu0 %v3179
    %v3181 = vpop.f32.mrb[0].mxu0
    %v3182 = vadd.f32 %v2903, %v3181
    %v3183 = vpop.f32.mrb[0].mxu0
    %3184 = vmatprep.mubr.f32.mxu0 0.0
    %v3185 = vand.u32 %v281, 4294901760
    %3186 = vmatmul.mubr.f32.gmra.mrb[0].mxu0 %v3185
    %v3187 = vpop.f32.mrb[0].mxu0
    %v3188 = vadd.f32 %v2911, %v3187
    %v3189 = vpop.f32.mrb[0].mxu0
    %3190 = vmatprep.mubr.f32.mxu0 0.0
    %v3191 = vand.u32 %v284, 4294901760
    %3192 = vmatmul.mubr.f32.gmra.mrb[0].mxu0 %v3191
    %v3193 = vpop.f32.mrb[0].mxu0
    %v3194 = vadd.f32 %v2919, %v3193
    %v3195 = vpop.f32.mrb[0].mxu0
    %3196 = vmatprep.mubr.f32.mxu0 0.0
    %v3197 = vand.u32 %v287, 4294901760
    %3198 = vmatmul.mubr.f32.gmra.mrb[0].mxu0 %v3197
    %v3199 = vpop.f32.mrb[0].mxu0
    %v3200 = vadd.f32 %v2927, %v3199
    %v3201 = vpop.f32.mrb[0].mxu0
    %3202 = vmatprep.mubr.f32.mxu0 0.0
    %v3203 = vand.u32 %v290, 4294901760
    %3204 = vmatmul.mubr.f32.gmra.mrb[0].mxu0 %v3203
    %v3205 = vpop.f32.mrb[0].mxu0
    %v3206 = vadd.f32 %v2935, %v3205
    %v3207 = vpop.f32.mrb[0].mxu0
    %3208 = vmatprep.mubr.f32.mxu0 0.0
    %v3209 = vand.u32 %v293, 4294901760
    %3210 = vmatmul.mubr.f32.gmra.mrb[0].mxu0 %v3209
    %v3211 = vpop.f32.mrb[0].mxu0
    %v3212 = vadd.f32 %v2943, %v3211
    %v3213 = vpop.f32.mrb[0].mxu0
    %3214 = vmatprep.mubr.f32.mxu0 0.0
    %v3215 = vand.u32 %v296, 4294901760
    %3216 = vmatmul.mubr.f32.gmra.mrb[0].mxu0 %v3215
    %v3217 = vpop.f32.mrb[0].mxu0
    %v3218 = vadd.f32 %v2951, %v3217
    %v3219 = vpop.f32.mrb[0].mxu0
    %3220 = vmatprep.mubr.f32.mxu0 0.0
    %v3221 = vand.u32 %v299, 4294901760
    %3222 = vmatmul.mubr.f32.gmra.mrb[0].mxu0 %v3221
    %v3223 = vpop.f32.mrb[0].mxu0
    %v3224 = vadd.f32 %v2959, %v3223
    %v3225 = vpop.f32.mrb[0].mxu0
    %3226 = vmatprep.mubr.f32.mxu0 0.0
    %v3227 = vand.u32 %v302, 4294901760
    %3228 = vmatmul.mubr.f32.gmra.mrb[0].mxu0 %v3227
    %v3229 = vpop.f32.mrb[0].mxu0
    %v3230 = vadd.f32 %v2967, %v3229
    %v3231 = vpop.f32.mrb[0].mxu0
    %3232 = vmatprep.mubr.f32.mxu0 0.0
    %v3233 = vand.u32 %v305, 4294901760
    %3234 = vmatmul.mubr.f32.gmra.mrb[0].mxu0 %v3233
    %v3235 = vpop.f32.mrb[0].mxu0
    %v3236 = vadd.f32 %v2975, %v3235
    %v3237 = vpop.f32.mrb[0].mxu0
    %3238 = vmatprep.mubr.f32.mxu0 0.0
    %v3239 = vand.u32 %v308, 4294901760
    %3240 = vmatmul.mubr.f32.gmra.mrb[0].mxu0 %v3239
    %v3241 = vpop.f32.mrb[0].mxu0
    %v3242 = vadd.f32 %v2983, %v3241
    %v3243 = vpop.f32.mrb[0].mxu0
    %3244 = vmatprep.mubr.f32.mxu0 0.0
    %v3245 = vand.u32 %v311, 4294901760
    %3246 = vmatmul.mubr.f32.gmra.mrb[0].mxu0 %v3245
    %v3247 = vpop.f32.mrb[0].mxu0
    %v3248 = vadd.f32 %v2991, %v3247
    %v3249 = vpop.f32.mrb[0].mxu0
    %3250 = vmatprep.mubr.f32.mxu0 0.0
    %v3251 = vand.u32 %v314, 4294901760
    %3252 = vmatmul.mubr.f32.gmra.mrb[0].mxu0 %v3251
    %v3253 = vpop.f32.mrb[0].mxu0
    %v3254 = vadd.f32 %v2999, %v3253
    %v3255 = vpop.f32.mrb[0].mxu0
    %3256 = vmatprep.mubr.f32.mxu0 0.0
    %v3257 = vand.u32 %v317, 4294901760
    %3258 = vmatmul.mubr.f32.gmra.mrb[0].mxu0 %v3257
    %v3259 = vpop.f32.mrb[0].mxu0
    %v3260 = vadd.f32 %v3007, %v3259
    %v3261 = vpop.f32.mrb[0].mxu0
    %3262 = vmatprep.mubr.f32.mxu0 0.0
    %v3263 = vand.u32 %v320, 4294901760
    %3264 = vmatmul.mubr.f32.gmra.mrb[0].mxu0 %v3263
    %v3265 = vpop.f32.mrb[0].mxu0
    %v3266 = vadd.f32 %v3015, %v3265
    %v3267 = vpop.f32.mrb[0].mxu0
    %3268 = vmatprep.mubr.f32.mxu0 0.0
    %v3269 = vand.u32 %v323, 4294901760
    %3270 = vmatmul.mubr.f32.gmra.mrb[0].mxu0 %v3269
    %v3271 = vpop.f32.mrb[0].mxu0
    %v3272 = vadd.f32 %v3023, %v3271
    %v3273 = vpop.f32.mrb[0].mxu0
    %3274 = vmatprep.mubr.f32.mxu0 0.0
    %v3275 = vand.u32 %v326, 4294901760
    %3276 = vmatmul.mubr.f32.gmra.mrb[0].mxu0 %v3275
    %v3277 = vpop.f32.mrb[0].mxu0
    %v3278 = vadd.f32 %v3031, %v3277
    %v3279 = vpop.f32.mrb[0].mxu0
    %3280 = vmatprep.mubr.f32.mxu0 0.0
    %v3281 = vand.u32 %v329, 4294901760
    %3282 = vmatmul.mubr.f32.gmra.mrb[0].mxu0 %v3281
    %v3283 = vpop.f32.mrb[0].mxu0
    %v3284 = vadd.f32 %v3039, %v3283
    %v3285 = vpop.f32.mrb[0].mxu0
    %3286 = vmatprep.mubr.f32.mxu0 0.0
    %v3287 = vand.u32 %v332, 4294901760
    %3288 = vmatmul.mubr.f32.gmra.mrb[0].mxu0 %v3287
    %v3289 = vpop.f32.mrb[0].mxu0
    %v3290 = vadd.f32 %v3047, %v3289
    %v3291 = vpop.f32.mrb[0].mxu0
    %3292 = vmatprep.mubr.f32.mxu0 0.0
    %v3293 = vand.u32 %v335, 4294901760
    %3294 = vmatmul.mubr.f32.gmra.mrb[0].mxu0 %v3293
    %v3295 = vpop.f32.mrb[0].mxu0
    %v3296 = vadd.f32 %v3055, %v3295
    %v3297 = vpop.f32.mrb[0].mxu0
    %3298 = vmatprep.mubr.f32.mxu0 0.0
    %v3299 = vand.u32 %v338, 4294901760
    %3300 = vmatmul.mubr.f32.gmra.mrb[0].mxu0 %v3299
    %v3301 = vpop.f32.mrb[0].mxu0
    %v3302 = vadd.f32 %v3063, %v3301
    %v3303 = vpop.f32.mrb[0].mxu0
    %3304 = vdwg.mxu0
    %3305 = vmatprep.subr.mxu0 0.0
    %v3306 = vand.u32 %v248, 4294901760
    %3307 = vmatpush1.msra.mxu0 %v3306
    %3308 = vmatprep.subr.mxu0 0.0
    %v3309 = vand.u32 %v249, 4294901760
    %3310 = vmatpush1.msra.mxu0 %v3309
    %3311 = vmatprep.subr.mxu0 0.0
    %v3312 = vand.u32 %v250, 4294901760
    %3313 = vmatpush1.msra.mxu0 %v3312
    %3314 = vmatprep.subr.mxu0 0.0
    %v3315 = vand.u32 %v251, 4294901760
    %3316 = vmatpush1.msra.mxu0 %v3315
    %3317 = vmatprep.subr.mxu0 0.0
    %v3318 = vand.u32 %v252, 4294901760
    %3319 = vmatpush1.msra.mxu0 %v3318
    %3320 = vmatprep.subr.mxu0 0.0
    %v3321 = vand.u32 %v253, 4294901760
    %3322 = vmatpush1.msra.mxu0 %v3321
    %3323 = vmatprep.subr.mxu0 0.0
    %v3324 = vand.u32 %v254, 4294901760
    %3325 = vmatpush1.msra.mxu0 %v3324
    %3326 = vmatprep.subr.mxu0 0.0
    %v3327 = vand.u32 %v255, 4294901760
    %3328 = vmatpush1.msra.mxu0 %v3327
    %3329 = vmatprep.subr.mxu0 0.0
    %3330 = vmatpush1.msra.mxu0 0.0
    %3331 = vmatprep.subr.mxu0 0.0
    %3332 = vmatpush1.msra.mxu0 0.0
    %3333 = vmatprep.subr.mxu0 0.0
    %3334 = vmatpush1.msra.mxu0 0.0
    %3335 = vmatprep.subr.mxu0 0.0
    %3336 = vmatpush1.msra.mxu0 0.0
    %3337 = vmatprep.subr.mxu0 0.0
    %3338 = vmatpush1.msra.mxu0 0.0
    %3339 = vmatprep.subr.mxu0 0.0
    %3340 = vmatpush1.msra.mxu0 0.0
    %3341 = vmatprep.subr.mxu0 0.0
    %3342 = vmatpush1.msra.mxu0 0.0
    %3343 = vmatprep.subr.mxu0 0.0
    %3344 = vmatpush1.msra.mxu0 0.0
    %3345 = vmatprep.subr.mxu0 0.0
    %3346 = vmatpush1.msra.mxu0 0.0
    %3347 = vmatprep.subr.mxu0 0.0
    %3348 = vmatpush1.msra.mxu0 0.0
    %3349 = vmatprep.subr.mxu0 0.0
    %3350 = vmatpush1.msra.mxu0 0.0
    %3351 = vmatprep.subr.mxu0 0.0
    %3352 = vmatpush1.msra.mxu0 0.0
    %3353 = vmatprep.subr.mxu0 0.0
    %3354 = vmatpush1.msra.mxu0 0.0
    %3355 = vmatprep.subr.mxu0 0.0
    %3356 = vmatpush1.msra.mxu0 0.0
    %3357 = vmatprep.subr.mxu0 0.0
    %3358 = vmatpush1.msra.mxu0 0.0
    %3359 = vmatprep.subr.mxu0 0.0
    %3360 = vmatpush1.msra.mxu0 0.0
    %3361 = vmatprep.subr.mxu0 0.0
    %3362 = vmatpush1.msra.mxu0 0.0
    %3363 = vmatprep.subr.mxu0 0.0
    %3364 = vmatpush1.msra.mxu0 0.0
    %3365 = vmatprep.subr.mxu0 0.0
    %3366 = vmatpush1.msra.mxu0 0.0
    %3367 = vmatprep.subr.mxu0 0.0
    %3368 = vmatpush1.msra.mxu0 0.0
    %3369 = vmatprep.subr.mxu0 0.0
    %3370 = vmatpush1.msra.mxu0 0.0
    %3371 = vmatprep.subr.mxu0 0.0
    %3372 = vmatpush1.msra.mxu0 0.0
    %3373 = vmatprep.subr.mxu0 0.0
    %3374 = vmatpush1.msra.mxu0 0.0
    %3375 = vmatprep.subr.mxu0 0.0
    %3376 = vmatpush1.msra.mxu0 0.0
    %3377 = vmatprep.mubr.f32.mxu0 0.0
    %v3378 = vand.u32 %v266, 4294901760
    %3379 = vmatmul.mubr.f32.gmra.mrb[0].mxu0 %v3378
    %v3380 = vpop.f32.mrb[0].mxu0
    %v3381 = vadd.f32 %v3158, %v3380
    %v3382 = vpop.f32.mrb[0].mxu0
    %3383 = vmatprep.mubr.f32.mxu0 0.0
    %v3384 = vand.u32 %v269, 4294901760
    %3385 = vmatmul.mubr.f32.gmra.mrb[0].mxu0 %v3384
    %v3386 = vpop.f32.mrb[0].mxu0
    %v3387 = vadd.f32 %v3164, %v3386
    %v3388 = vpop.f32.mrb[0].mxu0
    %3389 = vmatprep.mubr.f32.mxu0 0.0
    %v3390 = vand.u32 %v272, 4294901760
    %3391 = vmatmul.mubr.f32.gmra.mrb[0].mxu0 %v3390
    %v3392 = vpop.f32.mrb[0].mxu0
    %v3393 = vadd.f32 %v3170, %v3392
    %v3394 = vpop.f32.mrb[0].mxu0
    %3395 = vmatprep.mubr.f32.mxu0 0.0
    %v3396 = vand.u32 %v275, 4294901760
    %3397 = vmatmul.mubr.f32.gmra.mrb[0].mxu0 %v3396
    %v3398 = vpop.f32.mrb[0].mxu0
    %v3399 = vadd.f32 %v3176, %v3398
    %v3400 = vpop.f32.mrb[0].mxu0
    %3401 = vmatprep.mubr.f32.mxu0 0.0
    %v3402 = vand.u32 %v278, 4294901760
    %3403 = vmatmul.mubr.f32.gmra.mrb[0].mxu0 %v3402
    %v3404 = vpop.f32.mrb[0].mxu0
    %v3405 = vadd.f32 %v3182, %v3404
    %v3406 = vpop.f32.mrb[0].mxu0
    %3407 = vmatprep.mubr.f32.mxu0 0.0
    %v3408 = vand.u32 %v281, 4294901760
    %3409 = vmatmul.mubr.f32.gmra.mrb[0].mxu0 %v3408
    %v3410 = vpop.f32.mrb[0].mxu0
    %v3411 = vadd.f32 %v3188, %v3410
    %v3412 = vpop.f32.mrb[0].mxu0
    %3413 = vmatprep.mubr.f32.mxu0 0.0
    %v3414 = vand.u32 %v284, 4294901760
    %3415 = vmatmul.mubr.f32.gmra.mrb[0].mxu0 %v3414
    %v3416 = vpop.f32.mrb[0].mxu0
    %v3417 = vadd.f32 %v3194, %v3416
    %v3418 = vpop.f32.mrb[0].mxu0
    %3419 = vmatprep.mubr.f32.mxu0 0.0
    %v3420 = vand.u32 %v287, 4294901760
    %3421 = vmatmul.mubr.f32.gmra.mrb[0].mxu0 %v3420
    %v3422 = vpop.f32.mrb[0].mxu0
    %v3423 = vadd.f32 %v3200, %v3422
    %v3424 = vpop.f32.mrb[0].mxu0
    %3425 = vmatprep.mubr.f32.mxu0 0.0
    %v3426 = vand.u32 %v290, 4294901760
    %3427 = vmatmul.mubr.f32.gmra.mrb[0].mxu0 %v3426
    %v3428 = vpop.f32.mrb[0].mxu0
    %v3429 = vadd.f32 %v3206, %v3428
    %v3430 = vpop.f32.mrb[0].mxu0
    %3431 = vmatprep.mubr.f32.mxu0 0.0
    %v3432 = vand.u32 %v293, 4294901760
    %3433 = vmatmul.mubr.f32.gmra.mrb[0].mxu0 %v3432
    %v3434 = vpop.f32.mrb[0].mxu0
    %v3435 = vadd.f32 %v3212, %v3434
    %v3436 = vpop.f32.mrb[0].mxu0
    %3437 = vmatprep.mubr.f32.mxu0 0.0
    %v3438 = vand.u32 %v296, 4294901760
    %3439 = vmatmul.mubr.f32.gmra.mrb[0].mxu0 %v3438
    %v3440 = vpop.f32.mrb[0].mxu0
    %v3441 = vadd.f32 %v3218, %v3440
    %v3442 = vpop.f32.mrb[0].mxu0
    %3443 = vmatprep.mubr.f32.mxu0 0.0
    %v3444 = vand.u32 %v299, 4294901760
    %3445 = vmatmul.mubr.f32.gmra.mrb[0].mxu0 %v3444
    %v3446 = vpop.f32.mrb[0].mxu0
    %v3447 = vadd.f32 %v3224, %v3446
    %v3448 = vpop.f32.mrb[0].mxu0
    %3449 = vmatprep.mubr.f32.mxu0 0.0
    %v3450 = vand.u32 %v302, 4294901760
    %3451 = vmatmul.mubr.f32.gmra.mrb[0].mxu0 %v3450
    %v3452 = vpop.f32.mrb[0].mxu0
    %v3453 = vadd.f32 %v3230, %v3452
    %v3454 = vpop.f32.mrb[0].mxu0
    %3455 = vmatprep.mubr.f32.mxu0 0.0
    %v3456 = vand.u32 %v305, 4294901760
    %3457 = vmatmul.mubr.f32.gmra.mrb[0].mxu0 %v3456
    %v3458 = vpop.f32.mrb[0].mxu0
    %v3459 = vadd.f32 %v3236, %v3458
    %v3460 = vpop.f32.mrb[0].mxu0
    %3461 = vmatprep.mubr.f32.mxu0 0.0
    %v3462 = vand.u32 %v308, 4294901760
    %3463 = vmatmul.mubr.f32.gmra.mrb[0].mxu0 %v3462
    %v3464 = vpop.f32.mrb[0].mxu0
    %v3465 = vadd.f32 %v3242, %v3464
    %v3466 = vpop.f32.mrb[0].mxu0
    %3467 = vmatprep.mubr.f32.mxu0 0.0
    %v3468 = vand.u32 %v311, 4294901760
    %3469 = vmatmul.mubr.f32.gmra.mrb[0].mxu0 %v3468
    %v3470 = vpop.f32.mrb[0].mxu0
    %v3471 = vadd.f32 %v3248, %v3470
    %v3472 = vpop.f32.mrb[0].mxu0
    %3473 = vmatprep.mubr.f32.mxu0 0.0
    %v3474 = vand.u32 %v314, 4294901760
    %3475 = vmatmul.mubr.f32.gmra.mrb[0].mxu0 %v3474
    %v3476 = vpop.f32.mrb[0].mxu0
    %v3477 = vadd.f32 %v3254, %v3476
    %v3478 = vpop.f32.mrb[0].mxu0
    %3479 = vmatprep.mubr.f32.mxu0 0.0
    %v3480 = vand.u32 %v317, 4294901760
    %3481 = vmatmul.mubr.f32.gmra.mrb[0].mxu0 %v3480
    %v3482 = vpop.f32.mrb[0].mxu0
    %v3483 = vadd.f32 %v3260, %v3482
    %v3484 = vpop.f32.mrb[0].mxu0
    %3485 = vmatprep.mubr.f32.mxu0 0.0
    %v3486 = vand.u32 %v320, 4294901760
    %3487 = vmatmul.mubr.f32.gmra.mrb[0].mxu0 %v3486
    %v3488 = vpop.f32.mrb[0].mxu0
    %v3489 = vadd.f32 %v3266, %v3488
    %v3490 = vpop.f32.mrb[0].mxu0
    %3491 = vmatprep.mubr.f32.mxu0 0.0
    %v3492 = vand.u32 %v323, 4294901760
    %3493 = vmatmul.mubr.f32.gmra.mrb[0].mxu0 %v3492
    %v3494 = vpop.f32.mrb[0].mxu0
    %v3495 = vadd.f32 %v3272, %v3494
    %v3496 = vpop.f32.mrb[0].mxu0
    %3497 = vmatprep.mubr.f32.mxu0 0.0
    %v3498 = vand.u32 %v326, 4294901760
    %3499 = vmatmul.mubr.f32.gmra.mrb[0].mxu0 %v3498
    %v3500 = vpop.f32.mrb[0].mxu0
    %v3501 = vadd.f32 %v3278, %v3500
    %v3502 = vpop.f32.mrb[0].mxu0
    %3503 = vmatprep.mubr.f32.mxu0 0.0
    %v3504 = vand.u32 %v329, 4294901760
    %3505 = vmatmul.mubr.f32.gmra.mrb[0].mxu0 %v3504
    %v3506 = vpop.f32.mrb[0].mxu0
    %v3507 = vadd.f32 %v3284, %v3506
    %v3508 = vpop.f32.mrb[0].mxu0
    %3509 = vmatprep.mubr.f32.mxu0 0.0
    %v3510 = vand.u32 %v332, 4294901760
    %3511 = vmatmul.mubr.f32.gmra.mrb[0].mxu0 %v3510
    %v3512 = vpop.f32.mrb[0].mxu0
    %v3513 = vadd.f32 %v3290, %v3512
    %v3514 = vpop.f32.mrb[0].mxu0
    %3515 = vmatprep.mubr.f32.mxu0 0.0
    %v3516 = vand.u32 %v335, 4294901760
    %3517 = vmatmul.mubr.f32.gmra.mrb[0].mxu0 %v3516
    %v3518 = vpop.f32.mrb[0].mxu0
    %v3519 = vadd.f32 %v3296, %v3518
    %v3520 = vpop.f32.mrb[0].mxu0
    %3521 = vmatprep.mubr.f32.mxu0 0.0
    %v3522 = vand.u32 %v338, 4294901760
    %3523 = vmatmul.mubr.f32.gmra.mrb[0].mxu0 %v3522
    %v3524 = vpop.f32.mrb[0].mxu0
    %v3525 = vadd.f32 %v3302, %v3524
    %v3526 = vpop.f32.mrb[0].mxu0
    %3527 = vdwg.mxu0
    %v3528 = vmul.f32 %v46, %v3381
    %v3529 = vmul.f32 %v47, %v3387
    %v3530 = vmul.f32 %v48, %v3393
    %v3531 = vmul.f32 %v49, %v3399
    %v3532 = vmul.f32 %v50, %v3405
    %v3533 = vmul.f32 %v51, %v3411
    %v3534 = vmul.f32 %v52, %v3417
    %v3535 = vmul.f32 %v53, %v3423
    %v3536 = vmul.f32 %v54, %v3429
    %v3537 = vmul.f32 %v55, %v3435
    %v3538 = vmul.f32 %v56, %v3441
    %v3539 = vmul.f32 %v57, %v3447
    %v3540 = vmul.f32 %v58, %v3453
    %v3541 = vmul.f32 %v59, %v3459
    %v3542 = vmul.f32 %v60, %v3465
    %v3543 = vmul.f32 %v61, %v3471
    %v3544 = vmul.f32 %v62, %v3477
    %v3545 = vmul.f32 %v63, %v3483
    %v3546 = vmul.f32 %v64, %v3489
    %v3547 = vmul.f32 %v65, %v3495
    %v3548 = vmul.f32 %v66, %v3501
    %v3549 = vmul.f32 %v67, %v3507
    %v3550 = vmul.f32 %v68, %v3513
    %v3551 = vmul.f32 %v69, %v3519
    %v3552 = vmul.f32 %v70, %v3525
    %v3553 = vadd.f32 %v3528, %v3529
    %v3554 = vadd.f32 %v3553, %v3530
    %v3555 = vadd.f32 %v3554, %v3531
    %v3556 = vadd.f32 %v3555, %v3532
    %v3557 = vadd.f32 %v3556, %v3533
    %v3558 = vadd.f32 %v3557, %v3534
    %v3559 = vadd.f32 %v3558, %v3535
    %v3560 = vadd.f32 %v3559, %v3536
    %v3561 = vadd.f32 %v3560, %v3537
    %v3562 = vadd.f32 %v3561, %v3538
    %v3563 = vadd.f32 %v3562, %v3539
    %v3564 = vadd.f32 %v3563, %v3540
    %v3565 = vadd.f32 %v3564, %v3541
    %v3566 = vadd.f32 %v3565, %v3542
    %v3567 = vadd.f32 %v3566, %v3543
    %v3568 = vadd.f32 %v3567, %v3544
    %v3569 = vadd.f32 %v3568, %v3545
    %v3570 = vadd.f32 %v3569, %v3546
    %v3571 = vadd.f32 %v3570, %v3547
    %v3572 = vadd.f32 %v3571, %v3548
    %v3573 = vadd.f32 %v3572, %v3549
    %v3574 = vadd.f32 %v3573, %v3550
    %v3575 = vadd.f32 %v3574, %v3551
    %v3576 = vadd.f32 %v3575, %v3552
    %v3577 = vrot.slane %v3576, 4
    %v3578 = vadd.f32 %v3576, %v3577
    %v3579 = vrot.slane %v3578, 2
    %v3580 = vadd.f32 %v3578, %v3579
    %v3581 = vrot.slane %v3580, 1
    %v3582 = vadd.f32 %v3580, %v3581
    %3583 = vst [vmem:[#allocation7] sm:$0x1] %v3582
    // Predicated region
    $region26: #{tpu_custom_call.1} parent=1 // pred_check
      _
    $region27: #{tpu_custom_call.1} parent=1 // pred_check_branch
      %3585 = sbr.rel (0) target = $region29
    $region28: #{tpu_custom_call.1} parent=1 // pred_region
      %s3587 = ssub.s32 16, 16
      %3588 = vsyncadd [#allocation4], %s3587
      %s3590 = sshll.u32 [#allocation7], 4
      %s3591 = int_to_ptr.vmem [resolvable:$true] %s3590
      %3593 = dma.vmem_to_hbm [thread:$0]  %s3591, 16, %s4, [#allocation4]
    $region29: #{tpu_custom_call.1} parent=1 // pred_fallthru
      _
    // Predicated region
    $region30: #{tpu_custom_call.1} parent=1 // pred_check
      _
    $region31: #{tpu_custom_call.1} parent=1 // pred_check_branch
      %3595 = sbr.rel (0) target = $region33
    $region32: #{tpu_custom_call.1} parent=1 // pred_region
      %3596 = dma.done [#allocation4], 16
    $region33: #{tpu_custom_call.1} parent=1 // pred_fallthru
      _
    %3597 = vsyncpa [#allocation3], 1
    %3598 = vsyncpa [#allocation6], 1
    %3599 = vsyncpa [#allocation4], 1

</llo_original>
